<compile_context>
chip_gen: v6e
topology: v6e:2x2x1
jax: 0.10.0
libtpu: 0.0.40
codegen_flags: <defaults>
</compile_context>

<pallas_src>
import math

import jax
import jax.numpy as jnp
from jax.experimental import pallas as pl
from jax.experimental.pallas import tpu as pltpu

# ----------------------------- config (small, ESM-2-like) -----------------------------
VOCAB = 33            # ESM-2 vocab size
VOCAB_PAD = 128       # lane-dense padded vocab for the logits store
HIDDEN = 32
NUM_LAYERS = 2
NUM_HEADS = 4
HEAD_DIM = HIDDEN // NUM_HEADS
FFN = 4 * HIDDEN
BATCH = 2
SEQ = 8
LN_EPS = 1e-5
MASK_TOKEN_ID = 32
PAD_TOKEN_ID = 1
# tanh-approx GELU keeps the transcendental on the EUP slot on every generation.
# TODO(synk): exact erf gelu if bit-matching HF is required.
GELU_APPROXIMATE = True


# ----------------------------- in-kernel helpers -----------------------------
def _layer_norm(x, g, b):
    # single-pass mean / variance (E[x], E[x^2])
    mu = jnp.mean(x, axis=-1, keepdims=True)
    var = jnp.mean(x * x, axis=-1, keepdims=True) - mu * mu
    return (x - mu) * jax.lax.rsqrt(var + LN_EPS) * g + b


def _gelu(x):
    return jax.nn.gelu(x, approximate=GELU_APPROXIMATE)


# ----------------------------- fused Pallas kernel -----------------------------
def esm2_fused_kernel(emb_ref, bias_ref, cos_ref, sin_ref,
                      ln1g_ref, ln1b_ref, wqkv_ref, bqkv_ref, wo_ref, bo_ref,
                      ln2g_ref, ln2b_ref, wi_ref, bi_ref, wo2_ref, bo2_ref,
                      fg_ref, fb_ref, wd_ref, bd_ref, lng_ref, lnb_ref,
                      wdec_ref, bdec_ref,
                      hs_ref, hfinal_ref, logits_ref):
    H, D, NH = HIDDEN, HEAD_DIM, NUM_HEADS
    cosH = cos_ref[...]            # (S, H) f32 rope tables tiled per head
    sinH = sin_ref[...]
    bias = bias_ref[...]           # (1, 1, S) additive key mask, broadcasts to (NH,S,S)

    h = emb_ref[0]                 # (S, H) f32 residual stream for this batch element

    for li in range(NUM_LAYERS):
        # ---------------- attention block (pre-LN) ----------------
        x = _layer_norm(h, ln1g_ref[li], ln1b_ref[li])

        # Fused projection: one (S,H)x(H,5H) bf16 matmul producing
        #   [q, k, v, rotate_half(q), rotate_half(k)]
        # (rotate-half + head_dim**-0.5 q-scale folded into the weights at init,
        #  so there is no in-kernel rotation matmul or lane shuffling).
        qkv = jnp.dot(x.astype(jnp.bfloat16), wqkv_ref[li],
                      preferred_element_type=jnp.float32) + bqkv_ref[li]   # (S, 5H)
        q, k, v = qkv[:, 0:H], qkv[:, H:2 * H], qkv[:, 2 * H:3 * H]
        qr, kr = qkv[:, 3 * H:4 * H], qkv[:, 4 * H:5 * H]

        # RoPE: pure VPU elementwise
        q = q * cosH + qr * sinH
        k = k * cosH + kr * sinH

        # Fold heads -> (NH, S, D) with static slices + leading-axis stack.
        # TODO(synk): at H>=128 the split points become 128-aligned free views.
        q4 = jnp.stack([q[:, hh * D:(hh + 1) * D] for hh in range(NH)]).astype(jnp.bfloat16)
        k4 = jnp.stack([k[:, hh * D:(hh + 1) * D] for hh in range(NH)]).astype(jnp.bfloat16)
        v4 = jnp.stack([v[:, hh * D:(hh + 1) * D] for hh in range(NH)]).astype(jnp.bfloat16)

        # Batched attention over all heads at once; bias broadcast hoisted.
        s = jnp.einsum('hqd,hkd->hqk', q4, k4,
                       preferred_element_type=jnp.float32) + bias          # (NH, S, S)
        m = jnp.max(s, axis=-1, keepdims=True)
        p = jnp.exp(s - m)
        l = jnp.sum(p, axis=-1, keepdims=True)
        p = p * pl.reciprocal(l, approx=True)
        ctx = jnp.einsum('hqk,hkd->hqd', p.astype(jnp.bfloat16), v4,
                         preferred_element_type=jnp.float32)               # (NH, S, D)

        # Per-head output projection summed over heads: avoids any lane-merging
        # reshape / concat of 8-wide head chunks.
        attn = jnp.einsum('hqd,hdo->hqo', ctx.astype(jnp.bfloat16), wo_ref[li],
                          preferred_element_type=jnp.float32).sum(axis=0)
        attn = attn + bo_ref[li] + h

        # ---------------- feed-forward block (pre-LN) ----------------
        y = _layer_norm(attn, ln2g_ref[li], ln2b_ref[li])
        y = jnp.dot(y.astype(jnp.bfloat16), wi_ref[li],
                    preferred_element_type=jnp.float32) + bi_ref[li]
        y = _gelu(y)
        h = jnp.dot(y.astype(jnp.bfloat16), wo2_ref[li],
                    preferred_element_type=jnp.float32) + bo2_ref[li] + attn

        if li < NUM_LAYERS - 1:        # last raw layer output is never consumed (dead store removed)
            hs_ref[li, 0] = h.astype(jnp.bfloat16)

    # ---------------- final encoder LayerNorm ----------------
    h_final = _layer_norm(h, fg_ref[...], fb_ref[...])
    hfinal_ref[0] = h_final.astype(jnp.bfloat16)

    # ---------------- LM head (dense + gelu + LN + tied decoder) ----------------
    z = jnp.dot(h_final.astype(jnp.bfloat16), wd_ref[...],
                preferred_element_type=jnp.float32) + bd_ref[...]
    z = _gelu(z)
    z = _layer_norm(z, lng_ref[...], lnb_ref[...])
    # lane-dense (128-wide) logits store; wrapper slices back to VOCAB
    logits_ref[0] = jnp.dot(z.astype(jnp.bfloat16), wdec_ref[...],
                            preferred_element_type=jnp.float32) + bdec_ref[...]


# ----------------------------- parameter init (deterministic, synthetic) -----------------------------
def rotate_half_matrix():
    half = HEAD_DIM // 2
    i_h = jnp.eye(half, dtype=jnp.float32)
    z_h = jnp.zeros((half, half), jnp.float32)
    rh = jnp.block([[z_h, i_h], [-i_h, z_h]])                    # t @ rh == concat([-t2, t1])
    return jnp.kron(jnp.eye(NUM_HEADS, dtype=jnp.float32), rh)   # (H, H) block-diagonal


def init_params(key):
    def dense(k, n_in, n_out):
        w = 0.02 * jax.random.normal(k, (n_in, n_out), jnp.float32)
        b = jnp.zeros((1, n_out), jnp.float32)
        return w, b

    keys = jax.random.split(key, NUM_LAYERS + 2)
    word_emb = 0.02 * jax.random.normal(keys[0], (VOCAB, HIDDEN), jnp.float32)
    word_emb = word_emb.at[PAD_TOKEN_ID].set(0.0)       # nn.Embedding(padding_idx=1)

    ones = jnp.ones((1, HIDDEN), jnp.float32)
    zeros = jnp.zeros((1, HIDDEN), jnp.float32)
    rot = rotate_half_matrix()
    scale = HEAD_DIM ** -0.5

    wqkv_l, bqkv_l, wo_l, bo_l = [], [], [], []
    wi_l, bi_l, wo2_l, bo2_l = [], [], [], []
    ln1g_l, ln1b_l, ln2g_l, ln2b_l = [], [], [], []
    for li in range(NUM_LAYERS):
        lk = jax.random.split(keys[1 + li], 6)
        wq, bq = dense(lk[0], HIDDEN, HIDDEN)
        wk, bk = dense(lk[1], HIDDEN, HIDDEN)
        wv, bv = dense(lk[2], HIDDEN, HIDDEN)
        wo, bo = dense(lk[3], HIDDEN, HIDDEN)
        wi, bi = dense(lk[4], HIDDEN, FFN)
        wo2, bo2 = dense(lk[5], FFN, HIDDEN)
        # fused projection [q, k, v, rotate_half(q), rotate_half(k)]:
        # rotate-half rotation and head_dim**-0.5 q-scale folded into the weights.
        wqkv_l.append(jnp.concatenate(
            [wq * scale, wk, wv, (wq @ rot) * scale, wk @ rot], axis=1))    # (H, 5H)
        bqkv_l.append(jnp.concatenate(
            [bq * scale, bk, bv, (bq @ rot) * scale, bk @ rot], axis=1))    # (1, 5H)
        wo_l.append(wo.reshape(NUM_HEADS, HEAD_DIM, HIDDEN))                # per-head out-proj
        bo_l.append(bo)
        wi_l.append(wi); bi_l.append(bi)
        wo2_l.append(wo2); bo2_l.append(bo2)
        ln1g_l.append(ones); ln1b_l.append(zeros)
        ln2g_l.append(ones); ln2b_l.append(zeros)

    k_head = jax.random.split(keys[NUM_LAYERS + 1], 2)
    wd, bd = dense(k_head[0], HIDDEN, HIDDEN)
    wdec = word_emb.T                                            # tied decoder (H, VOCAB)
    wdec_pad = jnp.zeros((HIDDEN, VOCAB_PAD), jnp.float32).at[:, :VOCAB].set(wdec)
    bdec_pad = jnp.zeros((1, VOCAB_PAD), jnp.float32)

    bf16 = lambda a: a.astype(jnp.bfloat16)
    packed = (
        jnp.stack(ln1g_l), jnp.stack(ln1b_l),
        bf16(jnp.stack(wqkv_l)), jnp.stack(bqkv_l),
        bf16(jnp.stack(wo_l)), jnp.stack(bo_l),
        jnp.stack(ln2g_l), jnp.stack(ln2b_l),
        bf16(jnp.stack(wi_l)), jnp.stack(bi_l),
        bf16(jnp.stack(wo2_l)), jnp.stack(bo2_l),
        ones, zeros,                       # final encoder LayerNorm
        bf16(wd), bd, ones, zeros,         # LM head dense + head LayerNorm
        bf16(wdec_pad), bdec_pad,          # tied decoder, lane-padded
    )
    return {'word_emb': word_emb, 'packed': packed}


# ----------------------------- glue (embedding prep, rope tables) -----------------------------
def rope_tables(seq, head_dim, hidden):
    inv_freq = 1.0 / (10000.0 ** (jnp.arange(0, head_dim, 2, dtype=jnp.float32) / head_dim))
    t = jnp.arange(seq, dtype=jnp.float32)
    freqs = jnp.outer(t, inv_freq)
    emb = jnp.concatenate([freqs, freqs], axis=-1)               # (seq, head_dim)
    reps = (1, hidden // head_dim)
    return jnp.tile(jnp.cos(emb), reps), jnp.tile(jnp.sin(emb), reps)   # (S, H)


def embed_tokens(input_ids, attention_mask, word_emb):
    emb = jnp.take(word_emb, input_ids, axis=0)                  # (B, S, H)
    is_mask = (input_ids == MASK_TOKEN_ID)
    emb = jnp.where(is_mask[..., None], 0.0, emb)                # ESM token_dropout (eval mode)
    mask_ratio_train = 0.15 * 0.8
    src_lengths = jnp.maximum(attention_mask.sum(axis=-1).astype(jnp.float32), 1.0)
    mask_ratio_observed = is_mask.sum(axis=-1).astype(jnp.float32) / src_lengths
    scale = (1.0 - mask_ratio_train) / jnp.maximum(1.0 - mask_ratio_observed, 1e-6)
    emb = emb * scale[:, None, None]
    emb = emb * attention_mask[..., None].astype(emb.dtype)
    return emb


def esm2_forward(input_ids, attention_mask, params):
    """Matches esm2_model.forward: returns logits + all hidden states."""
    B, S = input_ids.shape
    emb3 = embed_tokens(input_ids, attention_mask, params['word_emb'])        # (B, S, H) f32
    bias = ((1.0 - attention_mask.astype(jnp.float32)) * -1e9)[:, None, :]    # (B, 1, S) f32
    cos, sin = rope_tables(S, HEAD_DIM, HIDDEN)
    packed = params['packed']
    kern_inputs = [emb3, bias, cos, sin] + list(packed)

    def _full_spec(a):
        return pl.BlockSpec(a.shape, lambda b, nd=a.ndim: (0,) * nd)  # resident, never re-fetched

    in_specs = [
        pl.BlockSpec((1, S, HIDDEN), lambda b: (b, 0, 0)),            # per-batch embeddings
        pl.BlockSpec((1, 1, S), lambda b: (b, 0, 0)),                 # per-batch attention bias
        pl.BlockSpec((S, HIDDEN), lambda b: (0, 0)),                  # rope cos
        pl.BlockSpec((S, HIDDEN), lambda b: (0, 0)),                  # rope sin
    ] + [_full_spec(a) for a in packed]

    out_shape = (
        jax.ShapeDtypeStruct((NUM_LAYERS - 1, B, S, HIDDEN), jnp.bfloat16),   # raw per-layer h
        jax.ShapeDtypeStruct((B, S, HIDDEN), jnp.bfloat16),                   # final-LN hidden
        jax.ShapeDtypeStruct((B, S, VOCAB_PAD), jnp.float32),                 # padded logits
    )
    out_specs = (
        pl.BlockSpec((NUM_LAYERS - 1, 1, S, HIDDEN), lambda b: (0, b, 0, 0)),
        pl.BlockSpec((1, S, HIDDEN), lambda b: (b, 0, 0)),
        pl.BlockSpec((1, S, VOCAB_PAD), lambda b: (b, 0, 0)),
    )

    # advisory cost estimate (helps XLA overlap surrounding embed/slice ops with the kernel)
    n_tok = B * S
    mm_flops = 2 * n_tok * HIDDEN * (5 * HIDDEN + HIDDEN + 2 * FFN) * NUM_LAYERS
    attn_flops = 2 * 2 * B * NUM_HEADS * S * S * HEAD_DIM * NUM_LAYERS
    head_flops = 2 * n_tok * HIDDEN * (HIDDEN + VOCAB_PAD)
    flops = int(mm_flops + attn_flops + head_flops)
    transcendentals = int((B * NUM_HEADS * S * S + n_tok * FFN) * NUM_LAYERS + n_tok * HIDDEN)
    bytes_accessed = sum(int(a.size) * a.dtype.itemsize for a in kern_inputs)
    bytes_accessed += sum(math.prod(o.shape) * jnp.dtype(o.dtype).itemsize for o in out_shape)

    hs, h_final, logits_pad = pl.pallas_call(
        esm2_fused_kernel,
        grid=(B,),
        out_shape=out_shape,
        in_specs=in_specs,
        out_specs=out_specs,
        compiler_params=pltpu.CompilerParams(
            dimension_semantics=("parallel",),          # v7x: shard batch across both TCs
            vmem_limit_bytes=32 * 1024 * 1024),
        cost_estimate=pl.CostEstimate(flops=flops, transcendentals=transcendentals,
                                      bytes_accessed=int(bytes_accessed)),
    )(*kern_inputs)

    hidden_states = (emb3,) \
        + tuple(hs[i].astype(jnp.float32) for i in range(NUM_LAYERS - 1)) \
        + (h_final.astype(jnp.float32),)    # HF: last hidden state is post final LN
    logits = logits_pad[..., :VOCAB]
    return {'logits': logits, 'hidden_states': hidden_states}


# ----------------------------- main -----------------------------
if __name__ == "__main__":
    key = jax.random.PRNGKey(0)
    k_param, k_ids = jax.random.split(key)
    params = init_params(k_param)

    input_ids = jax.random.randint(k_ids, (BATCH, SEQ), 4, 24, dtype=jnp.int32)
    input_ids = input_ids.at[:, 0].set(0)               # <cls>
    input_ids = input_ids.at[:, -1].set(2)              # <eos>
    attention_mask = jnp.ones((BATCH, SEQ), jnp.int32)
    # pad the tail of the second sequence
    input_ids = input_ids.at[1, 6:].set(PAD_TOKEN_ID)
    attention_mask = attention_mask.at[1, 6:].set(0)

    fwd = jax.jit(esm2_forward)
    out = fwd(input_ids, attention_mask, params)
    jax.block_until_ready(out['logits'])
    jax.block_until_ready(out['hidden_states'])

    assert out['logits'].shape == (BATCH, SEQ, VOCAB)
    assert len(out['hidden_states']) == NUM_LAYERS + 1
    assert all(h.shape == (BATCH, SEQ, HIDDEN) for h in out['hidden_states'])
    assert bool(jnp.all(jnp.isfinite(out['logits'])))
    print("KERNEL_OK")
</pallas_src>

<mosaic_0001>
module attributes {stable_mosaic.version = 11 : i64} {
  func.func @esm2_fused_kernel(%arg0: i32, %arg1: memref<1x8x32xf32, #tpu.memory_space<vmem>>, %arg2: memref<1x1x8xf32, #tpu.memory_space<vmem>>, %arg3: memref<8x32xf32, #tpu.memory_space<vmem>>, %arg4: memref<8x32xf32, #tpu.memory_space<vmem>>, %arg5: memref<2x1x32xf32, #tpu.memory_space<vmem>>, %arg6: memref<2x1x32xf32, #tpu.memory_space<vmem>>, %arg7: memref<2x32x160xbf16, #tpu.memory_space<vmem>>, %arg8: memref<2x1x160xf32, #tpu.memory_space<vmem>>, %arg9: memref<2x4x8x32xbf16, #tpu.memory_space<vmem>>, %arg10: memref<2x1x32xf32, #tpu.memory_space<vmem>>, %arg11: memref<2x1x32xf32, #tpu.memory_space<vmem>>, %arg12: memref<2x1x32xf32, #tpu.memory_space<vmem>>, %arg13: memref<2x32x128xbf16, #tpu.memory_space<vmem>>, %arg14: memref<2x1x128xf32, #tpu.memory_space<vmem>>, %arg15: memref<2x128x32xbf16, #tpu.memory_space<vmem>>, %arg16: memref<2x1x32xf32, #tpu.memory_space<vmem>>, %arg17: memref<1x32xf32, #tpu.memory_space<vmem>>, %arg18: memref<1x32xf32, #tpu.memory_space<vmem>>, %arg19: memref<32x32xbf16, #tpu.memory_space<vmem>>, %arg20: memref<1x32xf32, #tpu.memory_space<vmem>>, %arg21: memref<1x32xf32, #tpu.memory_space<vmem>>, %arg22: memref<1x32xf32, #tpu.memory_space<vmem>>, %arg23: memref<32x128xbf16, #tpu.memory_space<vmem>>, %arg24: memref<1x128xf32, #tpu.memory_space<vmem>>, %arg25: memref<1x1x8x32xbf16, #tpu.memory_space<vmem>>, %arg26: memref<1x8x32xbf16, #tpu.memory_space<vmem>>, %arg27: memref<1x8x128xf32, #tpu.memory_space<vmem>>) attributes {dimension_semantics = [#tpu.dimension_semantics<parallel>], iteration_bounds = array<i64: 2>, scalar_prefetch = 0 : i64, scratch_operands = 0 : i64, tpu.core_type = #tpu.core_type<tc>, window_params = [{transform_indices = @transform_0, window_bounds = array<i64: 1, 8, 32>}, {transform_indices = @transform_1, window_bounds = array<i64: 1, 1, 8>}, {pipeline_mode = #tpu.pipeline_mode<synchronous>, transform_indices = @transform_2, window_bounds = array<i64: 8, 32>}, {pipeline_mode = #tpu.pipeline_mode<synchronous>, transform_indices = @transform_3, window_bounds = array<i64: 8, 32>}, {pipeline_mode = #tpu.pipeline_mode<synchronous>, transform_indices = @transform_4, window_bounds = array<i64: 2, 1, 32>}, {pipeline_mode = #tpu.pipeline_mode<synchronous>, transform_indices = @transform_5, window_bounds = array<i64: 2, 1, 32>}, {pipeline_mode = #tpu.pipeline_mode<synchronous>, transform_indices = @transform_6, window_bounds = array<i64: 2, 32, 160>}, {pipeline_mode = #tpu.pipeline_mode<synchronous>, transform_indices = @transform_7, window_bounds = array<i64: 2, 1, 160>}, {pipeline_mode = #tpu.pipeline_mode<synchronous>, transform_indices = @transform_8, window_bounds = array<i64: 2, 4, 8, 32>}, {pipeline_mode = #tpu.pipeline_mode<synchronous>, transform_indices = @transform_9, window_bounds = array<i64: 2, 1, 32>}, {pipeline_mode = #tpu.pipeline_mode<synchronous>, transform_indices = @transform_10, window_bounds = array<i64: 2, 1, 32>}, {pipeline_mode = #tpu.pipeline_mode<synchronous>, transform_indices = @transform_11, window_bounds = array<i64: 2, 1, 32>}, {pipeline_mode = #tpu.pipeline_mode<synchronous>, transform_indices = @transform_12, window_bounds = array<i64: 2, 32, 128>}, {pipeline_mode = #tpu.pipeline_mode<synchronous>, transform_indices = @transform_13, window_bounds = array<i64: 2, 1, 128>}, {pipeline_mode = #tpu.pipeline_mode<synchronous>, transform_indices = @transform_14, window_bounds = array<i64: 2, 128, 32>}, {pipeline_mode = #tpu.pipeline_mode<synchronous>, transform_indices = @transform_15, window_bounds = array<i64: 2, 1, 32>}, {pipeline_mode = #tpu.pipeline_mode<synchronous>, transform_indices = @transform_16, window_bounds = array<i64: 1, 32>}, {pipeline_mode = #tpu.pipeline_mode<synchronous>, transform_indices = @transform_17, window_bounds = array<i64: 1, 32>}, {pipeline_mode = #tpu.pipeline_mode<synchronous>, transform_indices = @transform_18, window_bounds = array<i64: 32, 32>}, {pipeline_mode = #tpu.pipeline_mode<synchronous>, transform_indices = @transform_19, window_bounds = array<i64: 1, 32>}, {pipeline_mode = #tpu.pipeline_mode<synchronous>, transform_indices = @transform_20, window_bounds = array<i64: 1, 32>}, {pipeline_mode = #tpu.pipeline_mode<synchronous>, transform_indices = @transform_21, window_bounds = array<i64: 1, 32>}, {pipeline_mode = #tpu.pipeline_mode<synchronous>, transform_indices = @transform_22, window_bounds = array<i64: 32, 128>}, {pipeline_mode = #tpu.pipeline_mode<synchronous>, transform_indices = @transform_23, window_bounds = array<i64: 1, 128>}, {transform_indices = @transform_24, window_bounds = array<i64: 1, 1, 8, 32>}, {transform_indices = @transform_25, window_bounds = array<i64: 1, 8, 32>}, {transform_indices = @transform_26, window_bounds = array<i64: 1, 8, 128>}]} {
    %c0 = arith.constant 0 : index
    %c0_0 = arith.constant 0 : index
    %0 = vector.load %arg3[%c0, %c0_0] : memref<8x32xf32, #tpu.memory_space<vmem>>, vector<8x32xf32>
    %c0_1 = arith.constant 0 : index
    %c0_2 = arith.constant 0 : index
    %1 = vector.load %arg4[%c0_1, %c0_2] : memref<8x32xf32, #tpu.memory_space<vmem>>, vector<8x32xf32>
    %c0_3 = arith.constant 0 : index
    %c0_4 = arith.constant 0 : index
    %c0_5 = arith.constant 0 : index
    %2 = vector.load %arg2[%c0_3, %c0_4, %c0_5] : memref<1x1x8xf32, #tpu.memory_space<vmem>>, vector<1x1x8xf32>
    %c0_6 = arith.constant 0 : index
    %c0_7 = arith.constant 0 : index
    %c0_8 = arith.constant 0 : index
    %3 = vector.load %arg1[%c0_6, %c0_7, %c0_8] : memref<1x8x32xf32, #tpu.memory_space<vmem>>, vector<1x8x32xf32>
    %4 = vector.shape_cast %3 : vector<1x8x32xf32> to vector<8x32xf32>
    %c0_9 = arith.constant 0 : index
    %c0_10 = arith.constant 0 : index
    %c0_11 = arith.constant 0 : index
    %5 = vector.load %arg5[%c0_9, %c0_10, %c0_11] : memref<2x1x32xf32, #tpu.memory_space<vmem>>, vector<1x1x32xf32>
    %6 = vector.shape_cast %5 : vector<1x1x32xf32> to vector<1x32xf32>
    %c0_12 = arith.constant 0 : index
    %c0_13 = arith.constant 0 : index
    %c0_14 = arith.constant 0 : index
    %7 = vector.load %arg6[%c0_12, %c0_13, %c0_14] : memref<2x1x32xf32, #tpu.memory_space<vmem>>, vector<1x1x32xf32>
    %8 = vector.shape_cast %7 : vector<1x1x32xf32> to vector<1x32xf32>
    %cst = arith.constant dense<0.000000e+00> : vector<8xf32>
    %9 = vector.multi_reduction <add>, %4, %cst [1] : vector<8x32xf32> to vector<8xf32>
    %10 = vector.shape_cast %9 : vector<8xf32> to vector<8x1xf32>
    %cst_15 = arith.constant 3.200000e+01 : f32
    %11 = vector.broadcast %cst_15 : f32 to vector<8x1xf32>
    %12 = arith.divf %10, %11 : vector<8x1xf32>
    %13 = arith.mulf %4, %4 : vector<8x32xf32>
    %cst_16 = arith.constant dense<0.000000e+00> : vector<8xf32>
    %14 = vector.multi_reduction <add>, %13, %cst_16 [1] : vector<8x32xf32> to vector<8xf32>
    %15 = vector.shape_cast %14 : vector<8xf32> to vector<8x1xf32>
    %cst_17 = arith.constant 3.200000e+01 : f32
    %16 = vector.broadcast %cst_17 : f32 to vector<8x1xf32>
    %17 = arith.divf %15, %16 : vector<8x1xf32>
    %18 = arith.mulf %12, %12 : vector<8x1xf32>
    %19 = arith.subf %17, %18 : vector<8x1xf32>
    %20 = vector.broadcast %12 : vector<8x1xf32> to vector<8x32xf32>
    %21 = arith.subf %4, %20 : vector<8x32xf32>
    %cst_18 = arith.constant 9.99999974E-6 : f32
    %22 = vector.broadcast %cst_18 : f32 to vector<8x1xf32>
    %23 = arith.addf %19, %22 : vector<8x1xf32>
    %24 = math.rsqrt %23 : vector<8x1xf32>
    %25 = vector.broadcast %24 : vector<8x1xf32> to vector<8x32xf32>
    %26 = arith.mulf %21, %25 : vector<8x32xf32>
    %27 = vector.broadcast %6 : vector<1x32xf32> to vector<8x32xf32>
    %28 = arith.mulf %26, %27 : vector<8x32xf32>
    %29 = vector.broadcast %8 : vector<1x32xf32> to vector<8x32xf32>
    %30 = arith.addf %28, %29 : vector<8x32xf32>
    %31 = arith.truncf %30 : vector<8x32xf32> to vector<8x32xbf16>
    %c0_19 = arith.constant 0 : index
    %c0_20 = arith.constant 0 : index
    %c0_21 = arith.constant 0 : index
    %32 = vector.load %arg7[%c0_19, %c0_20, %c0_21] : memref<2x32x160xbf16, #tpu.memory_space<vmem>>, vector<1x32x160xbf16>
    %33 = vector.shape_cast %32 : vector<1x32x160xbf16> to vector<32x160xbf16>
    %cst_22 = arith.constant dense<0.000000e+00> : vector<8x160xf32>
    %34 = tpu.matmul %31, %33, %cst_22 {dimension_numbers = #tpu.dot_dimension_numbers<[1], [0], [0], [1], [0, 0, 1, 1], [], []>} : vector<8x32xbf16>, vector<32x160xbf16>, vector<8x160xf32> -> vector<8x160xf32>
    %c0_23 = arith.constant 0 : index
    %c0_24 = arith.constant 0 : index
    %c0_25 = arith.constant 0 : index
    %35 = vector.load %arg8[%c0_23, %c0_24, %c0_25] : memref<2x1x160xf32, #tpu.memory_space<vmem>>, vector<1x1x160xf32>
    %36 = vector.shape_cast %35 : vector<1x1x160xf32> to vector<1x160xf32>
    %37 = vector.broadcast %36 : vector<1x160xf32> to vector<8x160xf32>
    %38 = arith.addf %34, %37 : vector<8x160xf32>
    %39 = vector.extract_strided_slice %38 {offsets = [0, 0], sizes = [8, 32], strides = [1, 1]} : vector<8x160xf32> to vector<8x32xf32>
    %40 = vector.extract_strided_slice %38 {offsets = [0, 32], sizes = [8, 32], strides = [1, 1]} : vector<8x160xf32> to vector<8x32xf32>
    %41 = vector.extract_strided_slice %38 {offsets = [0, 64], sizes = [8, 32], strides = [1, 1]} : vector<8x160xf32> to vector<8x32xf32>
    %42 = vector.extract_strided_slice %38 {offsets = [0, 96], sizes = [8, 32], strides = [1, 1]} : vector<8x160xf32> to vector<8x32xf32>
    %43 = vector.extract_strided_slice %38 {offsets = [0, 128], sizes = [8, 32], strides = [1, 1]} : vector<8x160xf32> to vector<8x32xf32>
    %44 = arith.mulf %39, %0 : vector<8x32xf32>
    %45 = arith.mulf %42, %1 : vector<8x32xf32>
    %46 = arith.addf %44, %45 : vector<8x32xf32>
    %47 = arith.mulf %40, %0 : vector<8x32xf32>
    %48 = arith.mulf %43, %1 : vector<8x32xf32>
    %49 = arith.addf %47, %48 : vector<8x32xf32>
    %50 = vector.extract_strided_slice %46 {offsets = [0, 0], sizes = [8, 8], strides = [1, 1]} : vector<8x32xf32> to vector<8x8xf32>
    %51 = vector.extract_strided_slice %46 {offsets = [0, 8], sizes = [8, 8], strides = [1, 1]} : vector<8x32xf32> to vector<8x8xf32>
    %52 = vector.extract_strided_slice %46 {offsets = [0, 16], sizes = [8, 8], strides = [1, 1]} : vector<8x32xf32> to vector<8x8xf32>
    %53 = vector.extract_strided_slice %46 {offsets = [0, 24], sizes = [8, 8], strides = [1, 1]} : vector<8x32xf32> to vector<8x8xf32>
    %54 = vector.shape_cast %50 : vector<8x8xf32> to vector<1x8x8xf32>
    %55 = vector.shape_cast %51 : vector<8x8xf32> to vector<1x8x8xf32>
    %56 = vector.shape_cast %52 : vector<8x8xf32> to vector<1x8x8xf32>
    %57 = vector.shape_cast %53 : vector<8x8xf32> to vector<1x8x8xf32>
    %58 = tpu.concatenate %54, %55, %56, %57 in 0 : vector<1x8x8xf32>, vector<1x8x8xf32>, vector<1x8x8xf32>, vector<1x8x8xf32> -> vector<4x8x8xf32>
    %59 = arith.truncf %58 : vector<4x8x8xf32> to vector<4x8x8xbf16>
    %60 = vector.extract_strided_slice %49 {offsets = [0, 0], sizes = [8, 8], strides = [1, 1]} : vector<8x32xf32> to vector<8x8xf32>
    %61 = vector.extract_strided_slice %49 {offsets = [0, 8], sizes = [8, 8], strides = [1, 1]} : vector<8x32xf32> to vector<8x8xf32>
    %62 = vector.extract_strided_slice %49 {offsets = [0, 16], sizes = [8, 8], strides = [1, 1]} : vector<8x32xf32> to vector<8x8xf32>
    %63 = vector.extract_strided_slice %49 {offsets = [0, 24], sizes = [8, 8], strides = [1, 1]} : vector<8x32xf32> to vector<8x8xf32>
    %64 = vector.shape_cast %60 : vector<8x8xf32> to vector<1x8x8xf32>
    %65 = vector.shape_cast %61 : vector<8x8xf32> to vector<1x8x8xf32>
    %66 = vector.shape_cast %62 : vector<8x8xf32> to vector<1x8x8xf32>
    %67 = vector.shape_cast %63 : vector<8x8xf32> to vector<1x8x8xf32>
    %68 = tpu.concatenate %64, %65, %66, %67 in 0 : vector<1x8x8xf32>, vector<1x8x8xf32>, vector<1x8x8xf32>, vector<1x8x8xf32> -> vector<4x8x8xf32>
    %69 = arith.truncf %68 : vector<4x8x8xf32> to vector<4x8x8xbf16>
    %70 = vector.extract_strided_slice %41 {offsets = [0, 0], sizes = [8, 8], strides = [1, 1]} : vector<8x32xf32> to vector<8x8xf32>
    %71 = vector.extract_strided_slice %41 {offsets = [0, 8], sizes = [8, 8], strides = [1, 1]} : vector<8x32xf32> to vector<8x8xf32>
    %72 = vector.extract_strided_slice %41 {offsets = [0, 16], sizes = [8, 8], strides = [1, 1]} : vector<8x32xf32> to vector<8x8xf32>
    %73 = vector.extract_strided_slice %41 {offsets = [0, 24], sizes = [8, 8], strides = [1, 1]} : vector<8x32xf32> to vector<8x8xf32>
    %74 = vector.shape_cast %70 : vector<8x8xf32> to vector<1x8x8xf32>
    %75 = vector.shape_cast %71 : vector<8x8xf32> to vector<1x8x8xf32>
    %76 = vector.shape_cast %72 : vector<8x8xf32> to vector<1x8x8xf32>
    %77 = vector.shape_cast %73 : vector<8x8xf32> to vector<1x8x8xf32>
    %78 = tpu.concatenate %74, %75, %76, %77 in 0 : vector<1x8x8xf32>, vector<1x8x8xf32>, vector<1x8x8xf32>, vector<1x8x8xf32> -> vector<4x8x8xf32>
    %79 = arith.truncf %78 : vector<4x8x8xf32> to vector<4x8x8xbf16>
    "tpu.trace_start"() <{level = 10 : i32, message = "hqd,hkd->hqk"}> : () -> ()
    %cst_26 = arith.constant dense<0.000000e+00> : vector<4x8x8xf32>
    %80 = tpu.matmul %59, %69, %cst_26 {dimension_numbers = #tpu.dot_dimension_numbers<[2], [2], [1], [1], [0, 0, 0, 1, 1, 1], [0], [0]>} : vector<4x8x8xbf16>, vector<4x8x8xbf16>, vector<4x8x8xf32> -> vector<4x8x8xf32>
    "tpu.trace_stop"() : () -> ()
    %81 = vector.broadcast %2 : vector<1x1x8xf32> to vector<4x8x8xf32>
    %82 = arith.addf %80, %81 : vector<4x8x8xf32>
    %cst_27 = arith.constant dense<0xFF800000> : vector<4x8xf32>
    %83 = vector.multi_reduction <maximumf>, %82, %cst_27 [2] : vector<4x8x8xf32> to vector<4x8xf32>
    %84 = vector.shape_cast %83 : vector<4x8xf32> to vector<4x8x1xf32>
    %85 = vector.broadcast %84 : vector<4x8x1xf32> to vector<4x8x8xf32>
    %86 = arith.subf %82, %85 : vector<4x8x8xf32>
    %87 = math.exp %86 : vector<4x8x8xf32>
    %cst_28 = arith.constant dense<0.000000e+00> : vector<4x8xf32>
    %88 = vector.multi_reduction <add>, %87, %cst_28 [2] : vector<4x8x8xf32> to vector<4x8xf32>
    %89 = vector.shape_cast %88 : vector<4x8xf32> to vector<4x8x1xf32>
    %90 = tpu.reciprocal %89 {approx = true} : vector<4x8x1xf32> -> vector<4x8x1xf32>
    %91 = vector.broadcast %90 : vector<4x8x1xf32> to vector<4x8x8xf32>
    %92 = arith.mulf %87, %91 : vector<4x8x8xf32>
    %93 = arith.truncf %92 : vector<4x8x8xf32> to vector<4x8x8xbf16>
    "tpu.trace_start"() <{level = 10 : i32, message = "hqk,hkd->hqd"}> : () -> ()
    %cst_29 = arith.constant dense<0.000000e+00> : vector<4x8x8xf32>
    %94 = tpu.matmul %93, %79, %cst_29 {dimension_numbers = #tpu.dot_dimension_numbers<[2], [1], [1], [2], [0, 0, 0, 1, 1, 2], [0], [0]>} : vector<4x8x8xbf16>, vector<4x8x8xbf16>, vector<4x8x8xf32> -> vector<4x8x8xf32>
    "tpu.trace_stop"() : () -> ()
    %95 = arith.truncf %94 : vector<4x8x8xf32> to vector<4x8x8xbf16>
    %c0_30 = arith.constant 0 : index
    %c0_31 = arith.constant 0 : index
    %c0_32 = arith.constant 0 : index
    %c0_33 = arith.constant 0 : index
    %96 = vector.load %arg9[%c0_30, %c0_31, %c0_32, %c0_33] : memref<2x4x8x32xbf16, #tpu.memory_space<vmem>>, vector<1x4x8x32xbf16>
    %97 = vector.shape_cast %96 : vector<1x4x8x32xbf16> to vector<4x8x32xbf16>
    "tpu.trace_start"() <{level = 10 : i32, message = "hqd,hdo->hqo"}> : () -> ()
    %cst_34 = arith.constant dense<0.000000e+00> : vector<4x8x32xf32>
    %98 = tpu.matmul %95, %97, %cst_34 {dimension_numbers = #tpu.dot_dimension_numbers<[2], [1], [1], [2], [0, 0, 0, 1, 1, 2], [0], [0]>} : vector<4x8x8xbf16>, vector<4x8x32xbf16>, vector<4x8x32xf32> -> vector<4x8x32xf32>
    "tpu.trace_stop"() : () -> ()
    %cst_35 = arith.constant dense<0.000000e+00> : vector<8x32xf32>
    %99 = vector.multi_reduction <add>, %98, %cst_35 [0] : vector<4x8x32xf32> to vector<8x32xf32>
    %c0_36 = arith.constant 0 : index
    %c0_37 = arith.constant 0 : index
    %c0_38 = arith.constant 0 : index
    %100 = vector.load %arg10[%c0_36, %c0_37, %c0_38] : memref<2x1x32xf32, #tpu.memory_space<vmem>>, vector<1x1x32xf32>
    %101 = vector.shape_cast %100 : vector<1x1x32xf32> to vector<1x32xf32>
    %102 = vector.broadcast %101 : vector<1x32xf32> to vector<8x32xf32>
    %103 = arith.addf %99, %102 : vector<8x32xf32>
    %104 = arith.addf %103, %4 : vector<8x32xf32>
    %c0_39 = arith.constant 0 : index
    %c0_40 = arith.constant 0 : index
    %c0_41 = arith.constant 0 : index
    %105 = vector.load %arg11[%c0_39, %c0_40, %c0_41] : memref<2x1x32xf32, #tpu.memory_space<vmem>>, vector<1x1x32xf32>
    %106 = vector.shape_cast %105 : vector<1x1x32xf32> to vector<1x32xf32>
    %c0_42 = arith.constant 0 : index
    %c0_43 = arith.constant 0 : index
    %c0_44 = arith.constant 0 : index
    %107 = vector.load %arg12[%c0_42, %c0_43, %c0_44] : memref<2x1x32xf32, #tpu.memory_space<vmem>>, vector<1x1x32xf32>
    %108 = vector.shape_cast %107 : vector<1x1x32xf32> to vector<1x32xf32>
    %cst_45 = arith.constant dense<0.000000e+00> : vector<8xf32>
    %109 = vector.multi_reduction <add>, %104, %cst_45 [1] : vector<8x32xf32> to vector<8xf32>
    %110 = vector.shape_cast %109 : vector<8xf32> to vector<8x1xf32>
    %cst_46 = arith.constant 3.200000e+01 : f32
    %111 = vector.broadcast %cst_46 : f32 to vector<8x1xf32>
    %112 = arith.divf %110, %111 : vector<8x1xf32>
    %113 = arith.mulf %104, %104 : vector<8x32xf32>
    %cst_47 = arith.constant dense<0.000000e+00> : vector<8xf32>
    %114 = vector.multi_reduction <add>, %113, %cst_47 [1] : vector<8x32xf32> to vector<8xf32>
    %115 = vector.shape_cast %114 : vector<8xf32> to vector<8x1xf32>
    %cst_48 = arith.constant 3.200000e+01 : f32
    %116 = vector.broadcast %cst_48 : f32 to vector<8x1xf32>
    %117 = arith.divf %115, %116 : vector<8x1xf32>
    %118 = arith.mulf %112, %112 : vector<8x1xf32>
    %119 = arith.subf %117, %118 : vector<8x1xf32>
    %120 = vector.broadcast %112 : vector<8x1xf32> to vector<8x32xf32>
    %121 = arith.subf %104, %120 : vector<8x32xf32>
    %cst_49 = arith.constant 9.99999974E-6 : f32
    %122 = vector.broadcast %cst_49 : f32 to vector<8x1xf32>
    %123 = arith.addf %119, %122 : vector<8x1xf32>
    %124 = math.rsqrt %123 : vector<8x1xf32>
    %125 = vector.broadcast %124 : vector<8x1xf32> to vector<8x32xf32>
    %126 = arith.mulf %121, %125 : vector<8x32xf32>
    %127 = vector.broadcast %106 : vector<1x32xf32> to vector<8x32xf32>
    %128 = arith.mulf %126, %127 : vector<8x32xf32>
    %129 = vector.broadcast %108 : vector<1x32xf32> to vector<8x32xf32>
    %130 = arith.addf %128, %129 : vector<8x32xf32>
    %131 = arith.truncf %130 : vector<8x32xf32> to vector<8x32xbf16>
    %c0_50 = arith.constant 0 : index
    %c0_51 = arith.constant 0 : index
    %c0_52 = arith.constant 0 : index
    %132 = vector.load %arg13[%c0_50, %c0_51, %c0_52] : memref<2x32x128xbf16, #tpu.memory_space<vmem>>, vector<1x32x128xbf16>
    %133 = vector.shape_cast %132 : vector<1x32x128xbf16> to vector<32x128xbf16>
    %cst_53 = arith.constant dense<0.000000e+00> : vector<8x128xf32>
    %134 = tpu.matmul %131, %133, %cst_53 {dimension_numbers = #tpu.dot_dimension_numbers<[1], [0], [0], [1], [0, 0, 1, 1], [], []>} : vector<8x32xbf16>, vector<32x128xbf16>, vector<8x128xf32> -> vector<8x128xf32>
    %c0_54 = arith.constant 0 : index
    %c0_55 = arith.constant 0 : index
    %c0_56 = arith.constant 0 : index
    %135 = vector.load %arg14[%c0_54, %c0_55, %c0_56] : memref<2x1x128xf32, #tpu.memory_space<vmem>>, vector<1x1x128xf32>
    %136 = vector.shape_cast %135 : vector<1x1x128xf32> to vector<1x128xf32>
    %137 = vector.broadcast %136 : vector<1x128xf32> to vector<8x128xf32>
    %138 = arith.addf %134, %137 : vector<8x128xf32>
    %139 = arith.mulf %138, %138 : vector<8x128xf32>
    %140 = arith.mulf %138, %139 : vector<8x128xf32>
    %cst_57 = arith.constant 4.471500e-02 : f32
    %141 = vector.broadcast %cst_57 : f32 to vector<8x128xf32>
    %142 = arith.mulf %141, %140 : vector<8x128xf32>
    %143 = arith.addf %138, %142 : vector<8x128xf32>
    %cst_58 = arith.constant 0.797884583 : f32
    %144 = vector.broadcast %cst_58 : f32 to vector<8x128xf32>
    %145 = arith.mulf %144, %143 : vector<8x128xf32>
    %146 = math.tanh %145 : vector<8x128xf32>
    %cst_59 = arith.constant 1.000000e+00 : f32
    %147 = vector.broadcast %cst_59 : f32 to vector<8x128xf32>
    %148 = arith.addf %147, %146 : vector<8x128xf32>
    %cst_60 = arith.constant 5.000000e-01 : f32
    %149 = vector.broadcast %cst_60 : f32 to vector<8x128xf32>
    %150 = arith.mulf %149, %148 : vector<8x128xf32>
    %151 = arith.mulf %138, %150 : vector<8x128xf32>
    %152 = arith.truncf %151 : vector<8x128xf32> to vector<8x128xbf16>
    %c0_61 = arith.constant 0 : index
    %c0_62 = arith.constant 0 : index
    %c0_63 = arith.constant 0 : index
    %153 = vector.load %arg15[%c0_61, %c0_62, %c0_63] : memref<2x128x32xbf16, #tpu.memory_space<vmem>>, vector<1x128x32xbf16>
    %154 = vector.shape_cast %153 : vector<1x128x32xbf16> to vector<128x32xbf16>
    %cst_64 = arith.constant dense<0.000000e+00> : vector<8x32xf32>
    %155 = tpu.matmul %152, %154, %cst_64 {dimension_numbers = #tpu.dot_dimension_numbers<[1], [0], [0], [1], [0, 0, 1, 1], [], []>} : vector<8x128xbf16>, vector<128x32xbf16>, vector<8x32xf32> -> vector<8x32xf32>
    %c0_65 = arith.constant 0 : index
    %c0_66 = arith.constant 0 : index
    %c0_67 = arith.constant 0 : index
    %156 = vector.load %arg16[%c0_65, %c0_66, %c0_67] : memref<2x1x32xf32, #tpu.memory_space<vmem>>, vector<1x1x32xf32>
    %157 = vector.shape_cast %156 : vector<1x1x32xf32> to vector<1x32xf32>
    %158 = vector.broadcast %157 : vector<1x32xf32> to vector<8x32xf32>
    %159 = arith.addf %155, %158 : vector<8x32xf32>
    %160 = arith.addf %159, %104 : vector<8x32xf32>
    %161 = arith.truncf %160 : vector<8x32xf32> to vector<8x32xbf16>
    %c0_68 = arith.constant 0 : index
    %c0_69 = arith.constant 0 : index
    %c0_70 = arith.constant 0 : index
    %c0_71 = arith.constant 0 : index
    %162 = vector.load %arg25[%c0_68, %c0_69, %c0_70, %c0_71] : memref<1x1x8x32xbf16, #tpu.memory_space<vmem>>, vector<1x1x8x32xbf16>
    %163 = vector.shape_cast %162 : vector<1x1x8x32xbf16> to vector<8x32xbf16>
    %164 = vector.shape_cast %161 : vector<8x32xbf16> to vector<1x1x8x32xbf16>
    tpu.vector_store %arg25[%c0_68, %c0_69, %c0_70, %c0_71], %164 {strides = array<i32>} : memref<1x1x8x32xbf16, #tpu.memory_space<vmem>>, vector<1x1x8x32xbf16>,
    %c1 = arith.constant 1 : index
    %c0_72 = arith.constant 0 : index
    %c0_73 = arith.constant 0 : index
    %165 = vector.load %arg5[%c1, %c0_72, %c0_73] : memref<2x1x32xf32, #tpu.memory_space<vmem>>, vector<1x1x32xf32>
    %166 = vector.shape_cast %165 : vector<1x1x32xf32> to vector<1x32xf32>
    %c1_74 = arith.constant 1 : index
    %c0_75 = arith.constant 0 : index
    %c0_76 = arith.constant 0 : index
    %167 = vector.load %arg6[%c1_74, %c0_75, %c0_76] : memref<2x1x32xf32, #tpu.memory_space<vmem>>, vector<1x1x32xf32>
    %168 = vector.shape_cast %167 : vector<1x1x32xf32> to vector<1x32xf32>
    %cst_77 = arith.constant dense<0.000000e+00> : vector<8xf32>
    %169 = vector.multi_reduction <add>, %160, %cst_77 [1] : vector<8x32xf32> to vector<8xf32>
    %170 = vector.shape_cast %169 : vector<8xf32> to vector<8x1xf32>
    %cst_78 = arith.constant 3.200000e+01 : f32
    %171 = vector.broadcast %cst_78 : f32 to vector<8x1xf32>
    %172 = arith.divf %170, %171 : vector<8x1xf32>
    %173 = arith.mulf %160, %160 : vector<8x32xf32>
    %cst_79 = arith.constant dense<0.000000e+00> : vector<8xf32>
    %174 = vector.multi_reduction <add>, %173, %cst_79 [1] : vector<8x32xf32> to vector<8xf32>
    %175 = vector.shape_cast %174 : vector<8xf32> to vector<8x1xf32>
    %cst_80 = arith.constant 3.200000e+01 : f32
    %176 = vector.broadcast %cst_80 : f32 to vector<8x1xf32>
    %177 = arith.divf %175, %176 : vector<8x1xf32>
    %178 = arith.mulf %172, %172 : vector<8x1xf32>
    %179 = arith.subf %177, %178 : vector<8x1xf32>
    %180 = vector.broadcast %172 : vector<8x1xf32> to vector<8x32xf32>
    %181 = arith.subf %160, %180 : vector<8x32xf32>
    %cst_81 = arith.constant 9.99999974E-6 : f32
    %182 = vector.broadcast %cst_81 : f32 to vector<8x1xf32>
    %183 = arith.addf %179, %182 : vector<8x1xf32>
    %184 = math.rsqrt %183 : vector<8x1xf32>
    %185 = vector.broadcast %184 : vector<8x1xf32> to vector<8x32xf32>
    %186 = arith.mulf %181, %185 : vector<8x32xf32>
    %187 = vector.broadcast %166 : vector<1x32xf32> to vector<8x32xf32>
    %188 = arith.mulf %186, %187 : vector<8x32xf32>
    %189 = vector.broadcast %168 : vector<1x32xf32> to vector<8x32xf32>
    %190 = arith.addf %188, %189 : vector<8x32xf32>
    %191 = arith.truncf %190 : vector<8x32xf32> to vector<8x32xbf16>
    %c1_82 = arith.constant 1 : index
    %c0_83 = arith.constant 0 : index
    %c0_84 = arith.constant 0 : index
    %192 = vector.load %arg7[%c1_82, %c0_83, %c0_84] : memref<2x32x160xbf16, #tpu.memory_space<vmem>>, vector<1x32x160xbf16>
    %193 = vector.shape_cast %192 : vector<1x32x160xbf16> to vector<32x160xbf16>
    %cst_85 = arith.constant dense<0.000000e+00> : vector<8x160xf32>
    %194 = tpu.matmul %191, %193, %cst_85 {dimension_numbers = #tpu.dot_dimension_numbers<[1], [0], [0], [1], [0, 0, 1, 1], [], []>} : vector<8x32xbf16>, vector<32x160xbf16>, vector<8x160xf32> -> vector<8x160xf32>
    %c1_86 = arith.constant 1 : index
    %c0_87 = arith.constant 0 : index
    %c0_88 = arith.constant 0 : index
    %195 = vector.load %arg8[%c1_86, %c0_87, %c0_88] : memref<2x1x160xf32, #tpu.memory_space<vmem>>, vector<1x1x160xf32>
    %196 = vector.shape_cast %195 : vector<1x1x160xf32> to vector<1x160xf32>
    %197 = vector.broadcast %196 : vector<1x160xf32> to vector<8x160xf32>
    %198 = arith.addf %194, %197 : vector<8x160xf32>
    %199 = vector.extract_strided_slice %198 {offsets = [0, 0], sizes = [8, 32], strides = [1, 1]} : vector<8x160xf32> to vector<8x32xf32>
    %200 = vector.extract_strided_slice %198 {offsets = [0, 32], sizes = [8, 32], strides = [1, 1]} : vector<8x160xf32> to vector<8x32xf32>
    %201 = vector.extract_strided_slice %198 {offsets = [0, 64], sizes = [8, 32], strides = [1, 1]} : vector<8x160xf32> to vector<8x32xf32>
    %202 = vector.extract_strided_slice %198 {offsets = [0, 96], sizes = [8, 32], strides = [1, 1]} : vector<8x160xf32> to vector<8x32xf32>
    %203 = vector.extract_strided_slice %198 {offsets = [0, 128], sizes = [8, 32], strides = [1, 1]} : vector<8x160xf32> to vector<8x32xf32>
    %204 = arith.mulf %199, %0 : vector<8x32xf32>
    %205 = arith.mulf %202, %1 : vector<8x32xf32>
    %206 = arith.addf %204, %205 : vector<8x32xf32>
    %207 = arith.mulf %200, %0 : vector<8x32xf32>
    %208 = arith.mulf %203, %1 : vector<8x32xf32>
    %209 = arith.addf %207, %208 : vector<8x32xf32>
    %210 = vector.extract_strided_slice %206 {offsets = [0, 0], sizes = [8, 8], strides = [1, 1]} : vector<8x32xf32> to vector<8x8xf32>
    %211 = vector.extract_strided_slice %206 {offsets = [0, 8], sizes = [8, 8], strides = [1, 1]} : vector<8x32xf32> to vector<8x8xf32>
    %212 = vector.extract_strided_slice %206 {offsets = [0, 16], sizes = [8, 8], strides = [1, 1]} : vector<8x32xf32> to vector<8x8xf32>
    %213 = vector.extract_strided_slice %206 {offsets = [0, 24], sizes = [8, 8], strides = [1, 1]} : vector<8x32xf32> to vector<8x8xf32>
    %214 = vector.shape_cast %210 : vector<8x8xf32> to vector<1x8x8xf32>
    %215 = vector.shape_cast %211 : vector<8x8xf32> to vector<1x8x8xf32>
    %216 = vector.shape_cast %212 : vector<8x8xf32> to vector<1x8x8xf32>
    %217 = vector.shape_cast %213 : vector<8x8xf32> to vector<1x8x8xf32>
    %218 = tpu.concatenate %214, %215, %216, %217 in 0 : vector<1x8x8xf32>, vector<1x8x8xf32>, vector<1x8x8xf32>, vector<1x8x8xf32> -> vector<4x8x8xf32>
    %219 = arith.truncf %218 : vector<4x8x8xf32> to vector<4x8x8xbf16>
    %220 = vector.extract_strided_slice %209 {offsets = [0, 0], sizes = [8, 8], strides = [1, 1]} : vector<8x32xf32> to vector<8x8xf32>
    %221 = vector.extract_strided_slice %209 {offsets = [0, 8], sizes = [8, 8], strides = [1, 1]} : vector<8x32xf32> to vector<8x8xf32>
    %222 = vector.extract_strided_slice %209 {offsets = [0, 16], sizes = [8, 8], strides = [1, 1]} : vector<8x32xf32> to vector<8x8xf32>
    %223 = vector.extract_strided_slice %209 {offsets = [0, 24], sizes = [8, 8], strides = [1, 1]} : vector<8x32xf32> to vector<8x8xf32>
    %224 = vector.shape_cast %220 : vector<8x8xf32> to vector<1x8x8xf32>
    %225 = vector.shape_cast %221 : vector<8x8xf32> to vector<1x8x8xf32>
    %226 = vector.shape_cast %222 : vector<8x8xf32> to vector<1x8x8xf32>
    %227 = vector.shape_cast %223 : vector<8x8xf32> to vector<1x8x8xf32>
    %228 = tpu.concatenate %224, %225, %226, %227 in 0 : vector<1x8x8xf32>, vector<1x8x8xf32>, vector<1x8x8xf32>, vector<1x8x8xf32> -> vector<4x8x8xf32>
    %229 = arith.truncf %228 : vector<4x8x8xf32> to vector<4x8x8xbf16>
    %230 = vector.extract_strided_slice %201 {offsets = [0, 0], sizes = [8, 8], strides = [1, 1]} : vector<8x32xf32> to vector<8x8xf32>
    %231 = vector.extract_strided_slice %201 {offsets = [0, 8], sizes = [8, 8], strides = [1, 1]} : vector<8x32xf32> to vector<8x8xf32>
    %232 = vector.extract_strided_slice %201 {offsets = [0, 16], sizes = [8, 8], strides = [1, 1]} : vector<8x32xf32> to vector<8x8xf32>
    %233 = vector.extract_strided_slice %201 {offsets = [0, 24], sizes = [8, 8], strides = [1, 1]} : vector<8x32xf32> to vector<8x8xf32>
    %234 = vector.shape_cast %230 : vector<8x8xf32> to vector<1x8x8xf32>
    %235 = vector.shape_cast %231 : vector<8x8xf32> to vector<1x8x8xf32>
    %236 = vector.shape_cast %232 : vector<8x8xf32> to vector<1x8x8xf32>
    %237 = vector.shape_cast %233 : vector<8x8xf32> to vector<1x8x8xf32>
    %238 = tpu.concatenate %234, %235, %236, %237 in 0 : vector<1x8x8xf32>, vector<1x8x8xf32>, vector<1x8x8xf32>, vector<1x8x8xf32> -> vector<4x8x8xf32>
    %239 = arith.truncf %238 : vector<4x8x8xf32> to vector<4x8x8xbf16>
    "tpu.trace_start"() <{level = 10 : i32, message = "hqd,hkd->hqk"}> : () -> ()
    %cst_89 = arith.constant dense<0.000000e+00> : vector<4x8x8xf32>
    %240 = tpu.matmul %219, %229, %cst_89 {dimension_numbers = #tpu.dot_dimension_numbers<[2], [2], [1], [1], [0, 0, 0, 1, 1, 1], [0], [0]>} : vector<4x8x8xbf16>, vector<4x8x8xbf16>, vector<4x8x8xf32> -> vector<4x8x8xf32>
    "tpu.trace_stop"() : () -> ()
    %241 = vector.broadcast %2 : vector<1x1x8xf32> to vector<4x8x8xf32>
    %242 = arith.addf %240, %241 : vector<4x8x8xf32>
    %cst_90 = arith.constant dense<0xFF800000> : vector<4x8xf32>
    %243 = vector.multi_reduction <maximumf>, %242, %cst_90 [2] : vector<4x8x8xf32> to vector<4x8xf32>
    %244 = vector.shape_cast %243 : vector<4x8xf32> to vector<4x8x1xf32>
    %245 = vector.broadcast %244 : vector<4x8x1xf32> to vector<4x8x8xf32>
    %246 = arith.subf %242, %245 : vector<4x8x8xf32>
    %247 = math.exp %246 : vector<4x8x8xf32>
    %cst_91 = arith.constant dense<0.000000e+00> : vector<4x8xf32>
    %248 = vector.multi_reduction <add>, %247, %cst_91 [2] : vector<4x8x8xf32> to vector<4x8xf32>
    %249 = vector.shape_cast %248 : vector<4x8xf32> to vector<4x8x1xf32>
    %250 = tpu.reciprocal %249 {approx = true} : vector<4x8x1xf32> -> vector<4x8x1xf32>
    %251 = vector.broadcast %250 : vector<4x8x1xf32> to vector<4x8x8xf32>
    %252 = arith.mulf %247, %251 : vector<4x8x8xf32>
    %253 = arith.truncf %252 : vector<4x8x8xf32> to vector<4x8x8xbf16>
    "tpu.trace_start"() <{level = 10 : i32, message = "hqk,hkd->hqd"}> : () -> ()
    %cst_92 = arith.constant dense<0.000000e+00> : vector<4x8x8xf32>
    %254 = tpu.matmul %253, %239, %cst_92 {dimension_numbers = #tpu.dot_dimension_numbers<[2], [1], [1], [2], [0, 0, 0, 1, 1, 2], [0], [0]>} : vector<4x8x8xbf16>, vector<4x8x8xbf16>, vector<4x8x8xf32> -> vector<4x8x8xf32>
    "tpu.trace_stop"() : () -> ()
    %255 = arith.truncf %254 : vector<4x8x8xf32> to vector<4x8x8xbf16>
    %c1_93 = arith.constant 1 : index
    %c0_94 = arith.constant 0 : index
    %c0_95 = arith.constant 0 : index
    %c0_96 = arith.constant 0 : index
    %256 = vector.load %arg9[%c1_93, %c0_94, %c0_95, %c0_96] : memref<2x4x8x32xbf16, #tpu.memory_space<vmem>>, vector<1x4x8x32xbf16>
    %257 = vector.shape_cast %256 : vector<1x4x8x32xbf16> to vector<4x8x32xbf16>
    "tpu.trace_start"() <{level = 10 : i32, message = "hqd,hdo->hqo"}> : () -> ()
    %cst_97 = arith.constant dense<0.000000e+00> : vector<4x8x32xf32>
    %258 = tpu.matmul %255, %257, %cst_97 {dimension_numbers = #tpu.dot_dimension_numbers<[2], [1], [1], [2], [0, 0, 0, 1, 1, 2], [0], [0]>} : vector<4x8x8xbf16>, vector<4x8x32xbf16>, vector<4x8x32xf32> -> vector<4x8x32xf32>
    "tpu.trace_stop"() : () -> ()
    %cst_98 = arith.constant dense<0.000000e+00> : vector<8x32xf32>
    %259 = vector.multi_reduction <add>, %258, %cst_98 [0] : vector<4x8x32xf32> to vector<8x32xf32>
    %c1_99 = arith.constant 1 : index
    %c0_100 = arith.constant 0 : index
    %c0_101 = arith.constant 0 : index
    %260 = vector.load %arg10[%c1_99, %c0_100, %c0_101] : memref<2x1x32xf32, #tpu.memory_space<vmem>>, vector<1x1x32xf32>
    %261 = vector.shape_cast %260 : vector<1x1x32xf32> to vector<1x32xf32>
    %262 = vector.broadcast %261 : vector<1x32xf32> to vector<8x32xf32>
    %263 = arith.addf %259, %262 : vector<8x32xf32>
    %264 = arith.addf %263, %160 : vector<8x32xf32>
    %c1_102 = arith.constant 1 : index
    %c0_103 = arith.constant 0 : index
    %c0_104 = arith.constant 0 : index
    %265 = vector.load %arg11[%c1_102, %c0_103, %c0_104] : memref<2x1x32xf32, #tpu.memory_space<vmem>>, vector<1x1x32xf32>
    %266 = vector.shape_cast %265 : vector<1x1x32xf32> to vector<1x32xf32>
    %c1_105 = arith.constant 1 : index
    %c0_106 = arith.constant 0 : index
    %c0_107 = arith.constant 0 : index
    %267 = vector.load %arg12[%c1_105, %c0_106, %c0_107] : memref<2x1x32xf32, #tpu.memory_space<vmem>>, vector<1x1x32xf32>
    %268 = vector.shape_cast %267 : vector<1x1x32xf32> to vector<1x32xf32>
    %cst_108 = arith.constant dense<0.000000e+00> : vector<8xf32>
    %269 = vector.multi_reduction <add>, %264, %cst_108 [1] : vector<8x32xf32> to vector<8xf32>
    %270 = vector.shape_cast %269 : vector<8xf32> to vector<8x1xf32>
    %cst_109 = arith.constant 3.200000e+01 : f32
    %271 = vector.broadcast %cst_109 : f32 to vector<8x1xf32>
    %272 = arith.divf %270, %271 : vector<8x1xf32>
    %273 = arith.mulf %264, %264 : vector<8x32xf32>
    %cst_110 = arith.constant dense<0.000000e+00> : vector<8xf32>
    %274 = vector.multi_reduction <add>, %273, %cst_110 [1] : vector<8x32xf32> to vector<8xf32>
    %275 = vector.shape_cast %274 : vector<8xf32> to vector<8x1xf32>
    %cst_111 = arith.constant 3.200000e+01 : f32
    %276 = vector.broadcast %cst_111 : f32 to vector<8x1xf32>
    %277 = arith.divf %275, %276 : vector<8x1xf32>
    %278 = arith.mulf %272, %272 : vector<8x1xf32>
    %279 = arith.subf %277, %278 : vector<8x1xf32>
    %280 = vector.broadcast %272 : vector<8x1xf32> to vector<8x32xf32>
    %281 = arith.subf %264, %280 : vector<8x32xf32>
    %cst_112 = arith.constant 9.99999974E-6 : f32
    %282 = vector.broadcast %cst_112 : f32 to vector<8x1xf32>
    %283 = arith.addf %279, %282 : vector<8x1xf32>
    %284 = math.rsqrt %283 : vector<8x1xf32>
    %285 = vector.broadcast %284 : vector<8x1xf32> to vector<8x32xf32>
    %286 = arith.mulf %281, %285 : vector<8x32xf32>
    %287 = vector.broadcast %266 : vector<1x32xf32> to vector<8x32xf32>
    %288 = arith.mulf %286, %287 : vector<8x32xf32>
    %289 = vector.broadcast %268 : vector<1x32xf32> to vector<8x32xf32>
    %290 = arith.addf %288, %289 : vector<8x32xf32>
    %291 = arith.truncf %290 : vector<8x32xf32> to vector<8x32xbf16>
    %c1_113 = arith.constant 1 : index
    %c0_114 = arith.constant 0 : index
    %c0_115 = arith.constant 0 : index
    %292 = vector.load %arg13[%c1_113, %c0_114, %c0_115] : memref<2x32x128xbf16, #tpu.memory_space<vmem>>, vector<1x32x128xbf16>
    %293 = vector.shape_cast %292 : vector<1x32x128xbf16> to vector<32x128xbf16>
    %cst_116 = arith.constant dense<0.000000e+00> : vector<8x128xf32>
    %294 = tpu.matmul %291, %293, %cst_116 {dimension_numbers = #tpu.dot_dimension_numbers<[1], [0], [0], [1], [0, 0, 1, 1], [], []>} : vector<8x32xbf16>, vector<32x128xbf16>, vector<8x128xf32> -> vector<8x128xf32>
    %c1_117 = arith.constant 1 : index
    %c0_118 = arith.constant 0 : index
    %c0_119 = arith.constant 0 : index
    %295 = vector.load %arg14[%c1_117, %c0_118, %c0_119] : memref<2x1x128xf32, #tpu.memory_space<vmem>>, vector<1x1x128xf32>
    %296 = vector.shape_cast %295 : vector<1x1x128xf32> to vector<1x128xf32>
    %297 = vector.broadcast %296 : vector<1x128xf32> to vector<8x128xf32>
    %298 = arith.addf %294, %297 : vector<8x128xf32>
    %299 = arith.mulf %298, %298 : vector<8x128xf32>
    %300 = arith.mulf %298, %299 : vector<8x128xf32>
    %cst_120 = arith.constant 4.471500e-02 : f32
    %301 = vector.broadcast %cst_120 : f32 to vector<8x128xf32>
    %302 = arith.mulf %301, %300 : vector<8x128xf32>
    %303 = arith.addf %298, %302 : vector<8x128xf32>
    %cst_121 = arith.constant 0.797884583 : f32
    %304 = vector.broadcast %cst_121 : f32 to vector<8x128xf32>
    %305 = arith.mulf %304, %303 : vector<8x128xf32>
    %306 = math.tanh %305 : vector<8x128xf32>
    %cst_122 = arith.constant 1.000000e+00 : f32
    %307 = vector.broadcast %cst_122 : f32 to vector<8x128xf32>
    %308 = arith.addf %307, %306 : vector<8x128xf32>
    %cst_123 = arith.constant 5.000000e-01 : f32
    %309 = vector.broadcast %cst_123 : f32 to vector<8x128xf32>
    %310 = arith.mulf %309, %308 : vector<8x128xf32>
    %311 = arith.mulf %298, %310 : vector<8x128xf32>
    %312 = arith.truncf %311 : vector<8x128xf32> to vector<8x128xbf16>
    %c1_124 = arith.constant 1 : index
    %c0_125 = arith.constant 0 : index
    %c0_126 = arith.constant 0 : index
    %313 = vector.load %arg15[%c1_124, %c0_125, %c0_126] : memref<2x128x32xbf16, #tpu.memory_space<vmem>>, vector<1x128x32xbf16>
    %314 = vector.shape_cast %313 : vector<1x128x32xbf16> to vector<128x32xbf16>
    %cst_127 = arith.constant dense<0.000000e+00> : vector<8x32xf32>
    %315 = tpu.matmul %312, %314, %cst_127 {dimension_numbers = #tpu.dot_dimension_numbers<[1], [0], [0], [1], [0, 0, 1, 1], [], []>} : vector<8x128xbf16>, vector<128x32xbf16>, vector<8x32xf32> -> vector<8x32xf32>
    %c1_128 = arith.constant 1 : index
    %c0_129 = arith.constant 0 : index
    %c0_130 = arith.constant 0 : index
    %316 = vector.load %arg16[%c1_128, %c0_129, %c0_130] : memref<2x1x32xf32, #tpu.memory_space<vmem>>, vector<1x1x32xf32>
    %317 = vector.shape_cast %316 : vector<1x1x32xf32> to vector<1x32xf32>
    %318 = vector.broadcast %317 : vector<1x32xf32> to vector<8x32xf32>
    %319 = arith.addf %315, %318 : vector<8x32xf32>
    %320 = arith.addf %319, %264 : vector<8x32xf32>
    %c0_131 = arith.constant 0 : index
    %c0_132 = arith.constant 0 : index
    %321 = vector.load %arg17[%c0_131, %c0_132] : memref<1x32xf32, #tpu.memory_space<vmem>>, vector<1x32xf32>
    %c0_133 = arith.constant 0 : index
    %c0_134 = arith.constant 0 : index
    %322 = vector.load %arg18[%c0_133, %c0_134] : memref<1x32xf32, #tpu.memory_space<vmem>>, vector<1x32xf32>
    %cst_135 = arith.constant dense<0.000000e+00> : vector<8xf32>
    %323 = vector.multi_reduction <add>, %320, %cst_135 [1] : vector<8x32xf32> to vector<8xf32>
    %324 = vector.shape_cast %323 : vector<8xf32> to vector<8x1xf32>
    %cst_136 = arith.constant 3.200000e+01 : f32
    %325 = vector.broadcast %cst_136 : f32 to vector<8x1xf32>
    %326 = arith.divf %324, %325 : vector<8x1xf32>
    %327 = arith.mulf %320, %320 : vector<8x32xf32>
    %cst_137 = arith.constant dense<0.000000e+00> : vector<8xf32>
    %328 = vector.multi_reduction <add>, %327, %cst_137 [1] : vector<8x32xf32> to vector<8xf32>
    %329 = vector.shape_cast %328 : vector<8xf32> to vector<8x1xf32>
    %cst_138 = arith.constant 3.200000e+01 : f32
    %330 = vector.broadcast %cst_138 : f32 to vector<8x1xf32>
    %331 = arith.divf %329, %330 : vector<8x1xf32>
    %332 = arith.mulf %326, %326 : vector<8x1xf32>
    %333 = arith.subf %331, %332 : vector<8x1xf32>
    %334 = vector.broadcast %326 : vector<8x1xf32> to vector<8x32xf32>
    %335 = arith.subf %320, %334 : vector<8x32xf32>
    %cst_139 = arith.constant 9.99999974E-6 : f32
    %336 = vector.broadcast %cst_139 : f32 to vector<8x1xf32>
    %337 = arith.addf %333, %336 : vector<8x1xf32>
    %338 = math.rsqrt %337 : vector<8x1xf32>
    %339 = vector.broadcast %338 : vector<8x1xf32> to vector<8x32xf32>
    %340 = arith.mulf %335, %339 : vector<8x32xf32>
    %341 = vector.broadcast %321 : vector<1x32xf32> to vector<8x32xf32>
    %342 = arith.mulf %340, %341 : vector<8x32xf32>
    %343 = vector.broadcast %322 : vector<1x32xf32> to vector<8x32xf32>
    %344 = arith.addf %342, %343 : vector<8x32xf32>
    %345 = arith.truncf %344 : vector<8x32xf32> to vector<8x32xbf16>
    %c0_140 = arith.constant 0 : index
    %c0_141 = arith.constant 0 : index
    %c0_142 = arith.constant 0 : index
    %346 = vector.load %arg26[%c0_140, %c0_141, %c0_142] : memref<1x8x32xbf16, #tpu.memory_space<vmem>>, vector<1x8x32xbf16>
    %347 = vector.shape_cast %346 : vector<1x8x32xbf16> to vector<8x32xbf16>
    %348 = vector.shape_cast %345 : vector<8x32xbf16> to vector<1x8x32xbf16>
    tpu.vector_store %arg26[%c0_140, %c0_141, %c0_142], %348 {strides = array<i32>} : memref<1x8x32xbf16, #tpu.memory_space<vmem>>, vector<1x8x32xbf16>,
    %349 = arith.truncf %344 : vector<8x32xf32> to vector<8x32xbf16>
    %c0_143 = arith.constant 0 : index
    %c0_144 = arith.constant 0 : index
    %350 = vector.load %arg19[%c0_143, %c0_144] : memref<32x32xbf16, #tpu.memory_space<vmem>>, vector<32x32xbf16>
    %cst_145 = arith.constant dense<0.000000e+00> : vector<8x32xf32>
    %351 = tpu.matmul %349, %350, %cst_145 {dimension_numbers = #tpu.dot_dimension_numbers<[1], [0], [0], [1], [0, 0, 1, 1], [], []>} : vector<8x32xbf16>, vector<32x32xbf16>, vector<8x32xf32> -> vector<8x32xf32>
    %c0_146 = arith.constant 0 : index
    %c0_147 = arith.constant 0 : index
    %352 = vector.load %arg20[%c0_146, %c0_147] : memref<1x32xf32, #tpu.memory_space<vmem>>, vector<1x32xf32>
    %353 = vector.broadcast %352 : vector<1x32xf32> to vector<8x32xf32>
    %354 = arith.addf %351, %353 : vector<8x32xf32>
    %355 = arith.mulf %354, %354 : vector<8x32xf32>
    %356 = arith.mulf %354, %355 : vector<8x32xf32>
    %cst_148 = arith.constant 4.471500e-02 : f32
    %357 = vector.broadcast %cst_148 : f32 to vector<8x32xf32>
    %358 = arith.mulf %357, %356 : vector<8x32xf32>
    %359 = arith.addf %354, %358 : vector<8x32xf32>
    %cst_149 = arith.constant 0.797884583 : f32
    %360 = vector.broadcast %cst_149 : f32 to vector<8x32xf32>
    %361 = arith.mulf %360, %359 : vector<8x32xf32>
    %362 = math.tanh %361 : vector<8x32xf32>
    %cst_150 = arith.constant 1.000000e+00 : f32
    %363 = vector.broadcast %cst_150 : f32 to vector<8x32xf32>
    %364 = arith.addf %363, %362 : vector<8x32xf32>
    %cst_151 = arith.constant 5.000000e-01 : f32
    %365 = vector.broadcast %cst_151 : f32 to vector<8x32xf32>
    %366 = arith.mulf %365, %364 : vector<8x32xf32>
    %367 = arith.mulf %354, %366 : vector<8x32xf32>
    %c0_152 = arith.constant 0 : index
    %c0_153 = arith.constant 0 : index
    %368 = vector.load %arg21[%c0_152, %c0_153] : memref<1x32xf32, #tpu.memory_space<vmem>>, vector<1x32xf32>
    %c0_154 = arith.constant 0 : index
    %c0_155 = arith.constant 0 : index
    %369 = vector.load %arg22[%c0_154, %c0_155] : memref<1x32xf32, #tpu.memory_space<vmem>>, vector<1x32xf32>
    %cst_156 = arith.constant dense<0.000000e+00> : vector<8xf32>
    %370 = vector.multi_reduction <add>, %367, %cst_156 [1] : vector<8x32xf32> to vector<8xf32>
    %371 = vector.shape_cast %370 : vector<8xf32> to vector<8x1xf32>
    %cst_157 = arith.constant 3.200000e+01 : f32
    %372 = vector.broadcast %cst_157 : f32 to vector<8x1xf32>
    %373 = arith.divf %371, %372 : vector<8x1xf32>
    %374 = arith.mulf %367, %367 : vector<8x32xf32>
    %cst_158 = arith.constant dense<0.000000e+00> : vector<8xf32>
    %375 = vector.multi_reduction <add>, %374, %cst_158 [1] : vector<8x32xf32> to vector<8xf32>
    %376 = vector.shape_cast %375 : vector<8xf32> to vector<8x1xf32>
    %cst_159 = arith.constant 3.200000e+01 : f32
    %377 = vector.broadcast %cst_159 : f32 to vector<8x1xf32>
    %378 = arith.divf %376, %377 : vector<8x1xf32>
    %379 = arith.mulf %373, %373 : vector<8x1xf32>
    %380 = arith.subf %378, %379 : vector<8x1xf32>
    %381 = vector.broadcast %373 : vector<8x1xf32> to vector<8x32xf32>
    %382 = arith.subf %367, %381 : vector<8x32xf32>
    %cst_160 = arith.constant 9.99999974E-6 : f32
    %383 = vector.broadcast %cst_160 : f32 to vector<8x1xf32>
    %384 = arith.addf %380, %383 : vector<8x1xf32>
    %385 = math.rsqrt %384 : vector<8x1xf32>
    %386 = vector.broadcast %385 : vector<8x1xf32> to vector<8x32xf32>
    %387 = arith.mulf %382, %386 : vector<8x32xf32>
    %388 = vector.broadcast %368 : vector<1x32xf32> to vector<8x32xf32>
    %389 = arith.mulf %387, %388 : vector<8x32xf32>
    %390 = vector.broadcast %369 : vector<1x32xf32> to vector<8x32xf32>
    %391 = arith.addf %389, %390 : vector<8x32xf32>
    %392 = arith.truncf %391 : vector<8x32xf32> to vector<8x32xbf16>
    %c0_161 = arith.constant 0 : index
    %c0_162 = arith.constant 0 : index
    %393 = vector.load %arg23[%c0_161, %c0_162] : memref<32x128xbf16, #tpu.memory_space<vmem>>, vector<32x128xbf16>
    %cst_163 = arith.constant dense<0.000000e+00> : vector<8x128xf32>
    %394 = tpu.matmul %392, %393, %cst_163 {dimension_numbers = #tpu.dot_dimension_numbers<[1], [0], [0], [1], [0, 0, 1, 1], [], []>} : vector<8x32xbf16>, vector<32x128xbf16>, vector<8x128xf32> -> vector<8x128xf32>
    %c0_164 = arith.constant 0 : index
    %c0_165 = arith.constant 0 : index
    %395 = vector.load %arg24[%c0_164, %c0_165] : memref<1x128xf32, #tpu.memory_space<vmem>>, vector<1x128xf32>
    %396 = vector.broadcast %395 : vector<1x128xf32> to vector<8x128xf32>
    %397 = arith.addf %394, %396 : vector<8x128xf32>
    %c0_166 = arith.constant 0 : index
    %c0_167 = arith.constant 0 : index
    %c0_168 = arith.constant 0 : index
    %398 = vector.load %arg27[%c0_166, %c0_167, %c0_168] : memref<1x8x128xf32, #tpu.memory_space<vmem>>, vector<1x8x128xf32>
    %399 = vector.shape_cast %398 : vector<1x8x128xf32> to vector<8x128xf32>
    %400 = vector.shape_cast %397 : vector<8x128xf32> to vector<1x8x128xf32>
    tpu.vector_store %arg27[%c0_166, %c0_167, %c0_168], %400 {strides = array<i32>} : memref<1x8x128xf32, #tpu.memory_space<vmem>>, vector<1x8x128xf32>,
    return
  }
  func.func @transform_0(%arg0: i32) -> (i32, i32, i32) {
    %c0_i32 = arith.constant 0 : i32
    %c0_i32_0 = arith.constant 0 : i32
    %c0_i32_1 = arith.constant 0 : i32
    return %arg0, %c0_i32, %c0_i32_0 : i32, i32, i32
  }
  func.func @transform_1(%arg0: i32) -> (i32, i32, i32) {
    %c0_i32 = arith.constant 0 : i32
    %c0_i32_0 = arith.constant 0 : i32
    %c0_i32_1 = arith.constant 0 : i32
    return %arg0, %c0_i32, %c0_i32_0 : i32, i32, i32
  }
  func.func @transform_2(%arg0: i32) -> (i32, i32) {
    %c0_i32 = arith.constant 0 : i32
    %c0_i32_0 = arith.constant 0 : i32
    %c0_i32_1 = arith.constant 0 : i32
    return %c0_i32, %c0_i32_0 : i32, i32
  }
  func.func @transform_3(%arg0: i32) -> (i32, i32) {
    %c0_i32 = arith.constant 0 : i32
    %c0_i32_0 = arith.constant 0 : i32
    %c0_i32_1 = arith.constant 0 : i32
    return %c0_i32, %c0_i32_0 : i32, i32
  }
  func.func @transform_4(%arg0: i32) -> (i32, i32, i32) {
    %c0_i32 = arith.constant 0 : i32
    %c0_i32_0 = arith.constant 0 : i32
    %c0_i32_1 = arith.constant 0 : i32
    %c0_i32_2 = arith.constant 0 : i32
    return %c0_i32, %c0_i32_0, %c0_i32_1 : i32, i32, i32
  }
  func.func @transform_5(%arg0: i32) -> (i32, i32, i32) {
    %c0_i32 = arith.constant 0 : i32
    %c0_i32_0 = arith.constant 0 : i32
    %c0_i32_1 = arith.constant 0 : i32
    %c0_i32_2 = arith.constant 0 : i32
    return %c0_i32, %c0_i32_0, %c0_i32_1 : i32, i32, i32
  }
  func.func @transform_6(%arg0: i32) -> (i32, i32, i32) {
    %c0_i32 = arith.constant 0 : i32
    %c0_i32_0 = arith.constant 0 : i32
    %c0_i32_1 = arith.constant 0 : i32
    %c0_i32_2 = arith.constant 0 : i32
    return %c0_i32, %c0_i32_0, %c0_i32_1 : i32, i32, i32
  }
  func.func @transform_7(%arg0: i32) -> (i32, i32, i32) {
    %c0_i32 = arith.constant 0 : i32
    %c0_i32_0 = arith.constant 0 : i32
    %c0_i32_1 = arith.constant 0 : i32
    %c0_i32_2 = arith.constant 0 : i32
    return %c0_i32, %c0_i32_0, %c0_i32_1 : i32, i32, i32
  }
  func.func @transform_8(%arg0: i32) -> (i32, i32, i32, i32) {
    %c0_i32 = arith.constant 0 : i32
    %c0_i32_0 = arith.constant 0 : i32
    %c0_i32_1 = arith.constant 0 : i32
    %c0_i32_2 = arith.constant 0 : i32
    %c0_i32_3 = arith.constant 0 : i32
    return %c0_i32, %c0_i32_0, %c0_i32_1, %c0_i32_2 : i32, i32, i32, i32
  }
  func.func @transform_9(%arg0: i32) -> (i32, i32, i32) {
    %c0_i32 = arith.constant 0 : i32
    %c0_i32_0 = arith.constant 0 : i32
    %c0_i32_1 = arith.constant 0 : i32
    %c0_i32_2 = arith.constant 0 : i32
    return %c0_i32, %c0_i32_0, %c0_i32_1 : i32, i32, i32
  }
  func.func @transform_10(%arg0: i32) -> (i32, i32, i32) {
    %c0_i32 = arith.constant 0 : i32
    %c0_i32_0 = arith.constant 0 : i32
    %c0_i32_1 = arith.constant 0 : i32
    %c0_i32_2 = arith.constant 0 : i32
    return %c0_i32, %c0_i32_0, %c0_i32_1 : i32, i32, i32
  }
  func.func @transform_11(%arg0: i32) -> (i32, i32, i32) {
    %c0_i32 = arith.constant 0 : i32
    %c0_i32_0 = arith.constant 0 : i32
    %c0_i32_1 = arith.constant 0 : i32
    %c0_i32_2 = arith.constant 0 : i32
    return %c0_i32, %c0_i32_0, %c0_i32_1 : i32, i32, i32
  }
  func.func @transform_12(%arg0: i32) -> (i32, i32, i32) {
    %c0_i32 = arith.constant 0 : i32
    %c0_i32_0 = arith.constant 0 : i32
    %c0_i32_1 = arith.constant 0 : i32
    %c0_i32_2 = arith.constant 0 : i32
    return %c0_i32, %c0_i32_0, %c0_i32_1 : i32, i32, i32
  }
  func.func @transform_13(%arg0: i32) -> (i32, i32, i32) {
    %c0_i32 = arith.constant 0 : i32
    %c0_i32_0 = arith.constant 0 : i32
    %c0_i32_1 = arith.constant 0 : i32
    %c0_i32_2 = arith.constant 0 : i32
    return %c0_i32, %c0_i32_0, %c0_i32_1 : i32, i32, i32
  }
  func.func @transform_14(%arg0: i32) -> (i32, i32, i32) {
    %c0_i32 = arith.constant 0 : i32
    %c0_i32_0 = arith.constant 0 : i32
    %c0_i32_1 = arith.constant 0 : i32
    %c0_i32_2 = arith.constant 0 : i32
    return %c0_i32, %c0_i32_0, %c0_i32_1 : i32, i32, i32
  }
  func.func @transform_15(%arg0: i32) -> (i32, i32, i32) {
    %c0_i32 = arith.constant 0 : i32
    %c0_i32_0 = arith.constant 0 : i32
    %c0_i32_1 = arith.constant 0 : i32
    %c0_i32_2 = arith.constant 0 : i32
    return %c0_i32, %c0_i32_0, %c0_i32_1 : i32, i32, i32
  }
  func.func @transform_16(%arg0: i32) -> (i32, i32) {
    %c0_i32 = arith.constant 0 : i32
    %c0_i32_0 = arith.constant 0 : i32
    %c0_i32_1 = arith.constant 0 : i32
    return %c0_i32, %c0_i32_0 : i32, i32
  }
  func.func @transform_17(%arg0: i32) -> (i32, i32) {
    %c0_i32 = arith.constant 0 : i32
    %c0_i32_0 = arith.constant 0 : i32
    %c0_i32_1 = arith.constant 0 : i32
    return %c0_i32, %c0_i32_0 : i32, i32
  }
  func.func @transform_18(%arg0: i32) -> (i32, i32) {
    %c0_i32 = arith.constant 0 : i32
    %c0_i32_0 = arith.constant 0 : i32
    %c0_i32_1 = arith.constant 0 : i32
    return %c0_i32, %c0_i32_0 : i32, i32
  }
  func.func @transform_19(%arg0: i32) -> (i32, i32) {
    %c0_i32 = arith.constant 0 : i32
    %c0_i32_0 = arith.constant 0 : i32
    %c0_i32_1 = arith.constant 0 : i32
    return %c0_i32, %c0_i32_0 : i32, i32
  }
  func.func @transform_20(%arg0: i32) -> (i32, i32) {
    %c0_i32 = arith.constant 0 : i32
    %c0_i32_0 = arith.constant 0 : i32
    %c0_i32_1 = arith.constant 0 : i32
    return %c0_i32, %c0_i32_0 : i32, i32
  }
  func.func @transform_21(%arg0: i32) -> (i32, i32) {
    %c0_i32 = arith.constant 0 : i32
    %c0_i32_0 = arith.constant 0 : i32
    %c0_i32_1 = arith.constant 0 : i32
    return %c0_i32, %c0_i32_0 : i32, i32
  }
  func.func @transform_22(%arg0: i32) -> (i32, i32) {
    %c0_i32 = arith.constant 0 : i32
    %c0_i32_0 = arith.constant 0 : i32
    %c0_i32_1 = arith.constant 0 : i32
    return %c0_i32, %c0_i32_0 : i32, i32
  }
  func.func @transform_23(%arg0: i32) -> (i32, i32) {
    %c0_i32 = arith.constant 0 : i32
    %c0_i32_0 = arith.constant 0 : i32
    %c0_i32_1 = arith.constant 0 : i32
    return %c0_i32, %c0_i32_0 : i32, i32
  }
  func.func @transform_24(%arg0: i32) -> (i32, i32, i32, i32) {
    %c0_i32 = arith.constant 0 : i32
    %c0_i32_0 = arith.constant 0 : i32
    %c0_i32_1 = arith.constant 0 : i32
    %c0_i32_2 = arith.constant 0 : i32
    return %c0_i32, %arg0, %c0_i32_0, %c0_i32_1 : i32, i32, i32, i32
  }
  func.func @transform_25(%arg0: i32) -> (i32, i32, i32) {
    %c0_i32 = arith.constant 0 : i32
    %c0_i32_0 = arith.constant 0 : i32
    %c0_i32_1 = arith.constant 0 : i32
    return %arg0, %c0_i32, %c0_i32_0 : i32, i32, i32
  }
  func.func @transform_26(%arg0: i32) -> (i32, i32, i32) {
    %c0_i32 = arith.constant 0 : i32
    %c0_i32_0 = arith.constant 0 : i32
    %c0_i32_1 = arith.constant 0 : i32
    return %arg0, %c0_i32, %c0_i32_0 : i32, i32, i32
  }
}

</mosaic_0001>

<llo_original>
// kernel: tile.19
$region0: #{tile.19}
  %s0 = inlined_call_operand.vmem [shape: f32[8,4,8], index: 0, kind: input, shape index: {}]
  %s1 = inlined_call_operand.vmem [shape: f32[8,32], index: 1, kind: output, shape index: {}]
  $region1: #{tile.19} parent=0
    #allocation0 [shape = 'u8[32768]{0}', space=vmem, size = 0x8000, scoped, tag = 'scoped mem for input reshape']
    %s3 = sshll.u32 1, 4
    %s4 = ssub.s32 %s3, 1
    %s5 = smul.addr 4, 7
    %s6 = scalar_lea.vmem %s0, %s5
    %v7 = vld [vmem:[%s6] sm:%s4]
    %s8 = scalar_lea.vmem [#allocation0], 56
    %9 = vst [vmem:[%s8] sm:%s4] %v7
    %s10 = smul.addr 4, 6
    %s11 = scalar_lea.vmem %s0, %s10
    %v12 = vld [vmem:[%s11] sm:%s4]
    %s13 = scalar_lea.vmem [#allocation0], 48
    %14 = vst [vmem:[%s13] sm:%s4] %v12
    %s15 = smul.addr 4, 5
    %s16 = scalar_lea.vmem %s0, %s15
    %v17 = vld [vmem:[%s16] sm:%s4]
    %s18 = scalar_lea.vmem [#allocation0], 40
    %19 = vst [vmem:[%s18] sm:%s4] %v17
    %s20 = smul.addr 4, 4
    %s21 = scalar_lea.vmem %s0, %s20
    %v22 = vld [vmem:[%s21] sm:%s4]
    %s23 = scalar_lea.vmem [#allocation0], 32
    %24 = vst [vmem:[%s23] sm:%s4] %v22
    %s25 = smul.addr 4, 3
    %s26 = scalar_lea.vmem %s0, %s25
    %v27 = vld [vmem:[%s26] sm:%s4]
    %s28 = scalar_lea.vmem [#allocation0], 24
    %29 = vst [vmem:[%s28] sm:%s4] %v27
    %s30 = smul.addr 4, 2
    %s31 = scalar_lea.vmem %s0, %s30
    %v32 = vld [vmem:[%s31] sm:%s4]
    %s33 = scalar_lea.vmem [#allocation0], 16
    %34 = vst [vmem:[%s33] sm:%s4] %v32
    %s35 = scalar_lea.vmem %s0, 4
    %v36 = vld [vmem:[%s35] sm:%s4]
    %s37 = scalar_lea.vmem [#allocation0], 8
    %38 = vst [vmem:[%s37] sm:%s4] %v36
    %v39 = vld [vmem:[%s0] sm:%s4]
    %40 = vst [vmem:[#allocation0] sm:%s4] %v39
    %v41 = vld [vmem:[#allocation0] ss:$8 sm:$0xf]
    %v42 = vld [vmem:[#allocation0] ss:$8 sm:$0xf0]
    %vm43 = vcmask 1047556
    %v44 = vsel %vm43, %v42, %v41
    %vm45 = vcmask 64512
    %46 = vst.msk [vmem:[%s1] sm:$0xff] %vm45, %v44
    %s47 = scalar_lea.vmem [#allocation0], 3
    %v48 = vld [vmem:[%s47] ss:$8 sm:$0xf]
    %s49 = scalar_lea.vmem [#allocation0], 3
    %v50 = vld [vmem:[%s49] ss:$8 sm:$0xf0]
    %vm51 = vcmask 1047556
    %v52 = vsel %vm51, %v50, %v48
    %53 = vrot.lane.b32.xlu0 %v52, 24
    %v54 = vpop.permute.xlu0 %53
    %vm55 = vcmask 261312
    %56 = vst.msk [vmem:[%s1] sm:$0xff] %vm55, %v54
    %s57 = scalar_lea.vmem [#allocation0], 2
    %v58 = vld [vmem:[%s57] ss:$8 sm:$0xf]
    %s59 = scalar_lea.vmem [#allocation0], 2
    %v60 = vld [vmem:[%s59] ss:$8 sm:$0xf0]
    %vm61 = vcmask 1047556
    %v62 = vsel %vm61, %v60, %v58
    %63 = vrot.lane.b32.xlu0 %v62, 16
    %v64 = vpop.permute.xlu0 %63
    %vm65 = vcmask 195712
    %66 = vst.msk [vmem:[%s1] sm:$0xff] %vm65, %v64
    %s67 = scalar_lea.vmem [#allocation0], 1
    %v68 = vld [vmem:[%s67] ss:$8 sm:$0xf]
    %s69 = scalar_lea.vmem [#allocation0], 1
    %v70 = vld [vmem:[%s69] ss:$8 sm:$0xf0]
    %vm71 = vcmask 1047556
    %v72 = vsel %vm71, %v70, %v68
    %73 = vrot.lane.b32.xlu0 %v72, 8
    %v74 = vpop.permute.xlu0 %73
    %vm75 = vcmask 130112
    %76 = vst.msk [vmem:[%s1] sm:$0xff] %vm75, %v74

// kernel: esm2_forward.1
$region0: #{esm2_forward.1}
  #allocation0 [shape = 'u32[]', space=smem, size = 0x4, offset = 0x4, fixed_abs, tag = 'smem constant byte address 0x4 - core index']
  #allocation1 [shape = 'u32[144,128]{1,0:T(1,128)}', space=vmem, size = 0x12000, scoped, tag = 'internal scratch']
  %s0 = inlined_call_operand.vmem [shape: f32[2,8,32], index: 0, kind: input, shape index: {}]
  %s1 = inlined_call_operand.vmem [shape: f32[2,1,8], index: 1, kind: input, shape index: {}]
  %s2 = inlined_call_operand.vmem [shape: f32[8,32], index: 2, kind: input, shape index: {}]
  %s3 = inlined_call_operand.vmem [shape: f32[8,32], index: 3, kind: input, shape index: {}]
  %s4 = inlined_call_operand.vmem [shape: f32[2,1,32], index: 4, kind: input, shape index: {}]
  %s5 = inlined_call_operand.vmem [shape: f32[2,1,32], index: 5, kind: input, shape index: {}]
  %s6 = inlined_call_operand.vmem [shape: bf16[2,32,160], index: 6, kind: input, shape index: {}]
  %s7 = inlined_call_operand.vmem [shape: f32[2,1,160], index: 7, kind: input, shape index: {}]
  %s8 = inlined_call_operand.vmem [shape: bf16[2,4,8,32], index: 8, kind: input, shape index: {}]
  %s9 = inlined_call_operand.vmem [shape: f32[2,1,32], index: 9, kind: input, shape index: {}]
  %s10 = inlined_call_operand.vmem [shape: f32[2,1,32], index: 10, kind: input, shape index: {}]
  %s11 = inlined_call_operand.vmem [shape: f32[2,1,32], index: 11, kind: input, shape index: {}]
  %s12 = inlined_call_operand.vmem [shape: bf16[2,32,128], index: 12, kind: input, shape index: {}]
  %s13 = inlined_call_operand.vmem [shape: f32[2,1,128], index: 13, kind: input, shape index: {}]
  %s14 = inlined_call_operand.vmem [shape: bf16[2,128,32], index: 14, kind: input, shape index: {}]
  %s15 = inlined_call_operand.vmem [shape: f32[2,1,32], index: 15, kind: input, shape index: {}]
  %s16 = inlined_call_operand.vmem [shape: f32[1,32], index: 16, kind: input, shape index: {}]
  %s17 = inlined_call_operand.vmem [shape: f32[1,32], index: 17, kind: input, shape index: {}]
  %s18 = inlined_call_operand.vmem [shape: bf16[32,32], index: 18, kind: input, shape index: {}]
  %s19 = inlined_call_operand.vmem [shape: f32[1,32], index: 19, kind: input, shape index: {}]
  %s20 = inlined_call_operand.vmem [shape: f32[1,32], index: 20, kind: input, shape index: {}]
  %s21 = inlined_call_operand.vmem [shape: f32[1,32], index: 21, kind: input, shape index: {}]
  %s22 = inlined_call_operand.vmem [shape: bf16[32,128], index: 22, kind: input, shape index: {}]
  %s23 = inlined_call_operand.vmem [shape: f32[1,128], index: 23, kind: input, shape index: {}]
  %s24 = inlined_call_operand.vmem [shape: bf16[1,2,8,32], index: 24, kind: output, shape index: {0}]
  %s25 = inlined_call_operand.vmem [shape: bf16[2,8,32], index: 25, kind: output, shape index: {1}]
  %s26 = inlined_call_operand.hbm [shape: f32[2,8,128], index: 26, kind: output, shape index: {2}]
  %27 = xla_tuple %s24, %s25, %s26
  %s28 = sld [smem:[#allocation0]]
  $region145: #{esm2_forward.1} parent=0
    _
  %s30 = ssub.s32 1, %s28
  %s31 = scalar_select 0, %s30, %s28
  $region1: #{esm2_forward.1} parent=0
    #allocation2 [shape = 'u8[8192]{0}', space=vmem, size = 0x2000, scoped, tag = 'output window, operand 2']
    #allocation3 [shape = 's32[2]{0}', space=sflag, size = 0x8, scoped, tag = 'scoped memory for esm2_forward.1']
    %32 = vsyncpa [#allocation3], 0
    %s33 = scalar_lea.sflag [#allocation3], 1
    %34 = vsyncpa %s33, 0
    loop: start=0, step=1, limit=4
    $region2: #{esm2_forward.1} parent=1 // loop_pre_header
      _
    $region3: #{esm2_forward.1} parent=1 // loop_header
      %s36 = sphi 0, %s40
      %p37 = scmp.ge.s32.totalorder %s36, 4
      %s46 = sphi 0, %s48
      %s49 = sphi 0, %s46
      %s50 = sphi 0, %s49
      %s66 = sphi 0, %s50
      %s72 = sphi 0, %s74
      %s75 = sphi 0, %s72
      %s76 = sphi 0, %s75
      %s92 = sphi 0, %s76
      %s96 = sphi 0, %s96
      %s98 = sphi 0, %s96
      %s99 = sphi 0, %s98
      %s113 = sphi 0, %s99
      %s117 = sphi 0, %s117
      %s119 = sphi 0, %s117
      %s120 = sphi 0, %s119
      %s134 = sphi 0, %s120
      %s138 = sphi 0, %s138
      %s140 = sphi 0, %s138
      %s141 = sphi 0, %s140
      %s155 = sphi 0, %s141
      %s159 = sphi 0, %s159
      %s161 = sphi 0, %s159
      %s162 = sphi 0, %s161
      %s176 = sphi 0, %s162
      %s180 = sphi 0, %s180
      %s182 = sphi 0, %s180
      %s183 = sphi 0, %s182
      %s197 = sphi 0, %s183
      %s201 = sphi 0, %s201
      %s203 = sphi 0, %s201
      %s204 = sphi 0, %s203
      %s218 = sphi 0, %s204
      %s222 = sphi 0, %s222
      %s224 = sphi 0, %s222
      %s225 = sphi 0, %s224
      %s239 = sphi 0, %s225
      %s243 = sphi 0, %s243
      %s245 = sphi 0, %s243
      %s246 = sphi 0, %s245
      %s260 = sphi 0, %s246
      %s264 = sphi 0, %s264
      %s266 = sphi 0, %s264
      %s267 = sphi 0, %s266
      %s281 = sphi 0, %s267
      %s285 = sphi 0, %s285
      %s287 = sphi 0, %s285
      %s288 = sphi 0, %s287
      %s302 = sphi 0, %s288
      %s306 = sphi 0, %s306
      %s308 = sphi 0, %s306
      %s309 = sphi 0, %s308
      %s323 = sphi 0, %s309
      %s327 = sphi 0, %s327
      %s329 = sphi 0, %s327
      %s330 = sphi 0, %s329
      %s344 = sphi 0, %s330
      %s348 = sphi 0, %s348
      %s350 = sphi 0, %s348
      %s351 = sphi 0, %s350
      %s365 = sphi 0, %s351
      %s369 = sphi 0, %s369
      %s371 = sphi 0, %s369
      %s372 = sphi 0, %s371
      %s386 = sphi 0, %s372
      %s390 = sphi 0, %s390
      %s392 = sphi 0, %s390
      %s393 = sphi 0, %s392
      %s407 = sphi 0, %s393
      %s411 = sphi 0, %s411
      %s413 = sphi 0, %s411
      %s414 = sphi 0, %s413
      %s428 = sphi 0, %s414
      %s432 = sphi 0, %s432
      %s434 = sphi 0, %s432
      %s435 = sphi 0, %s434
      %s449 = sphi 0, %s435
      %s453 = sphi 0, %s453
      %s455 = sphi 0, %s453
      %s456 = sphi 0, %s455
      %s470 = sphi 0, %s456
      %s474 = sphi 0, %s474
      %s476 = sphi 0, %s474
      %s477 = sphi 0, %s476
      %s491 = sphi 0, %s477
      %s495 = sphi 0, %s495
      %s497 = sphi 0, %s495
      %s498 = sphi 0, %s497
      %s512 = sphi 0, %s498
      %s516 = sphi 0, %s516
      %s518 = sphi 0, %s516
      %s519 = sphi 0, %s518
      %s533 = sphi 0, %s519
      %s537 = sphi 0, %s537
      %s539 = sphi 0, %s537
      %s540 = sphi 0, %s539
      %s554 = sphi 0, %s540
      %s560 = sphi 0, %s562
      %s563 = sphi 0, %s560
      %s564 = sphi 0, %s563
      %s580 = sphi 0, %s564
      %s586 = sphi 0, %s588
      %s589 = sphi 0, %s586
      %s590 = sphi 0, %s589
      %s606 = sphi 0, %s590
      %s612 = sphi 0, %s614
      %s615 = sphi 0, %s612
      %s616 = sphi 0, %s615
      %s632 = sphi 0, %s616
    $region4: #{esm2_forward.1} parent=1 // loop_header_branch
      %39 = sbr.rel (%p37) target = $region8
    $region5: #{esm2_forward.1} parent=1 // loop_body
      %s41 = ssub.s32 %s36, 1
      %s42 = ssub.s32 %s36, 2
      %s43 = sadd.s32 %s36, 1
      %s44 = ssub.s32 %s36, %s43
      %p45 = scmp.eq.s32.totalorder %s44, 0
      %s47 = sadd.s32 %s46, 1
      %s48 = scalar_select %p45, %s46, %s47
      %p51 = pneg %p45
      %p52 = scmp.eq.s32.totalorder %s36, 1
      %p53 = por %p51, %p52
      %p54 = scmp.ne.s32.totalorder %s46, %s49
      %p55 = scmp.eq.s32.totalorder %s36, 0
      %p56 = por %p54, %p55
      %p57 = scmp.ne.s32.totalorder %s46, %s49
      %p58 = scmp.eq.s32.totalorder %s41, 1
      %p59 = por %p57, %p58
      %p60 = scmp.ne.s32.totalorder %s49, %s50
      %p61 = scmp.eq.s32.totalorder %s41, 0
      %p62 = por %p60, %p61
      %p63 = scmp.ne.s32.totalorder %s49, %s50
      %p64 = scmp.eq.s32.totalorder %s42, 1
      %p65 = por %p63, %p64
      %p67 = scmp.ne.s32.totalorder %s50, %s66
      %p68 = scmp.eq.s32.totalorder %s42, 0
      %p69 = por %p67, %p68
      %s70 = ssub.s32 %s36, %s43
      %p71 = scmp.eq.s32.totalorder %s70, 0
      %s73 = sadd.s32 %s72, 1
      %s74 = scalar_select %p71, %s72, %s73
      %p77 = pneg %p71
      %p78 = scmp.eq.s32.totalorder %s36, 1
      %p79 = por %p77, %p78
      %p80 = scmp.ne.s32.totalorder %s72, %s75
      %p81 = scmp.eq.s32.totalorder %s36, 0
      %p82 = por %p80, %p81
      %p83 = scmp.ne.s32.totalorder %s72, %s75
      %p84 = scmp.eq.s32.totalorder %s41, 1
      %p85 = por %p83, %p84
      %p86 = scmp.ne.s32.totalorder %s75, %s76
      %p87 = scmp.eq.s32.totalorder %s41, 0
      %p88 = por %p86, %p87
      %p89 = scmp.ne.s32.totalorder %s75, %s76
      %p90 = scmp.eq.s32.totalorder %s42, 1
      %p91 = por %p89, %p90
      %p93 = scmp.ne.s32.totalorder %s76, %s92
      %p94 = scmp.eq.s32.totalorder %s42, 0
      %p95 = por %p93, %p94
      %s97 = sadd.s32 %s96, 1
      %p100 = scmp.eq.s32.totalorder %s36, 1
      %p101 = scmp.ne.s32.totalorder %s96, %s98
      %p102 = scmp.eq.s32.totalorder %s36, 0
      %p103 = por %p101, %p102
      %p104 = scmp.ne.s32.totalorder %s96, %s98
      %p105 = scmp.eq.s32.totalorder %s41, 1
      %p106 = por %p104, %p105
      %p107 = scmp.ne.s32.totalorder %s98, %s99
      %p108 = scmp.eq.s32.totalorder %s41, 0
      %p109 = por %p107, %p108
      %p110 = scmp.ne.s32.totalorder %s98, %s99
      %p111 = scmp.eq.s32.totalorder %s42, 1
      %p112 = por %p110, %p111
      %p114 = scmp.ne.s32.totalorder %s99, %s113
      %p115 = scmp.eq.s32.totalorder %s42, 0
      %p116 = por %p114, %p115
      %s118 = sadd.s32 %s117, 1
      %p121 = scmp.eq.s32.totalorder %s36, 1
      %p122 = scmp.ne.s32.totalorder %s117, %s119
      %p123 = scmp.eq.s32.totalorder %s36, 0
      %p124 = por %p122, %p123
      %p125 = scmp.ne.s32.totalorder %s117, %s119
      %p126 = scmp.eq.s32.totalorder %s41, 1
      %p127 = por %p125, %p126
      %p128 = scmp.ne.s32.totalorder %s119, %s120
      %p129 = scmp.eq.s32.totalorder %s41, 0
      %p130 = por %p128, %p129
      %p131 = scmp.ne.s32.totalorder %s119, %s120
      %p132 = scmp.eq.s32.totalorder %s42, 1
      %p133 = por %p131, %p132
      %p135 = scmp.ne.s32.totalorder %s120, %s134
      %p136 = scmp.eq.s32.totalorder %s42, 0
      %p137 = por %p135, %p136
      %s139 = sadd.s32 %s138, 1
      %p142 = scmp.eq.s32.totalorder %s36, 1
      %p143 = scmp.ne.s32.totalorder %s138, %s140
      %p144 = scmp.eq.s32.totalorder %s36, 0
      %p145 = por %p143, %p144
      %p146 = scmp.ne.s32.totalorder %s138, %s140
      %p147 = scmp.eq.s32.totalorder %s41, 1
      %p148 = por %p146, %p147
      %p149 = scmp.ne.s32.totalorder %s140, %s141
      %p150 = scmp.eq.s32.totalorder %s41, 0
      %p151 = por %p149, %p150
      %p152 = scmp.ne.s32.totalorder %s140, %s141
      %p153 = scmp.eq.s32.totalorder %s42, 1
      %p154 = por %p152, %p153
      %p156 = scmp.ne.s32.totalorder %s141, %s155
      %p157 = scmp.eq.s32.totalorder %s42, 0
      %p158 = por %p156, %p157
      %s160 = sadd.s32 %s159, 1
      %p163 = scmp.eq.s32.totalorder %s36, 1
      %p164 = scmp.ne.s32.totalorder %s159, %s161
      %p165 = scmp.eq.s32.totalorder %s36, 0
      %p166 = por %p164, %p165
      %p167 = scmp.ne.s32.totalorder %s159, %s161
      %p168 = scmp.eq.s32.totalorder %s41, 1
      %p169 = por %p167, %p168
      %p170 = scmp.ne.s32.totalorder %s161, %s162
      %p171 = scmp.eq.s32.totalorder %s41, 0
      %p172 = por %p170, %p171
      %p173 = scmp.ne.s32.totalorder %s161, %s162
      %p174 = scmp.eq.s32.totalorder %s42, 1
      %p175 = por %p173, %p174
      %p177 = scmp.ne.s32.totalorder %s162, %s176
      %p178 = scmp.eq.s32.totalorder %s42, 0
      %p179 = por %p177, %p178
      %s181 = sadd.s32 %s180, 1
      %p184 = scmp.eq.s32.totalorder %s36, 1
      %p185 = scmp.ne.s32.totalorder %s180, %s182
      %p186 = scmp.eq.s32.totalorder %s36, 0
      %p187 = por %p185, %p186
      %p188 = scmp.ne.s32.totalorder %s180, %s182
      %p189 = scmp.eq.s32.totalorder %s41, 1
      %p190 = por %p188, %p189
      %p191 = scmp.ne.s32.totalorder %s182, %s183
      %p192 = scmp.eq.s32.totalorder %s41, 0
      %p193 = por %p191, %p192
      %p194 = scmp.ne.s32.totalorder %s182, %s183
      %p195 = scmp.eq.s32.totalorder %s42, 1
      %p196 = por %p194, %p195
      %p198 = scmp.ne.s32.totalorder %s183, %s197
      %p199 = scmp.eq.s32.totalorder %s42, 0
      %p200 = por %p198, %p199
      %s202 = sadd.s32 %s201, 1
      %p205 = scmp.eq.s32.totalorder %s36, 1
      %p206 = scmp.ne.s32.totalorder %s201, %s203
      %p207 = scmp.eq.s32.totalorder %s36, 0
      %p208 = por %p206, %p207
      %p209 = scmp.ne.s32.totalorder %s201, %s203
      %p210 = scmp.eq.s32.totalorder %s41, 1
      %p211 = por %p209, %p210
      %p212 = scmp.ne.s32.totalorder %s203, %s204
      %p213 = scmp.eq.s32.totalorder %s41, 0
      %p214 = por %p212, %p213
      %p215 = scmp.ne.s32.totalorder %s203, %s204
      %p216 = scmp.eq.s32.totalorder %s42, 1
      %p217 = por %p215, %p216
      %p219 = scmp.ne.s32.totalorder %s204, %s218
      %p220 = scmp.eq.s32.totalorder %s42, 0
      %p221 = por %p219, %p220
      %s223 = sadd.s32 %s222, 1
      %p226 = scmp.eq.s32.totalorder %s36, 1
      %p227 = scmp.ne.s32.totalorder %s222, %s224
      %p228 = scmp.eq.s32.totalorder %s36, 0
      %p229 = por %p227, %p228
      %p230 = scmp.ne.s32.totalorder %s222, %s224
      %p231 = scmp.eq.s32.totalorder %s41, 1
      %p232 = por %p230, %p231
      %p233 = scmp.ne.s32.totalorder %s224, %s225
      %p234 = scmp.eq.s32.totalorder %s41, 0
      %p235 = por %p233, %p234
      %p236 = scmp.ne.s32.totalorder %s224, %s225
      %p237 = scmp.eq.s32.totalorder %s42, 1
      %p238 = por %p236, %p237
      %p240 = scmp.ne.s32.totalorder %s225, %s239
      %p241 = scmp.eq.s32.totalorder %s42, 0
      %p242 = por %p240, %p241
      %s244 = sadd.s32 %s243, 1
      %p247 = scmp.eq.s32.totalorder %s36, 1
      %p248 = scmp.ne.s32.totalorder %s243, %s245
      %p249 = scmp.eq.s32.totalorder %s36, 0
      %p250 = por %p248, %p249
      %p251 = scmp.ne.s32.totalorder %s243, %s245
      %p252 = scmp.eq.s32.totalorder %s41, 1
      %p253 = por %p251, %p252
      %p254 = scmp.ne.s32.totalorder %s245, %s246
      %p255 = scmp.eq.s32.totalorder %s41, 0
      %p256 = por %p254, %p255
      %p257 = scmp.ne.s32.totalorder %s245, %s246
      %p258 = scmp.eq.s32.totalorder %s42, 1
      %p259 = por %p257, %p258
      %p261 = scmp.ne.s32.totalorder %s246, %s260
      %p262 = scmp.eq.s32.totalorder %s42, 0
      %p263 = por %p261, %p262
      %s265 = sadd.s32 %s264, 1
      %p268 = scmp.eq.s32.totalorder %s36, 1
      %p269 = scmp.ne.s32.totalorder %s264, %s266
      %p270 = scmp.eq.s32.totalorder %s36, 0
      %p271 = por %p269, %p270
      %p272 = scmp.ne.s32.totalorder %s264, %s266
      %p273 = scmp.eq.s32.totalorder %s41, 1
      %p274 = por %p272, %p273
      %p275 = scmp.ne.s32.totalorder %s266, %s267
      %p276 = scmp.eq.s32.totalorder %s41, 0
      %p277 = por %p275, %p276
      %p278 = scmp.ne.s32.totalorder %s266, %s267
      %p279 = scmp.eq.s32.totalorder %s42, 1
      %p280 = por %p278, %p279
      %p282 = scmp.ne.s32.totalorder %s267, %s281
      %p283 = scmp.eq.s32.totalorder %s42, 0
      %p284 = por %p282, %p283
      %s286 = sadd.s32 %s285, 1
      %p289 = scmp.eq.s32.totalorder %s36, 1
      %p290 = scmp.ne.s32.totalorder %s285, %s287
      %p291 = scmp.eq.s32.totalorder %s36, 0
      %p292 = por %p290, %p291
      %p293 = scmp.ne.s32.totalorder %s285, %s287
      %p294 = scmp.eq.s32.totalorder %s41, 1
      %p295 = por %p293, %p294
      %p296 = scmp.ne.s32.totalorder %s287, %s288
      %p297 = scmp.eq.s32.totalorder %s41, 0
      %p298 = por %p296, %p297
      %p299 = scmp.ne.s32.totalorder %s287, %s288
      %p300 = scmp.eq.s32.totalorder %s42, 1
      %p301 = por %p299, %p300
      %p303 = scmp.ne.s32.totalorder %s288, %s302
      %p304 = scmp.eq.s32.totalorder %s42, 0
      %p305 = por %p303, %p304
      %s307 = sadd.s32 %s306, 1
      %p310 = scmp.eq.s32.totalorder %s36, 1
      %p311 = scmp.ne.s32.totalorder %s306, %s308
      %p312 = scmp.eq.s32.totalorder %s36, 0
      %p313 = por %p311, %p312
      %p314 = scmp.ne.s32.totalorder %s306, %s308
      %p315 = scmp.eq.s32.totalorder %s41, 1
      %p316 = por %p314, %p315
      %p317 = scmp.ne.s32.totalorder %s308, %s309
      %p318 = scmp.eq.s32.totalorder %s41, 0
      %p319 = por %p317, %p318
      %p320 = scmp.ne.s32.totalorder %s308, %s309
      %p321 = scmp.eq.s32.totalorder %s42, 1
      %p322 = por %p320, %p321
      %p324 = scmp.ne.s32.totalorder %s309, %s323
      %p325 = scmp.eq.s32.totalorder %s42, 0
      %p326 = por %p324, %p325
      %s328 = sadd.s32 %s327, 1
      %p331 = scmp.eq.s32.totalorder %s36, 1
      %p332 = scmp.ne.s32.totalorder %s327, %s329
      %p333 = scmp.eq.s32.totalorder %s36, 0
      %p334 = por %p332, %p333
      %p335 = scmp.ne.s32.totalorder %s327, %s329
      %p336 = scmp.eq.s32.totalorder %s41, 1
      %p337 = por %p335, %p336
      %p338 = scmp.ne.s32.totalorder %s329, %s330
      %p339 = scmp.eq.s32.totalorder %s41, 0
      %p340 = por %p338, %p339
      %p341 = scmp.ne.s32.totalorder %s329, %s330
      %p342 = scmp.eq.s32.totalorder %s42, 1
      %p343 = por %p341, %p342
      %p345 = scmp.ne.s32.totalorder %s330, %s344
      %p346 = scmp.eq.s32.totalorder %s42, 0
      %p347 = por %p345, %p346
      %s349 = sadd.s32 %s348, 1
      %p352 = scmp.eq.s32.totalorder %s36, 1
      %p353 = scmp.ne.s32.totalorder %s348, %s350
      %p354 = scmp.eq.s32.totalorder %s36, 0
      %p355 = por %p353, %p354
      %p356 = scmp.ne.s32.totalorder %s348, %s350
      %p357 = scmp.eq.s32.totalorder %s41, 1
      %p358 = por %p356, %p357
      %p359 = scmp.ne.s32.totalorder %s350, %s351
      %p360 = scmp.eq.s32.totalorder %s41, 0
      %p361 = por %p359, %p360
      %p362 = scmp.ne.s32.totalorder %s350, %s351
      %p363 = scmp.eq.s32.totalorder %s42, 1
      %p364 = por %p362, %p363
      %p366 = scmp.ne.s32.totalorder %s351, %s365
      %p367 = scmp.eq.s32.totalorder %s42, 0
      %p368 = por %p366, %p367
      %s370 = sadd.s32 %s369, 1
      %p373 = scmp.eq.s32.totalorder %s36, 1
      %p374 = scmp.ne.s32.totalorder %s369, %s371
      %p375 = scmp.eq.s32.totalorder %s36, 0
      %p376 = por %p374, %p375
      %p377 = scmp.ne.s32.totalorder %s369, %s371
      %p378 = scmp.eq.s32.totalorder %s41, 1
      %p379 = por %p377, %p378
      %p380 = scmp.ne.s32.totalorder %s371, %s372
      %p381 = scmp.eq.s32.totalorder %s41, 0
      %p382 = por %p380, %p381
      %p383 = scmp.ne.s32.totalorder %s371, %s372
      %p384 = scmp.eq.s32.totalorder %s42, 1
      %p385 = por %p383, %p384
      %p387 = scmp.ne.s32.totalorder %s372, %s386
      %p388 = scmp.eq.s32.totalorder %s42, 0
      %p389 = por %p387, %p388
      %s391 = sadd.s32 %s390, 1
      %p394 = scmp.eq.s32.totalorder %s36, 1
      %p395 = scmp.ne.s32.totalorder %s390, %s392
      %p396 = scmp.eq.s32.totalorder %s36, 0
      %p397 = por %p395, %p396
      %p398 = scmp.ne.s32.totalorder %s390, %s392
      %p399 = scmp.eq.s32.totalorder %s41, 1
      %p400 = por %p398, %p399
      %p401 = scmp.ne.s32.totalorder %s392, %s393
      %p402 = scmp.eq.s32.totalorder %s41, 0
      %p403 = por %p401, %p402
      %p404 = scmp.ne.s32.totalorder %s392, %s393
      %p405 = scmp.eq.s32.totalorder %s42, 1
      %p406 = por %p404, %p405
      %p408 = scmp.ne.s32.totalorder %s393, %s407
      %p409 = scmp.eq.s32.totalorder %s42, 0
      %p410 = por %p408, %p409
      %s412 = sadd.s32 %s411, 1
      %p415 = scmp.eq.s32.totalorder %s36, 1
      %p416 = scmp.ne.s32.totalorder %s411, %s413
      %p417 = scmp.eq.s32.totalorder %s36, 0
      %p418 = por %p416, %p417
      %p419 = scmp.ne.s32.totalorder %s411, %s413
      %p420 = scmp.eq.s32.totalorder %s41, 1
      %p421 = por %p419, %p420
      %p422 = scmp.ne.s32.totalorder %s413, %s414
      %p423 = scmp.eq.s32.totalorder %s41, 0
      %p424 = por %p422, %p423
      %p425 = scmp.ne.s32.totalorder %s413, %s414
      %p426 = scmp.eq.s32.totalorder %s42, 1
      %p427 = por %p425, %p426
      %p429 = scmp.ne.s32.totalorder %s414, %s428
      %p430 = scmp.eq.s32.totalorder %s42, 0
      %p431 = por %p429, %p430
      %s433 = sadd.s32 %s432, 1
      %p436 = scmp.eq.s32.totalorder %s36, 1
      %p437 = scmp.ne.s32.totalorder %s432, %s434
      %p438 = scmp.eq.s32.totalorder %s36, 0
      %p439 = por %p437, %p438
      %p440 = scmp.ne.s32.totalorder %s432, %s434
      %p441 = scmp.eq.s32.totalorder %s41, 1
      %p442 = por %p440, %p441
      %p443 = scmp.ne.s32.totalorder %s434, %s435
      %p444 = scmp.eq.s32.totalorder %s41, 0
      %p445 = por %p443, %p444
      %p446 = scmp.ne.s32.totalorder %s434, %s435
      %p447 = scmp.eq.s32.totalorder %s42, 1
      %p448 = por %p446, %p447
      %p450 = scmp.ne.s32.totalorder %s435, %s449
      %p451 = scmp.eq.s32.totalorder %s42, 0
      %p452 = por %p450, %p451
      %s454 = sadd.s32 %s453, 1
      %p457 = scmp.eq.s32.totalorder %s36, 1
      %p458 = scmp.ne.s32.totalorder %s453, %s455
      %p459 = scmp.eq.s32.totalorder %s36, 0
      %p460 = por %p458, %p459
      %p461 = scmp.ne.s32.totalorder %s453, %s455
      %p462 = scmp.eq.s32.totalorder %s41, 1
      %p463 = por %p461, %p462
      %p464 = scmp.ne.s32.totalorder %s455, %s456
      %p465 = scmp.eq.s32.totalorder %s41, 0
      %p466 = por %p464, %p465
      %p467 = scmp.ne.s32.totalorder %s455, %s456
      %p468 = scmp.eq.s32.totalorder %s42, 1
      %p469 = por %p467, %p468
      %p471 = scmp.ne.s32.totalorder %s456, %s470
      %p472 = scmp.eq.s32.totalorder %s42, 0
      %p473 = por %p471, %p472
      %s475 = sadd.s32 %s474, 1
      %p478 = scmp.eq.s32.totalorder %s36, 1
      %p479 = scmp.ne.s32.totalorder %s474, %s476
      %p480 = scmp.eq.s32.totalorder %s36, 0
      %p481 = por %p479, %p480
      %p482 = scmp.ne.s32.totalorder %s474, %s476
      %p483 = scmp.eq.s32.totalorder %s41, 1
      %p484 = por %p482, %p483
      %p485 = scmp.ne.s32.totalorder %s476, %s477
      %p486 = scmp.eq.s32.totalorder %s41, 0
      %p487 = por %p485, %p486
      %p488 = scmp.ne.s32.totalorder %s476, %s477
      %p489 = scmp.eq.s32.totalorder %s42, 1
      %p490 = por %p488, %p489
      %p492 = scmp.ne.s32.totalorder %s477, %s491
      %p493 = scmp.eq.s32.totalorder %s42, 0
      %p494 = por %p492, %p493
      %s496 = sadd.s32 %s495, 1
      %p499 = scmp.eq.s32.totalorder %s36, 1
      %p500 = scmp.ne.s32.totalorder %s495, %s497
      %p501 = scmp.eq.s32.totalorder %s36, 0
      %p502 = por %p500, %p501
      %p503 = scmp.ne.s32.totalorder %s495, %s497
      %p504 = scmp.eq.s32.totalorder %s41, 1
      %p505 = por %p503, %p504
      %p506 = scmp.ne.s32.totalorder %s497, %s498
      %p507 = scmp.eq.s32.totalorder %s41, 0
      %p508 = por %p506, %p507
      %p509 = scmp.ne.s32.totalorder %s497, %s498
      %p510 = scmp.eq.s32.totalorder %s42, 1
      %p511 = por %p509, %p510
      %p513 = scmp.ne.s32.totalorder %s498, %s512
      %p514 = scmp.eq.s32.totalorder %s42, 0
      %p515 = por %p513, %p514
      %s517 = sadd.s32 %s516, 1
      %p520 = scmp.eq.s32.totalorder %s36, 1
      %p521 = scmp.ne.s32.totalorder %s516, %s518
      %p522 = scmp.eq.s32.totalorder %s36, 0
      %p523 = por %p521, %p522
      %p524 = scmp.ne.s32.totalorder %s516, %s518
      %p525 = scmp.eq.s32.totalorder %s41, 1
      %p526 = por %p524, %p525
      %p527 = scmp.ne.s32.totalorder %s518, %s519
      %p528 = scmp.eq.s32.totalorder %s41, 0
      %p529 = por %p527, %p528
      %p530 = scmp.ne.s32.totalorder %s518, %s519
      %p531 = scmp.eq.s32.totalorder %s42, 1
      %p532 = por %p530, %p531
      %p534 = scmp.ne.s32.totalorder %s519, %s533
      %p535 = scmp.eq.s32.totalorder %s42, 0
      %p536 = por %p534, %p535
      %s538 = sadd.s32 %s537, 1
      %p541 = scmp.eq.s32.totalorder %s36, 1
      %p542 = scmp.ne.s32.totalorder %s537, %s539
      %p543 = scmp.eq.s32.totalorder %s36, 0
      %p544 = por %p542, %p543
      %p545 = scmp.ne.s32.totalorder %s537, %s539
      %p546 = scmp.eq.s32.totalorder %s41, 1
      %p547 = por %p545, %p546
      %p548 = scmp.ne.s32.totalorder %s539, %s540
      %p549 = scmp.eq.s32.totalorder %s41, 0
      %p550 = por %p548, %p549
      %p551 = scmp.ne.s32.totalorder %s539, %s540
      %p552 = scmp.eq.s32.totalorder %s42, 1
      %p553 = por %p551, %p552
      %p555 = scmp.ne.s32.totalorder %s540, %s554
      %p556 = scmp.eq.s32.totalorder %s42, 0
      %p557 = por %p555, %p556
      %s558 = ssub.s32 %s36, %s43
      %p559 = scmp.eq.s32.totalorder %s558, 0
      %s561 = sadd.s32 %s560, 1
      %s562 = scalar_select %p559, %s560, %s561
      %p565 = pneg %p559
      %p566 = scmp.eq.s32.totalorder %s36, 1
      %p567 = por %p565, %p566
      %p568 = scmp.ne.s32.totalorder %s560, %s563
      %p569 = scmp.eq.s32.totalorder %s36, 0
      %p570 = por %p568, %p569
      %p571 = scmp.ne.s32.totalorder %s560, %s563
      %p572 = scmp.eq.s32.totalorder %s41, 1
      %p573 = por %p571, %p572
      %p574 = scmp.ne.s32.totalorder %s563, %s564
      %p575 = scmp.eq.s32.totalorder %s41, 0
      %p576 = por %p574, %p575
      %p577 = scmp.ne.s32.totalorder %s563, %s564
      %p578 = scmp.eq.s32.totalorder %s42, 1
      %p579 = por %p577, %p578
      %p581 = scmp.ne.s32.totalorder %s564, %s580
      %p582 = scmp.eq.s32.totalorder %s42, 0
      %p583 = por %p581, %p582
      %s584 = ssub.s32 %s36, %s43
      %p585 = scmp.eq.s32.totalorder %s584, 0
      %s587 = sadd.s32 %s586, 1
      %s588 = scalar_select %p585, %s586, %s587
      %p591 = pneg %p585
      %p592 = scmp.eq.s32.totalorder %s36, 1
      %p593 = por %p591, %p592
      %p594 = scmp.ne.s32.totalorder %s586, %s589
      %p595 = scmp.eq.s32.totalorder %s36, 0
      %p596 = por %p594, %p595
      %p597 = scmp.ne.s32.totalorder %s586, %s589
      %p598 = scmp.eq.s32.totalorder %s41, 1
      %p599 = por %p597, %p598
      %p600 = scmp.ne.s32.totalorder %s589, %s590
      %p601 = scmp.eq.s32.totalorder %s41, 0
      %p602 = por %p600, %p601
      %p603 = scmp.ne.s32.totalorder %s589, %s590
      %p604 = scmp.eq.s32.totalorder %s42, 1
      %p605 = por %p603, %p604
      %p607 = scmp.ne.s32.totalorder %s590, %s606
      %p608 = scmp.eq.s32.totalorder %s42, 0
      %p609 = por %p607, %p608
      %s610 = ssub.s32 %s36, %s43
      %p611 = scmp.eq.s32.totalorder %s610, 0
      %s613 = sadd.s32 %s612, 1
      %s614 = scalar_select %p611, %s612, %s613
      %p617 = pneg %p611
      %p618 = scmp.eq.s32.totalorder %s36, 1
      %p619 = por %p617, %p618
      %p620 = scmp.ne.s32.totalorder %s612, %s615
      %p621 = scmp.eq.s32.totalorder %s36, 0
      %p622 = por %p620, %p621
      %p623 = scmp.ne.s32.totalorder %s612, %s615
      %p624 = scmp.eq.s32.totalorder %s41, 1
      %p625 = por %p623, %p624
      %p626 = scmp.ne.s32.totalorder %s615, %s616
      %p627 = scmp.eq.s32.totalorder %s41, 0
      %p628 = por %p626, %p627
      %p629 = scmp.ne.s32.totalorder %s615, %s616
      %p630 = scmp.eq.s32.totalorder %s42, 1
      %p631 = por %p629, %p630
      %p633 = scmp.ne.s32.totalorder %s616, %s632
      %p634 = scmp.eq.s32.totalorder %s42, 0
      %p635 = por %p633, %p634
      %p636 = scmp.le.s32.totalorder 1, %s36
      %p637 = scmp.lt.s32.totalorder %s36, 3
      %p638 = pnand %p636, %p637
      %p639 = pneg %p638
      // Predicated region
      $region9: #{esm2_forward.1} parent=5 // pred_check
        _
      $region10: #{esm2_forward.1} parent=5 // pred_check_branch
        %641 = sbr.rel (%p638) target = $region12
      $region11: #{esm2_forward.1} parent=5 // pred_region
        %s642 = ssub.s32 %s36, 1
        // Predicated region
        $region13: #{esm2_forward.1} parent=11 // pred_check
          %p643 = pneg %p109
        $region14: #{esm2_forward.1} parent=11 // pred_check_branch
          %645 = sbr.rel (%p643) target = $region16
        $region15: #{esm2_forward.1} parent=11 // pred_region
          _
        $region16: #{esm2_forward.1} parent=11 // pred_fallthru
          _
        // Predicated region
        $region17: #{esm2_forward.1} parent=11 // pred_check
          %p646 = pneg %p130
        $region18: #{esm2_forward.1} parent=11 // pred_check_branch
          %648 = sbr.rel (%p646) target = $region20
        $region19: #{esm2_forward.1} parent=11 // pred_region
          _
        $region20: #{esm2_forward.1} parent=11 // pred_fallthru
          _
        // Predicated region
        $region21: #{esm2_forward.1} parent=11 // pred_check
          %p649 = pneg %p151
        $region22: #{esm2_forward.1} parent=11 // pred_check_branch
          %651 = sbr.rel (%p649) target = $region24
        $region23: #{esm2_forward.1} parent=11 // pred_region
          _
        $region24: #{esm2_forward.1} parent=11 // pred_fallthru
          _
        // Predicated region
        $region25: #{esm2_forward.1} parent=11 // pred_check
          %p652 = pneg %p172
        $region26: #{esm2_forward.1} parent=11 // pred_check_branch
          %654 = sbr.rel (%p652) target = $region28
        $region27: #{esm2_forward.1} parent=11 // pred_region
          _
        $region28: #{esm2_forward.1} parent=11 // pred_fallthru
          _
        // Predicated region
        $region29: #{esm2_forward.1} parent=11 // pred_check
          %p655 = pneg %p193
        $region30: #{esm2_forward.1} parent=11 // pred_check_branch
          %657 = sbr.rel (%p655) target = $region32
        $region31: #{esm2_forward.1} parent=11 // pred_region
          _
        $region32: #{esm2_forward.1} parent=11 // pred_fallthru
          _
        // Predicated region
        $region33: #{esm2_forward.1} parent=11 // pred_check
          %p658 = pneg %p214
        $region34: #{esm2_forward.1} parent=11 // pred_check_branch
          %660 = sbr.rel (%p658) target = $region36
        $region35: #{esm2_forward.1} parent=11 // pred_region
          _
        $region36: #{esm2_forward.1} parent=11 // pred_fallthru
          _
        // Predicated region
        $region37: #{esm2_forward.1} parent=11 // pred_check
          %p661 = pneg %p235
        $region38: #{esm2_forward.1} parent=11 // pred_check_branch
          %663 = sbr.rel (%p661) target = $region40
        $region39: #{esm2_forward.1} parent=11 // pred_region
          _
        $region40: #{esm2_forward.1} parent=11 // pred_fallthru
          _
        // Predicated region
        $region41: #{esm2_forward.1} parent=11 // pred_check
          %p664 = pneg %p256
        $region42: #{esm2_forward.1} parent=11 // pred_check_branch
          %666 = sbr.rel (%p664) target = $region44
        $region43: #{esm2_forward.1} parent=11 // pred_region
          _
        $region44: #{esm2_forward.1} parent=11 // pred_fallthru
          _
        // Predicated region
        $region45: #{esm2_forward.1} parent=11 // pred_check
          %p667 = pneg %p277
        $region46: #{esm2_forward.1} parent=11 // pred_check_branch
          %669 = sbr.rel (%p667) target = $region48
        $region47: #{esm2_forward.1} parent=11 // pred_region
          _
        $region48: #{esm2_forward.1} parent=11 // pred_fallthru
          _
        // Predicated region
        $region49: #{esm2_forward.1} parent=11 // pred_check
          %p670 = pneg %p298
        $region50: #{esm2_forward.1} parent=11 // pred_check_branch
          %672 = sbr.rel (%p670) target = $region52
        $region51: #{esm2_forward.1} parent=11 // pred_region
          _
        $region52: #{esm2_forward.1} parent=11 // pred_fallthru
          _
        // Predicated region
        $region53: #{esm2_forward.1} parent=11 // pred_check
          %p673 = pneg %p319
        $region54: #{esm2_forward.1} parent=11 // pred_check_branch
          %675 = sbr.rel (%p673) target = $region56
        $region55: #{esm2_forward.1} parent=11 // pred_region
          _
        $region56: #{esm2_forward.1} parent=11 // pred_fallthru
          _
        // Predicated region
        $region57: #{esm2_forward.1} parent=11 // pred_check
          %p676 = pneg %p340
        $region58: #{esm2_forward.1} parent=11 // pred_check_branch
          %678 = sbr.rel (%p676) target = $region60
        $region59: #{esm2_forward.1} parent=11 // pred_region
          _
        $region60: #{esm2_forward.1} parent=11 // pred_fallthru
          _
        // Predicated region
        $region61: #{esm2_forward.1} parent=11 // pred_check
          %p679 = pneg %p361
        $region62: #{esm2_forward.1} parent=11 // pred_check_branch
          %681 = sbr.rel (%p679) target = $region64
        $region63: #{esm2_forward.1} parent=11 // pred_region
          _
        $region64: #{esm2_forward.1} parent=11 // pred_fallthru
          _
        // Predicated region
        $region65: #{esm2_forward.1} parent=11 // pred_check
          %p682 = pneg %p382
        $region66: #{esm2_forward.1} parent=11 // pred_check_branch
          %684 = sbr.rel (%p682) target = $region68
        $region67: #{esm2_forward.1} parent=11 // pred_region
          _
        $region68: #{esm2_forward.1} parent=11 // pred_fallthru
          _
        // Predicated region
        $region69: #{esm2_forward.1} parent=11 // pred_check
          %p685 = pneg %p403
        $region70: #{esm2_forward.1} parent=11 // pred_check_branch
          %687 = sbr.rel (%p685) target = $region72
        $region71: #{esm2_forward.1} parent=11 // pred_region
          _
        $region72: #{esm2_forward.1} parent=11 // pred_fallthru
          _
        // Predicated region
        $region73: #{esm2_forward.1} parent=11 // pred_check
          %p688 = pneg %p424
        $region74: #{esm2_forward.1} parent=11 // pred_check_branch
          %690 = sbr.rel (%p688) target = $region76
        $region75: #{esm2_forward.1} parent=11 // pred_region
          _
        $region76: #{esm2_forward.1} parent=11 // pred_fallthru
          _
        // Predicated region
        $region77: #{esm2_forward.1} parent=11 // pred_check
          %p691 = pneg %p445
        $region78: #{esm2_forward.1} parent=11 // pred_check_branch
          %693 = sbr.rel (%p691) target = $region80
        $region79: #{esm2_forward.1} parent=11 // pred_region
          _
        $region80: #{esm2_forward.1} parent=11 // pred_fallthru
          _
        // Predicated region
        $region81: #{esm2_forward.1} parent=11 // pred_check
          %p694 = pneg %p466
        $region82: #{esm2_forward.1} parent=11 // pred_check_branch
          %696 = sbr.rel (%p694) target = $region84
        $region83: #{esm2_forward.1} parent=11 // pred_region
          _
        $region84: #{esm2_forward.1} parent=11 // pred_fallthru
          _
        // Predicated region
        $region85: #{esm2_forward.1} parent=11 // pred_check
          %p697 = pneg %p487
        $region86: #{esm2_forward.1} parent=11 // pred_check_branch
          %699 = sbr.rel (%p697) target = $region88
        $region87: #{esm2_forward.1} parent=11 // pred_region
          _
        $region88: #{esm2_forward.1} parent=11 // pred_fallthru
          _
        // Predicated region
        $region89: #{esm2_forward.1} parent=11 // pred_check
          %p700 = pneg %p508
        $region90: #{esm2_forward.1} parent=11 // pred_check_branch
          %702 = sbr.rel (%p700) target = $region92
        $region91: #{esm2_forward.1} parent=11 // pred_region
          _
        $region92: #{esm2_forward.1} parent=11 // pred_fallthru
          _
        // Predicated region
        $region93: #{esm2_forward.1} parent=11 // pred_check
          %p703 = pneg %p529
        $region94: #{esm2_forward.1} parent=11 // pred_check_branch
          %705 = sbr.rel (%p703) target = $region96
        $region95: #{esm2_forward.1} parent=11 // pred_region
          _
        $region96: #{esm2_forward.1} parent=11 // pred_fallthru
          _
        // Predicated region
        $region97: #{esm2_forward.1} parent=11 // pred_check
          %p706 = pneg %p550
        $region98: #{esm2_forward.1} parent=11 // pred_check_branch
          %708 = sbr.rel (%p706) target = $region100
        $region99: #{esm2_forward.1} parent=11 // pred_region
          _
        $region100: #{esm2_forward.1} parent=11 // pred_fallthru
          _
      $region12: #{esm2_forward.1} parent=5 // pred_fallthru
        _
      %p709 = scmp.lt.s32.totalorder %s36, 2
      // Predicated region
      $region101: #{esm2_forward.1} parent=5 // pred_check
        %p710 = pneg %p709
      $region102: #{esm2_forward.1} parent=5 // pred_check_branch
        %712 = sbr.rel (%p710) target = $region104
      $region103: #{esm2_forward.1} parent=5 // pred_region
        // Predicated region
        $region105: #{esm2_forward.1} parent=103 // pred_check
          %p713 = pneg %p56
        $region106: #{esm2_forward.1} parent=103 // pred_check_branch
          %715 = sbr.rel (%p713) target = $region108
        $region107: #{esm2_forward.1} parent=103 // pred_region
          %p716 = scmp.lt.s32.totalorder %s36, 1
          %s717 = scalar_select %p716, %s36, 1
          %s718 = smul.addr %s717, 8
          %s719 = scalar_lea.vmem %s0, %s718
        $region108: #{esm2_forward.1} parent=103 // pred_fallthru
          _
        // Predicated region
        $region109: #{esm2_forward.1} parent=103 // pred_check
          %p720 = pneg %p82
        $region110: #{esm2_forward.1} parent=103 // pred_check_branch
          %722 = sbr.rel (%p720) target = $region112
        $region111: #{esm2_forward.1} parent=103 // pred_region
          %p723 = scmp.lt.s32.totalorder %s36, 1
          %s724 = scalar_select %p723, %s36, 1
          %s725 = scalar_lea.vmem %s1, %s724
        $region112: #{esm2_forward.1} parent=103 // pred_fallthru
          _
      $region104: #{esm2_forward.1} parent=5 // pred_fallthru
        _
      %p726 = scmp.le.s32.totalorder 1, %s36
      %p727 = scmp.lt.s32.totalorder %s36, 3
      %p728 = pnand %p726, %p727
      %p729 = pneg %p728
      // Predicated region
      $region113: #{esm2_forward.1} parent=5 // pred_check
        _
      $region114: #{esm2_forward.1} parent=5 // pred_check_branch
        %731 = sbr.rel (%p728) target = $region116
      $region115: #{esm2_forward.1} parent=5 // pred_region
        %s732 = ssub.s32 %s36, 1
        %p733 = scmp.lt.s32.totalorder %s41, 1
        %s734 = scalar_select %p733, %s41, 1
        %s735 = smul.addr %s734, 8
        %s736 = scalar_lea.vmem %s0, %s735
        %p737 = pneg %p62
        %p738 = pneg %p59
        %p739 = scmp.lt.s32.totalorder %s41, 1
        %s740 = scalar_select %p739, %s41, 1
        %s741 = scalar_lea.vmem %s1, %s740
        %p742 = pneg %p88
        %p743 = pneg %p85
        %p744 = pneg %p109
        %p745 = pneg %p106
        %p746 = pneg %p130
        %p747 = pneg %p127
        %p748 = pneg %p151
        %p749 = pneg %p148
        %p750 = pneg %p172
        %p751 = pneg %p169
        %p752 = pneg %p193
        %p753 = pneg %p190
        %p754 = pneg %p214
        %p755 = pneg %p211
        %p756 = pneg %p235
        %p757 = pneg %p232
        %p758 = pneg %p256
        %p759 = pneg %p253
        %p760 = pneg %p277
        %p761 = pneg %p274
        %p762 = pneg %p298
        %p763 = pneg %p295
        %p764 = pneg %p319
        %p765 = pneg %p316
        %p766 = pneg %p340
        %p767 = pneg %p337
        %p768 = pneg %p361
        %p769 = pneg %p358
        %p770 = pneg %p382
        %p771 = pneg %p379
        %p772 = pneg %p403
        %p773 = pneg %p400
        %p774 = pneg %p424
        %p775 = pneg %p421
        %p776 = pneg %p445
        %p777 = pneg %p442
        %p778 = pneg %p466
        %p779 = pneg %p463
        %p780 = pneg %p487
        %p781 = pneg %p484
        %p782 = pneg %p508
        %p783 = pneg %p505
        %p784 = pneg %p529
        %p785 = pneg %p526
        %p786 = pneg %p550
        %p787 = pneg %p547
        %p788 = pneg %p576
        %p789 = pneg %p573
        %p790 = scmp.lt.s32.totalorder %s41, 1
        %s791 = scalar_select %p790, %s41, 1
        %s792 = smul.addr %s791, 4
        %s793 = scalar_lea.vmem %s24, %s792
        %p794 = pneg %p602
        %p795 = pneg %p599
        %p796 = scmp.lt.s32.totalorder %s41, 1
        %s797 = scalar_select %p796, %s41, 1
        %s798 = smul.addr %s797, 4
        %s799 = scalar_lea.vmem %s25, %s798
        %p800 = pneg %p628
        %p801 = pneg %p625
        %s802 = sand.u32 %s615, 1
        %s803 = scalar_lea.sflag [#allocation3], %s802
        %s804 = sand.u32 %s615, 1
        %s805 = smul.addr %s804, 8
        %s806 = scalar_lea.vmem [#allocation2], %s805
        %p807 = scmp.lt.s32.totalorder %s41, 1
        %s808 = scalar_select %p807, %s41, 1
        %s809 = smul.addr %s808, 8
        %s810 = scalar_lea.vmem %s0, %s809
        %p811 = scmp.lt.s32.totalorder %s41, 1
        %s812 = scalar_select %p811, %s41, 1
        %s813 = scalar_lea.vmem %s1, %s812
        %p814 = scmp.lt.s32.totalorder %s41, 1
        %s815 = scalar_select %p814, %s41, 1
        %s816 = smul.addr %s815, 4
        %s817 = scalar_lea.vmem %s24, %s816
        %p818 = scmp.lt.s32.totalorder %s41, 1
        %s819 = scalar_select %p818, %s41, 1
        %s820 = smul.addr %s819, 4
        %s821 = scalar_lea.vmem %s25, %s820
        %v823 = vld [vmem:[%s2] sm:$0xff]
        %v824 = vld [vmem:[%s3] sm:$0xff]
        %v825 = vld [vmem:[%s813] sm:$0x1]
        %v826 = vld [vmem:[%s810] sm:$0xff]
        %v827 = vld [vmem:[%s4] sm:$0x1]
        %v828 = vld [vmem:[%s5] sm:$0x1]
        %vm829 = vcmask 261120
        %v830 = vsel %vm829, %v826, 0.0
        %831 = vadd.xlane.f32.xlu0 %v830
        %v832 = vpop.xlane.xlu0 %831
        %v833 = vrcp.pop 32.0
        %v834 = vmul.f32 %v832, %v833
        %v835 = vmul.f32 %v826, %v826
        %v836 = vsel %vm829, %v835, 0.0
        %837 = vadd.xlane.f32.xlu0 %v836
        %v838 = vpop.xlane.xlu0 %837
        %v839 = vmul.f32 %v838, %v833
        %v840 = vmul.f32 %v834, %v834
        %v841 = vsub.f32 %v839, %v840
        %v842 = vsub.f32 %v826, %v834
        %v843 = vadd.f32 %v841, 1e-05
        %v844 = vrsqrt.pop %v843
        %v845 = vmul.f32 %v842, %v844
        %v847 = vlaneseq
        %v848 = vshrl.u32 %v847, 7
        %v849 = vsub.s32 0, %v848
        %v850 = vrot.slane %v827, %v849
        %v852 = vmul.f32 %v845, %v850
        %v854 = vlaneseq
        %v855 = vshrl.u32 %v854, 7
        %v856 = vsub.s32 0, %v855
        %v857 = vrot.slane %v828, %v856
        %v859 = vadd.f32 %v852, %v857
        %v860 = vpack.c.bf16 %v859, %v859
        %v861 = vld [vmem:[%s6] sm:$0xff]
        %v862 = vld [vmem:[%s6 + $0x8] sm:$0xff]
        %v863 = vld [vmem:[%s6 + $0x10] sm:$0xff]
        %v864 = vld [vmem:[%s6 + $0x18] sm:$0xff]
        %v865 = vld [vmem:[%s7] sm:$0x3]
        %v867 = vlaneseq
        %v868 = vshrl.u32 %v867, 7
        %v869 = vsub.s32 0, %v868
        %v870 = vrot.slane %v865, %v869
        %v871 = vlaneseq
        %v872 = vshrl.u32 %v871, 7
        %v873 = vsub.s32 1, %v872
        %v874 = vrot.slane %v865, %v873
        %v881 = vunpack.c.l.b16 %v861
        %v882 = vunpack.c.h.b16 %v861
        %v883 = vunpack.c.l.b16 %v862
        %v884 = vunpack.c.h.b16 %v862
        %v885 = vunpack.c.l.b16 %v863
        %v886 = vunpack.c.h.b16 %v863
        %v887 = vunpack.c.l.b16 %v864
        %v888 = vunpack.c.h.b16 %v864
        %v889 = vpack.c.b16 %v883, %v881
        %v890 = vpack.c.b16 %v884, %v882
        %v891 = vpack.c.b16 %v887, %v885
        %v892 = vpack.c.b16 %v888, %v886
        %v898 = vsel %vm829, %v860, 0
        %900 = vmatprep.subr.bf16.mxu0 0
        %901 = vmatpush1.bf16.msra.mxu0 0
        %902 = vmatprep.subr.bf16.mxu0 0
        %903 = vmatpush1.bf16.msra.mxu0 0
        %904 = vmatprep.subr.bf16.mxu0 0
        %905 = vmatpush1.bf16.msra.mxu0 0
        %906 = vmatprep.subr.bf16.mxu0 0
        %907 = vmatpush1.bf16.msra.mxu0 0
        %908 = vmatprep.subr.bf16.mxu0 0
        %909 = vmatpush1.bf16.msra.mxu0 0
        %910 = vmatprep.subr.bf16.mxu0 0
        %911 = vmatpush1.bf16.msra.mxu0 0
        %912 = vmatprep.subr.bf16.mxu0 %v892
        %913 = vmatpush1.bf16.msra.mxu0 %v891
        %914 = vmatprep.subr.bf16.mxu0 %v890
        %915 = vmatpush1.bf16.msra.mxu0 %v889
        %916 = vmatprep.subr.bf16.mxu0 0
        %917 = vmatpush2.bf16.msra.mxu0 0
        %918 = vmatprep.subr.bf16.mxu0 0
        %919 = vmatpush2.bf16.msra.mxu0 0
        %920 = vmatprep.subr.bf16.mxu0 0
        %921 = vmatpush2.bf16.msra.mxu0 0
        %922 = vmatprep.subr.bf16.mxu0 0
        %923 = vmatpush2.bf16.msra.mxu0 0
        %924 = vmatprep.subr.bf16.mxu0 0
        %925 = vmatpush2.bf16.msra.mxu0 0
        %926 = vmatprep.subr.bf16.mxu0 0
        %927 = vmatpush2.bf16.msra.mxu0 0
        %928 = vmatprep.subr.bf16.mxu0 0
        %929 = vmatpush2.bf16.msra.mxu0 0
        %930 = vmatprep.subr.bf16.mxu0 0
        %931 = vmatpush2.bf16.msra.mxu0 0
        %932 = vmatprep.mubr.bf16.mxu0 0
        %933 = vmatmul.mubr.bf16.gmra.mxu0 %v898
        %v934 = vpop.f32.mrf.mxu0
        %v935 = vadd.f32 %v870, %v934
        %v936 = vpop.f32.mrf.mxu0
        %v937 = vadd.f32 %v874, %v936
        %v938 = vpop.f32.mrf.mxu0
        %v939 = vpop.f32.mrf.mxu0
        %940 = vdwg.mxu0
        %v941 = vmul.f32 %v935, %v823
        %943 = vrot.lane.b32.xlu0 %v824, 96
        %v944 = vpop.permute.xlu0 %943
        %v946 = vmul.f32 %v935, %v944
        %948 = vrot.lane.b32.xlu0 %v946, 32
        %v949 = vpop.permute.xlu0 %948
        %v951 = vadd.f32 %v941, %v949
        %953 = vrot.lane.b32.xlu0 %v823, 32
        %v954 = vpop.permute.xlu0 %953
        %v956 = vmul.f32 %v935, %v954
        %v957 = vmul.f32 %v937, %v824
        %959 = vrot.lane.b32.xlu0 %v957, 32
        %v960 = vpop.permute.xlu0 %959
        %v962 = vadd.f32 %v956, %v960
        %964 = vrot.lane.b32.xlu0 %v951, 120
        %v965 = vpop.permute.xlu0 %964
        %967 = vrot.lane.b32.xlu0 %v951, 112
        %v968 = vpop.permute.xlu0 %967
        %970 = vrot.lane.b32.xlu0 %v951, 104
        %v971 = vpop.permute.xlu0 %970
        %v973 = vpack.c.bf16 %v951, %v951
        %v974 = vpack.c.bf16 %v965, %v965
        %v975 = vpack.c.bf16 %v968, %v968
        %v976 = vpack.c.bf16 %v971, %v971
        %978 = vrot.lane.b32.xlu0 %v962, 120
        %v979 = vpop.permute.xlu0 %978
        %981 = vrot.lane.b32.xlu0 %v962, 112
        %v982 = vpop.permute.xlu0 %981
        %984 = vrot.lane.b32.xlu0 %v962, 104
        %v985 = vpop.permute.xlu0 %984
        %v987 = vpack.c.bf16 %v962, %v962
        %v988 = vpack.c.bf16 %v979, %v979
        %v989 = vpack.c.bf16 %v982, %v982
        %v990 = vpack.c.bf16 %v985, %v985
        %992 = vrot.lane.b32.xlu0 %v935, 120
        %v993 = vpop.permute.xlu0 %992
        %995 = vrot.lane.b32.xlu0 %v935, 112
        %v996 = vpop.permute.xlu0 %995
        %998 = vrot.lane.b32.xlu0 %v935, 104
        %v999 = vpop.permute.xlu0 %998
        %v1001 = vpack.c.bf16 %v935, %v935
        %v1002 = vpack.c.bf16 %v993, %v993
        %v1003 = vpack.c.bf16 %v996, %v996
        %v1004 = vpack.c.bf16 %v999, %v999
        %v1006 = vlaneseq
        %v1007 = vshrl.u32 %v1006, 7
        %v1008 = vsub.s32 0, %v1007
        %v1009 = vrot.slane %v825, %v1008
        %1012 = vrot.lane.b32.xlu0 %v987, 96
        %v1013 = vpop.permute.xlu0 %1012
        %vm1014 = vcmask 64512
        %v1016 = vsel %vm1014, %v973, 0
        %v1019 = vsel %vm1014, %v1013, 0
        %1021 = vmatprep.subr.bf16.mxu0 0
        %1022 = vmatpush1.bf16.xpose.msra.mxu0 0
        %1023 = vmatprep.subr.bf16.mxu0 0
        %1024 = vmatpush1.bf16.xpose.msra.mxu0 0
        %1025 = vmatprep.subr.bf16.mxu0 0
        %1026 = vmatpush1.bf16.xpose.msra.mxu0 0
        %1027 = vmatprep.subr.bf16.mxu0 0
        %1028 = vmatpush1.bf16.xpose.msra.mxu0 0
        %1029 = vmatprep.subr.bf16.mxu0 0
        %1030 = vmatpush1.bf16.xpose.msra.mxu0 0
        %1031 = vmatprep.subr.bf16.mxu0 0
        %1032 = vmatpush1.bf16.xpose.msra.mxu0 0
        %1033 = vmatprep.subr.bf16.mxu0 0
        %1034 = vmatpush1.bf16.xpose.msra.mxu0 0
        %1035 = vmatprep.subr.bf16.mxu0 0
        %1036 = vmatpush1.bf16.xpose.msra.mxu0 %v1019
        %1037 = vmatprep.subr.bf16.mxu0 0
        %1038 = vmatpush2.bf16.xpose.msra.mxu0 0
        %1039 = vmatprep.subr.bf16.mxu0 0
        %1040 = vmatpush2.bf16.xpose.msra.mxu0 0
        %1041 = vmatprep.subr.bf16.mxu0 0
        %1042 = vmatpush2.bf16.xpose.msra.mxu0 0
        %1043 = vmatprep.subr.bf16.mxu0 0
        %1044 = vmatpush2.bf16.xpose.msra.mxu0 0
        %1045 = vmatprep.subr.bf16.mxu0 0
        %1046 = vmatpush2.bf16.xpose.msra.mxu0 0
        %1047 = vmatprep.subr.bf16.mxu0 0
        %1048 = vmatpush2.bf16.xpose.msra.mxu0 0
        %1049 = vmatprep.subr.bf16.mxu0 0
        %1050 = vmatpush2.bf16.xpose.msra.mxu0 0
        %1051 = vmatprep.subr.bf16.mxu0 0
        %1052 = vmatpush2.bf16.xpose.msra.mxu0 0
        %1053 = vmatprep.mubr.bf16.mxu0 0
        %1054 = vmatmul.mubr.bf16.gmra.mxu0 %v1016
        %v1055 = vpop.f32.mrf.mxu0
        %v1056 = vadd.f32 %v1009, %v1055
        %v1057 = vpop.f32.mrf.mxu0
        %v1058 = vpop.f32.mrf.mxu0
        %v1059 = vpop.f32.mrf.mxu0
        %1060 = vdwg.mxu0
        %1062 = vrot.lane.b32.xlu0 %v988, 96
        %v1063 = vpop.permute.xlu0 %1062
        %v1065 = vsel %vm1014, %v974, 0
        %v1068 = vsel %vm1014, %v1063, 0
        %1070 = vmatprep.subr.bf16.mxu0 0
        %1071 = vmatpush1.bf16.xpose.msra.mxu0 0
        %1072 = vmatprep.subr.bf16.mxu0 0
        %1073 = vmatpush1.bf16.xpose.msra.mxu0 0
        %1074 = vmatprep.subr.bf16.mxu0 0
        %1075 = vmatpush1.bf16.xpose.msra.mxu0 0
        %1076 = vmatprep.subr.bf16.mxu0 0
        %1077 = vmatpush1.bf16.xpose.msra.mxu0 0
        %1078 = vmatprep.subr.bf16.mxu0 0
        %1079 = vmatpush1.bf16.xpose.msra.mxu0 0
        %1080 = vmatprep.subr.bf16.mxu0 0
        %1081 = vmatpush1.bf16.xpose.msra.mxu0 0
        %1082 = vmatprep.subr.bf16.mxu0 0
        %1083 = vmatpush1.bf16.xpose.msra.mxu0 0
        %1084 = vmatprep.subr.bf16.mxu0 0
        %1085 = vmatpush1.bf16.xpose.msra.mxu0 %v1068
        %1086 = vmatprep.subr.bf16.mxu0 0
        %1087 = vmatpush2.bf16.xpose.msra.mxu0 0
        %1088 = vmatprep.subr.bf16.mxu0 0
        %1089 = vmatpush2.bf16.xpose.msra.mxu0 0
        %1090 = vmatprep.subr.bf16.mxu0 0
        %1091 = vmatpush2.bf16.xpose.msra.mxu0 0
        %1092 = vmatprep.subr.bf16.mxu0 0
        %1093 = vmatpush2.bf16.xpose.msra.mxu0 0
        %1094 = vmatprep.subr.bf16.mxu0 0
        %1095 = vmatpush2.bf16.xpose.msra.mxu0 0
        %1096 = vmatprep.subr.bf16.mxu0 0
        %1097 = vmatpush2.bf16.xpose.msra.mxu0 0
        %1098 = vmatprep.subr.bf16.mxu0 0
        %1099 = vmatpush2.bf16.xpose.msra.mxu0 0
        %1100 = vmatprep.subr.bf16.mxu0 0
        %1101 = vmatpush2.bf16.xpose.msra.mxu0 0
        %1102 = vmatprep.mubr.bf16.mxu0 0
        %1103 = vmatmul.mubr.bf16.gmra.mxu0 %v1065
        %v1104 = vpop.f32.mrf.mxu0
        %v1105 = vadd.f32 %v1009, %v1104
        %v1106 = vpop.f32.mrf.mxu0
        %v1107 = vpop.f32.mrf.mxu0
        %v1108 = vpop.f32.mrf.mxu0
        %1109 = vdwg.mxu0
        %1111 = vrot.lane.b32.xlu0 %v989, 96
        %v1112 = vpop.permute.xlu0 %1111
        %v1114 = vsel %vm1014, %v975, 0
        %v1117 = vsel %vm1014, %v1112, 0
        %1119 = vmatprep.subr.bf16.mxu0 0
        %1120 = vmatpush1.bf16.xpose.msra.mxu0 0
        %1121 = vmatprep.subr.bf16.mxu0 0
        %1122 = vmatpush1.bf16.xpose.msra.mxu0 0
        %1123 = vmatprep.subr.bf16.mxu0 0
        %1124 = vmatpush1.bf16.xpose.msra.mxu0 0
        %1125 = vmatprep.subr.bf16.mxu0 0
        %1126 = vmatpush1.bf16.xpose.msra.mxu0 0
        %1127 = vmatprep.subr.bf16.mxu0 0
        %1128 = vmatpush1.bf16.xpose.msra.mxu0 0
        %1129 = vmatprep.subr.bf16.mxu0 0
        %1130 = vmatpush1.bf16.xpose.msra.mxu0 0
        %1131 = vmatprep.subr.bf16.mxu0 0
        %1132 = vmatpush1.bf16.xpose.msra.mxu0 0
        %1133 = vmatprep.subr.bf16.mxu0 0
        %1134 = vmatpush1.bf16.xpose.msra.mxu0 %v1117
        %1135 = vmatprep.subr.bf16.mxu0 0
        %1136 = vmatpush2.bf16.xpose.msra.mxu0 0
        %1137 = vmatprep.subr.bf16.mxu0 0
        %1138 = vmatpush2.bf16.xpose.msra.mxu0 0
        %1139 = vmatprep.subr.bf16.mxu0 0
        %1140 = vmatpush2.bf16.xpose.msra.mxu0 0
        %1141 = vmatprep.subr.bf16.mxu0 0
        %1142 = vmatpush2.bf16.xpose.msra.mxu0 0
        %1143 = vmatprep.subr.bf16.mxu0 0
        %1144 = vmatpush2.bf16.xpose.msra.mxu0 0
        %1145 = vmatprep.subr.bf16.mxu0 0
        %1146 = vmatpush2.bf16.xpose.msra.mxu0 0
        %1147 = vmatprep.subr.bf16.mxu0 0
        %1148 = vmatpush2.bf16.xpose.msra.mxu0 0
        %1149 = vmatprep.subr.bf16.mxu0 0
        %1150 = vmatpush2.bf16.xpose.msra.mxu0 0
        %1151 = vmatprep.mubr.bf16.mxu0 0
        %1152 = vmatmul.mubr.bf16.gmra.mxu0 %v1114
        %v1153 = vpop.f32.mrf.mxu0
        %v1154 = vadd.f32 %v1009, %v1153
        %v1155 = vpop.f32.mrf.mxu0
        %v1156 = vpop.f32.mrf.mxu0
        %v1157 = vpop.f32.mrf.mxu0
        %1158 = vdwg.mxu0
        %1160 = vrot.lane.b32.xlu0 %v990, 96
        %v1161 = vpop.permute.xlu0 %1160
        %v1163 = vsel %vm1014, %v976, 0
        %v1166 = vsel %vm1014, %v1161, 0
        %1168 = vmatprep.subr.bf16.mxu0 0
        %1169 = vmatpush1.bf16.xpose.msra.mxu0 0
        %1170 = vmatprep.subr.bf16.mxu0 0
        %1171 = vmatpush1.bf16.xpose.msra.mxu0 0
        %1172 = vmatprep.subr.bf16.mxu0 0
        %1173 = vmatpush1.bf16.xpose.msra.mxu0 0
        %1174 = vmatprep.subr.bf16.mxu0 0
        %1175 = vmatpush1.bf16.xpose.msra.mxu0 0
        %1176 = vmatprep.subr.bf16.mxu0 0
        %1177 = vmatpush1.bf16.xpose.msra.mxu0 0
        %1178 = vmatprep.subr.bf16.mxu0 0
        %1179 = vmatpush1.bf16.xpose.msra.mxu0 0
        %1180 = vmatprep.subr.bf16.mxu0 0
        %1181 = vmatpush1.bf16.xpose.msra.mxu0 0
        %1182 = vmatprep.subr.bf16.mxu0 0
        %1183 = vmatpush1.bf16.xpose.msra.mxu0 %v1166
        %1184 = vmatprep.subr.bf16.mxu0 0
        %1185 = vmatpush2.bf16.xpose.msra.mxu0 0
        %1186 = vmatprep.subr.bf16.mxu0 0
        %1187 = vmatpush2.bf16.xpose.msra.mxu0 0
        %1188 = vmatprep.subr.bf16.mxu0 0
        %1189 = vmatpush2.bf16.xpose.msra.mxu0 0
        %1190 = vmatprep.subr.bf16.mxu0 0
        %1191 = vmatpush2.bf16.xpose.msra.mxu0 0
        %1192 = vmatprep.subr.bf16.mxu0 0
        %1193 = vmatpush2.bf16.xpose.msra.mxu0 0
        %1194 = vmatprep.subr.bf16.mxu0 0
        %1195 = vmatpush2.bf16.xpose.msra.mxu0 0
        %1196 = vmatprep.subr.bf16.mxu0 0
        %1197 = vmatpush2.bf16.xpose.msra.mxu0 0
        %1198 = vmatprep.subr.bf16.mxu0 0
        %1199 = vmatpush2.bf16.xpose.msra.mxu0 0
        %1200 = vmatprep.mubr.bf16.mxu0 0
        %1201 = vmatmul.mubr.bf16.gmra.mxu0 %v1163
        %v1202 = vpop.f32.mrf.mxu0
        %v1203 = vadd.f32 %v1009, %v1202
        %v1204 = vpop.f32.mrf.mxu0
        %v1205 = vpop.f32.mrf.mxu0
        %v1206 = vpop.f32.mrf.mxu0
        %1207 = vdwg.mxu0
        %v1208 = vsel %vm1014, %v1056, -inf
        %1209 = vmax.xlane.f32.xlu0 %v1208
        %v1210 = vpop.xlane.xlu0 %1209
        %v1211 = vsel %vm1014, %v1105, -inf
        %1212 = vmax.xlane.f32.xlu0 %v1211
        %v1213 = vpop.xlane.xlu0 %1212
        %v1214 = vsel %vm1014, %v1154, -inf
        %1215 = vmax.xlane.f32.xlu0 %v1214
        %v1216 = vpop.xlane.xlu0 %1215
        %v1217 = vsel %vm1014, %v1203, -inf
        %1218 = vmax.xlane.f32.xlu0 %v1217
        %v1219 = vpop.xlane.xlu0 %1218
        %v1220 = vsub.f32 %v1056, %v1210
        %v1221 = vsub.f32 %v1105, %v1213
        %v1222 = vsub.f32 %v1154, %v1216
        %v1223 = vsub.f32 %v1203, %v1219
        %v1224 = vmul.f32 %v1220, 1.442695
        %v1225 = vpow.pop %v1224
        %v1226 = vmul.f32 %v1221, 1.442695
        %v1227 = vpow.pop %v1226
        %v1228 = vmul.f32 %v1222, 1.442695
        %v1229 = vpow.pop %v1228
        %v1230 = vmul.f32 %v1223, 1.442695
        %v1231 = vpow.pop %v1230
        %v1232 = vsel %vm1014, %v1225, 0.0
        %1233 = vadd.xlane.f32.xlu0 %v1232
        %v1234 = vpop.xlane.xlu0 %1233
        %v1235 = vsel %vm1014, %v1227, 0.0
        %1236 = vadd.xlane.f32.xlu0 %v1235
        %v1237 = vpop.xlane.xlu0 %1236
        %v1238 = vsel %vm1014, %v1229, 0.0
        %1239 = vadd.xlane.f32.xlu0 %v1238
        %v1240 = vpop.xlane.xlu0 %1239
        %v1241 = vsel %vm1014, %v1231, 0.0
        %1242 = vadd.xlane.f32.xlu0 %v1241
        %v1243 = vpop.xlane.xlu0 %1242
        %v1244 = vrcp.pop %v1234
        %v1245 = vrcp.pop %v1237
        %v1246 = vrcp.pop %v1240
        %v1247 = vrcp.pop %v1243
        %v1248 = vmul.f32 %v1225, %v1244
        %v1249 = vmul.f32 %v1227, %v1245
        %v1250 = vmul.f32 %v1229, %v1246
        %v1251 = vmul.f32 %v1231, %v1247
        %v1252 = vpack.c.bf16 %v1248, %v1248
        %v1253 = vpack.c.bf16 %v1249, %v1249
        %v1254 = vpack.c.bf16 %v1250, %v1250
        %v1255 = vpack.c.bf16 %v1251, %v1251
        %1257 = vrot.lane.b32.xlu0 %v1001, 64
        %v1258 = vpop.permute.xlu0 %1257
        %v1260 = vsel %vm1014, %v1252, 0
        %vm1262 = vcmask 1043456
        %v1264 = vsel %vm1262, %v1258, 0
        %1266 = vmatprep.subr.bf16.mxu0 0
        %1267 = vmatpush1.bf16.msra.mxu0 0
        %1268 = vmatprep.subr.bf16.mxu0 0
        %1269 = vmatpush1.bf16.msra.mxu0 0
        %1270 = vmatprep.subr.bf16.mxu0 0
        %1271 = vmatpush1.bf16.msra.mxu0 0
        %1272 = vmatprep.subr.bf16.mxu0 0
        %1273 = vmatpush1.bf16.msra.mxu0 0
        %1274 = vmatprep.subr.bf16.mxu0 0
        %1275 = vmatpush1.bf16.msra.mxu0 0
        %1276 = vmatprep.subr.bf16.mxu0 0
        %1277 = vmatpush1.bf16.msra.mxu0 0
        %1278 = vmatprep.subr.bf16.mxu0 0
        %1279 = vmatpush1.bf16.msra.mxu0 0
        %1280 = vmatprep.subr.bf16.mxu0 0
        %1281 = vmatpush1.bf16.msra.mxu0 %v1264
        %1282 = vmatprep.subr.bf16.mxu0 0
        %1283 = vmatpush2.bf16.msra.mxu0 0
        %1284 = vmatprep.subr.bf16.mxu0 0
        %1285 = vmatpush2.bf16.msra.mxu0 0
        %1286 = vmatprep.subr.bf16.mxu0 0
        %1287 = vmatpush2.bf16.msra.mxu0 0
        %1288 = vmatprep.subr.bf16.mxu0 0
        %1289 = vmatpush2.bf16.msra.mxu0 0
        %1290 = vmatprep.subr.bf16.mxu0 0
        %1291 = vmatpush2.bf16.msra.mxu0 0
        %1292 = vmatprep.subr.bf16.mxu0 0
        %1293 = vmatpush2.bf16.msra.mxu0 0
        %1294 = vmatprep.subr.bf16.mxu0 0
        %1295 = vmatpush2.bf16.msra.mxu0 0
        %1296 = vmatprep.subr.bf16.mxu0 0
        %1297 = vmatpush2.bf16.msra.mxu0 0
        %1298 = vmatprep.mubr.bf16.mxu0 0
        %1299 = vmatmul.mubr.bf16.gmra.mxu0 %v1260
        %v1300 = vpop.f32.mrf.mxu0
        %v1301 = vadd.f32 0.0, %v1300
        %v1302 = vpop.f32.mrf.mxu0
        %v1303 = vpop.f32.mrf.mxu0
        %v1304 = vpop.f32.mrf.mxu0
        %1305 = vdwg.mxu0
        %1307 = vrot.lane.b32.xlu0 %v1002, 64
        %v1308 = vpop.permute.xlu0 %1307
        %v1310 = vsel %vm1014, %v1253, 0
        %v1313 = vsel %vm1262, %v1308, 0
        %1315 = vmatprep.subr.bf16.mxu0 0
        %1316 = vmatpush1.bf16.msra.mxu0 0
        %1317 = vmatprep.subr.bf16.mxu0 0
        %1318 = vmatpush1.bf16.msra.mxu0 0
        %1319 = vmatprep.subr.bf16.mxu0 0
        %1320 = vmatpush1.bf16.msra.mxu0 0
        %1321 = vmatprep.subr.bf16.mxu0 0
        %1322 = vmatpush1.bf16.msra.mxu0 0
        %1323 = vmatprep.subr.bf16.mxu0 0
        %1324 = vmatpush1.bf16.msra.mxu0 0
        %1325 = vmatprep.subr.bf16.mxu0 0
        %1326 = vmatpush1.bf16.msra.mxu0 0
        %1327 = vmatprep.subr.bf16.mxu0 0
        %1328 = vmatpush1.bf16.msra.mxu0 0
        %1329 = vmatprep.subr.bf16.mxu0 0
        %1330 = vmatpush1.bf16.msra.mxu0 %v1313
        %1331 = vmatprep.subr.bf16.mxu0 0
        %1332 = vmatpush2.bf16.msra.mxu0 0
        %1333 = vmatprep.subr.bf16.mxu0 0
        %1334 = vmatpush2.bf16.msra.mxu0 0
        %1335 = vmatprep.subr.bf16.mxu0 0
        %1336 = vmatpush2.bf16.msra.mxu0 0
        %1337 = vmatprep.subr.bf16.mxu0 0
        %1338 = vmatpush2.bf16.msra.mxu0 0
        %1339 = vmatprep.subr.bf16.mxu0 0
        %1340 = vmatpush2.bf16.msra.mxu0 0
        %1341 = vmatprep.subr.bf16.mxu0 0
        %1342 = vmatpush2.bf16.msra.mxu0 0
        %1343 = vmatprep.subr.bf16.mxu0 0
        %1344 = vmatpush2.bf16.msra.mxu0 0
        %1345 = vmatprep.subr.bf16.mxu0 0
        %1346 = vmatpush2.bf16.msra.mxu0 0
        %1347 = vmatprep.mubr.bf16.mxu0 0
        %1348 = vmatmul.mubr.bf16.gmra.mxu0 %v1310
        %v1349 = vpop.f32.mrf.mxu0
        %v1350 = vadd.f32 0.0, %v1349
        %v1351 = vpop.f32.mrf.mxu0
        %v1352 = vpop.f32.mrf.mxu0
        %v1353 = vpop.f32.mrf.mxu0
        %1354 = vdwg.mxu0
        %1356 = vrot.lane.b32.xlu0 %v1003, 64
        %v1357 = vpop.permute.xlu0 %1356
        %v1359 = vsel %vm1014, %v1254, 0
        %v1362 = vsel %vm1262, %v1357, 0
        %1364 = vmatprep.subr.bf16.mxu0 0
        %1365 = vmatpush1.bf16.msra.mxu0 0
        %1366 = vmatprep.subr.bf16.mxu0 0
        %1367 = vmatpush1.bf16.msra.mxu0 0
        %1368 = vmatprep.subr.bf16.mxu0 0
        %1369 = vmatpush1.bf16.msra.mxu0 0
        %1370 = vmatprep.subr.bf16.mxu0 0
        %1371 = vmatpush1.bf16.msra.mxu0 0
        %1372 = vmatprep.subr.bf16.mxu0 0
        %1373 = vmatpush1.bf16.msra.mxu0 0
        %1374 = vmatprep.subr.bf16.mxu0 0
        %1375 = vmatpush1.bf16.msra.mxu0 0
        %1376 = vmatprep.subr.bf16.mxu0 0
        %1377 = vmatpush1.bf16.msra.mxu0 0
        %1378 = vmatprep.subr.bf16.mxu0 0
        %1379 = vmatpush1.bf16.msra.mxu0 %v1362
        %1380 = vmatprep.subr.bf16.mxu0 0
        %1381 = vmatpush2.bf16.msra.mxu0 0
        %1382 = vmatprep.subr.bf16.mxu0 0
        %1383 = vmatpush2.bf16.msra.mxu0 0
        %1384 = vmatprep.subr.bf16.mxu0 0
        %1385 = vmatpush2.bf16.msra.mxu0 0
        %1386 = vmatprep.subr.bf16.mxu0 0
        %1387 = vmatpush2.bf16.msra.mxu0 0
        %1388 = vmatprep.subr.bf16.mxu0 0
        %1389 = vmatpush2.bf16.msra.mxu0 0
        %1390 = vmatprep.subr.bf16.mxu0 0
        %1391 = vmatpush2.bf16.msra.mxu0 0
        %1392 = vmatprep.subr.bf16.mxu0 0
        %1393 = vmatpush2.bf16.msra.mxu0 0
        %1394 = vmatprep.subr.bf16.mxu0 0
        %1395 = vmatpush2.bf16.msra.mxu0 0
        %1396 = vmatprep.mubr.bf16.mxu0 0
        %1397 = vmatmul.mubr.bf16.gmra.mxu0 %v1359
        %v1398 = vpop.f32.mrf.mxu0
        %v1399 = vadd.f32 0.0, %v1398
        %v1400 = vpop.f32.mrf.mxu0
        %v1401 = vpop.f32.mrf.mxu0
        %v1402 = vpop.f32.mrf.mxu0
        %1403 = vdwg.mxu0
        %1405 = vrot.lane.b32.xlu0 %v1004, 64
        %v1406 = vpop.permute.xlu0 %1405
        %v1408 = vsel %vm1014, %v1255, 0
        %v1411 = vsel %vm1262, %v1406, 0
        %1413 = vmatprep.subr.bf16.mxu0 0
        %1414 = vmatpush1.bf16.msra.mxu0 0
        %1415 = vmatprep.subr.bf16.mxu0 0
        %1416 = vmatpush1.bf16.msra.mxu0 0
        %1417 = vmatprep.subr.bf16.mxu0 0
        %1418 = vmatpush1.bf16.msra.mxu0 0
        %1419 = vmatprep.subr.bf16.mxu0 0
        %1420 = vmatpush1.bf16.msra.mxu0 0
        %1421 = vmatprep.subr.bf16.mxu0 0
        %1422 = vmatpush1.bf16.msra.mxu0 0
        %1423 = vmatprep.subr.bf16.mxu0 0
        %1424 = vmatpush1.bf16.msra.mxu0 0
        %1425 = vmatprep.subr.bf16.mxu0 0
        %1426 = vmatpush1.bf16.msra.mxu0 0
        %1427 = vmatprep.subr.bf16.mxu0 0
        %1428 = vmatpush1.bf16.msra.mxu0 %v1411
        %1429 = vmatprep.subr.bf16.mxu0 0
        %1430 = vmatpush2.bf16.msra.mxu0 0
        %1431 = vmatprep.subr.bf16.mxu0 0
        %1432 = vmatpush2.bf16.msra.mxu0 0
        %1433 = vmatprep.subr.bf16.mxu0 0
        %1434 = vmatpush2.bf16.msra.mxu0 0
        %1435 = vmatprep.subr.bf16.mxu0 0
        %1436 = vmatpush2.bf16.msra.mxu0 0
        %1437 = vmatprep.subr.bf16.mxu0 0
        %1438 = vmatpush2.bf16.msra.mxu0 0
        %1439 = vmatprep.subr.bf16.mxu0 0
        %1440 = vmatpush2.bf16.msra.mxu0 0
        %1441 = vmatprep.subr.bf16.mxu0 0
        %1442 = vmatpush2.bf16.msra.mxu0 0
        %1443 = vmatprep.subr.bf16.mxu0 0
        %1444 = vmatpush2.bf16.msra.mxu0 0
        %1445 = vmatprep.mubr.bf16.mxu0 0
        %1446 = vmatmul.mubr.bf16.gmra.mxu0 %v1408
        %v1447 = vpop.f32.mrf.mxu0
        %v1448 = vadd.f32 0.0, %v1447
        %v1449 = vpop.f32.mrf.mxu0
        %v1450 = vpop.f32.mrf.mxu0
        %v1451 = vpop.f32.mrf.mxu0
        %1452 = vdwg.mxu0
        %v1453 = vpack.c.bf16 %v1301, %v1301
        %v1454 = vpack.c.bf16 %v1350, %v1350
        %v1455 = vpack.c.bf16 %v1399, %v1399
        %v1456 = vpack.c.bf16 %v1448, %v1448
        %v1457 = vld [vmem:[%s8] sm:$0xf]
        %v1458 = vld [vmem:[%s8 + $0x4] sm:$0xf]
        %v1459 = vld [vmem:[%s8 + $0x8] sm:$0xf]
        %v1460 = vld [vmem:[%s8 + $0xc] sm:$0xf]
        %v1462 = vsel %vm1014, %v1453, 0
        %v1465 = vsel %vm1262, %v1457, 0
        %1467 = vmatprep.subr.bf16.mxu0 0
        %1468 = vmatpush1.bf16.msra.mxu0 0
        %1469 = vmatprep.subr.bf16.mxu0 0
        %1470 = vmatpush1.bf16.msra.mxu0 0
        %1471 = vmatprep.subr.bf16.mxu0 0
        %1472 = vmatpush1.bf16.msra.mxu0 0
        %1473 = vmatprep.subr.bf16.mxu0 0
        %1474 = vmatpush1.bf16.msra.mxu0 0
        %1475 = vmatprep.subr.bf16.mxu0 0
        %1476 = vmatpush1.bf16.msra.mxu0 0
        %1477 = vmatprep.subr.bf16.mxu0 0
        %1478 = vmatpush1.bf16.msra.mxu0 0
        %1479 = vmatprep.subr.bf16.mxu0 0
        %1480 = vmatpush1.bf16.msra.mxu0 0
        %1481 = vmatprep.subr.bf16.mxu0 0
        %1482 = vmatpush1.bf16.msra.mxu0 %v1465
        %1483 = vmatprep.subr.bf16.mxu0 0
        %1484 = vmatpush2.bf16.msra.mxu0 0
        %1485 = vmatprep.subr.bf16.mxu0 0
        %1486 = vmatpush2.bf16.msra.mxu0 0
        %1487 = vmatprep.subr.bf16.mxu0 0
        %1488 = vmatpush2.bf16.msra.mxu0 0
        %1489 = vmatprep.subr.bf16.mxu0 0
        %1490 = vmatpush2.bf16.msra.mxu0 0
        %1491 = vmatprep.subr.bf16.mxu0 0
        %1492 = vmatpush2.bf16.msra.mxu0 0
        %1493 = vmatprep.subr.bf16.mxu0 0
        %1494 = vmatpush2.bf16.msra.mxu0 0
        %1495 = vmatprep.subr.bf16.mxu0 0
        %1496 = vmatpush2.bf16.msra.mxu0 0
        %1497 = vmatprep.subr.bf16.mxu0 0
        %1498 = vmatpush2.bf16.msra.mxu0 0
        %1499 = vmatprep.mubr.bf16.mxu0 0
        %1500 = vmatmul.mubr.bf16.gmra.mxu0 %v1462
        %v1501 = vpop.f32.mrf.mxu0
        %v1502 = vadd.f32 0.0, %v1501
        %v1503 = vpop.f32.mrf.mxu0
        %v1504 = vpop.f32.mrf.mxu0
        %v1505 = vpop.f32.mrf.mxu0
        %1506 = vdwg.mxu0
        %v1508 = vsel %vm1014, %v1454, 0
        %v1511 = vsel %vm1262, %v1458, 0
        %1513 = vmatprep.subr.bf16.mxu0 0
        %1514 = vmatpush1.bf16.msra.mxu0 0
        %1515 = vmatprep.subr.bf16.mxu0 0
        %1516 = vmatpush1.bf16.msra.mxu0 0
        %1517 = vmatprep.subr.bf16.mxu0 0
        %1518 = vmatpush1.bf16.msra.mxu0 0
        %1519 = vmatprep.subr.bf16.mxu0 0
        %1520 = vmatpush1.bf16.msra.mxu0 0
        %1521 = vmatprep.subr.bf16.mxu0 0
        %1522 = vmatpush1.bf16.msra.mxu0 0
        %1523 = vmatprep.subr.bf16.mxu0 0
        %1524 = vmatpush1.bf16.msra.mxu0 0
        %1525 = vmatprep.subr.bf16.mxu0 0
        %1526 = vmatpush1.bf16.msra.mxu0 0
        %1527 = vmatprep.subr.bf16.mxu0 0
        %1528 = vmatpush1.bf16.msra.mxu0 %v1511
        %1529 = vmatprep.subr.bf16.mxu0 0
        %1530 = vmatpush2.bf16.msra.mxu0 0
        %1531 = vmatprep.subr.bf16.mxu0 0
        %1532 = vmatpush2.bf16.msra.mxu0 0
        %1533 = vmatprep.subr.bf16.mxu0 0
        %1534 = vmatpush2.bf16.msra.mxu0 0
        %1535 = vmatprep.subr.bf16.mxu0 0
        %1536 = vmatpush2.bf16.msra.mxu0 0
        %1537 = vmatprep.subr.bf16.mxu0 0
        %1538 = vmatpush2.bf16.msra.mxu0 0
        %1539 = vmatprep.subr.bf16.mxu0 0
        %1540 = vmatpush2.bf16.msra.mxu0 0
        %1541 = vmatprep.subr.bf16.mxu0 0
        %1542 = vmatpush2.bf16.msra.mxu0 0
        %1543 = vmatprep.subr.bf16.mxu0 0
        %1544 = vmatpush2.bf16.msra.mxu0 0
        %1545 = vmatprep.mubr.bf16.mxu0 0
        %1546 = vmatmul.mubr.bf16.gmra.mxu0 %v1508
        %v1547 = vpop.f32.mrf.mxu0
        %v1548 = vadd.f32 0.0, %v1547
        %v1549 = vpop.f32.mrf.mxu0
        %v1550 = vpop.f32.mrf.mxu0
        %v1551 = vpop.f32.mrf.mxu0
        %1552 = vdwg.mxu0
        %v1554 = vsel %vm1014, %v1455, 0
        %v1557 = vsel %vm1262, %v1459, 0
        %1559 = vmatprep.subr.bf16.mxu0 0
        %1560 = vmatpush1.bf16.msra.mxu0 0
        %1561 = vmatprep.subr.bf16.mxu0 0
        %1562 = vmatpush1.bf16.msra.mxu0 0
        %1563 = vmatprep.subr.bf16.mxu0 0
        %1564 = vmatpush1.bf16.msra.mxu0 0
        %1565 = vmatprep.subr.bf16.mxu0 0
        %1566 = vmatpush1.bf16.msra.mxu0 0
        %1567 = vmatprep.subr.bf16.mxu0 0
        %1568 = vmatpush1.bf16.msra.mxu0 0
        %1569 = vmatprep.subr.bf16.mxu0 0
        %1570 = vmatpush1.bf16.msra.mxu0 0
        %1571 = vmatprep.subr.bf16.mxu0 0
        %1572 = vmatpush1.bf16.msra.mxu0 0
        %1573 = vmatprep.subr.bf16.mxu0 0
        %1574 = vmatpush1.bf16.msra.mxu0 %v1557
        %1575 = vmatprep.subr.bf16.mxu0 0
        %1576 = vmatpush2.bf16.msra.mxu0 0
        %1577 = vmatprep.subr.bf16.mxu0 0
        %1578 = vmatpush2.bf16.msra.mxu0 0
        %1579 = vmatprep.subr.bf16.mxu0 0
        %1580 = vmatpush2.bf16.msra.mxu0 0
        %1581 = vmatprep.subr.bf16.mxu0 0
        %1582 = vmatpush2.bf16.msra.mxu0 0
        %1583 = vmatprep.subr.bf16.mxu0 0
        %1584 = vmatpush2.bf16.msra.mxu0 0
        %1585 = vmatprep.subr.bf16.mxu0 0
        %1586 = vmatpush2.bf16.msra.mxu0 0
        %1587 = vmatprep.subr.bf16.mxu0 0
        %1588 = vmatpush2.bf16.msra.mxu0 0
        %1589 = vmatprep.subr.bf16.mxu0 0
        %1590 = vmatpush2.bf16.msra.mxu0 0
        %1591 = vmatprep.mubr.bf16.mxu0 0
        %1592 = vmatmul.mubr.bf16.gmra.mxu0 %v1554
        %v1593 = vpop.f32.mrf.mxu0
        %v1594 = vadd.f32 0.0, %v1593
        %v1595 = vpop.f32.mrf.mxu0
        %v1596 = vpop.f32.mrf.mxu0
        %v1597 = vpop.f32.mrf.mxu0
        %1598 = vdwg.mxu0
        %v1600 = vsel %vm1014, %v1456, 0
        %v1603 = vsel %vm1262, %v1460, 0
        %1605 = vmatprep.subr.bf16.mxu0 0
        %1606 = vmatpush1.bf16.msra.mxu0 0
        %1607 = vmatprep.subr.bf16.mxu0 0
        %1608 = vmatpush1.bf16.msra.mxu0 0
        %1609 = vmatprep.subr.bf16.mxu0 0
        %1610 = vmatpush1.bf16.msra.mxu0 0
        %1611 = vmatprep.subr.bf16.mxu0 0
        %1612 = vmatpush1.bf16.msra.mxu0 0
        %1613 = vmatprep.subr.bf16.mxu0 0
        %1614 = vmatpush1.bf16.msra.mxu0 0
        %1615 = vmatprep.subr.bf16.mxu0 0
        %1616 = vmatpush1.bf16.msra.mxu0 0
        %1617 = vmatprep.subr.bf16.mxu0 0
        %1618 = vmatpush1.bf16.msra.mxu0 0
        %1619 = vmatprep.subr.bf16.mxu0 0
        %1620 = vmatpush1.bf16.msra.mxu0 %v1603
        %1621 = vmatprep.subr.bf16.mxu0 0
        %1622 = vmatpush2.bf16.msra.mxu0 0
        %1623 = vmatprep.subr.bf16.mxu0 0
        %1624 = vmatpush2.bf16.msra.mxu0 0
        %1625 = vmatprep.subr.bf16.mxu0 0
        %1626 = vmatpush2.bf16.msra.mxu0 0
        %1627 = vmatprep.subr.bf16.mxu0 0
        %1628 = vmatpush2.bf16.msra.mxu0 0
        %1629 = vmatprep.subr.bf16.mxu0 0
        %1630 = vmatpush2.bf16.msra.mxu0 0
        %1631 = vmatprep.subr.bf16.mxu0 0
        %1632 = vmatpush2.bf16.msra.mxu0 0
        %1633 = vmatprep.subr.bf16.mxu0 0
        %1634 = vmatpush2.bf16.msra.mxu0 0
        %1635 = vmatprep.subr.bf16.mxu0 0
        %1636 = vmatpush2.bf16.msra.mxu0 0
        %1637 = vmatprep.mubr.bf16.mxu0 0
        %1638 = vmatmul.mubr.bf16.gmra.mxu0 %v1600
        %v1639 = vpop.f32.mrf.mxu0
        %v1640 = vadd.f32 0.0, %v1639
        %v1641 = vpop.f32.mrf.mxu0
        %v1642 = vpop.f32.mrf.mxu0
        %v1643 = vpop.f32.mrf.mxu0
        %1644 = vdwg.mxu0
        %v1645 = vsel %vm829, %v1502, 0.0
        %v1646 = vsel %vm829, %v1548, 0.0
        %v1647 = vadd.f32 %v1645, %v1646
        %v1648 = vsel %vm829, %v1594, 0.0
        %v1649 = vadd.f32 %v1647, %v1648
        %v1650 = vsel %vm829, %v1640, 0.0
        %v1651 = vadd.f32 %v1649, %v1650
        %v1652 = vld [vmem:[%s9] sm:$0x1]
        %v1654 = vlaneseq
        %v1655 = vshrl.u32 %v1654, 7
        %v1656 = vsub.s32 0, %v1655
        %v1657 = vrot.slane %v1652, %v1656
        %v1659 = vadd.f32 %v1651, %v1657
        %v1660 = vadd.f32 %v1659, %v826
        %v1661 = vld [vmem:[%s10] sm:$0x1]
        %v1662 = vld [vmem:[%s11] sm:$0x1]
        %v1663 = vsel %vm829, %v1660, 0.0
        %1664 = vadd.xlane.f32.xlu0 %v1663
        %v1665 = vpop.xlane.xlu0 %1664
        %v1666 = vmul.f32 %v1665, %v833
        %v1667 = vmul.f32 %v1660, %v1660
        %v1668 = vsel %vm829, %v1667, 0.0
        %1669 = vadd.xlane.f32.xlu0 %v1668
        %v1670 = vpop.xlane.xlu0 %1669
        %v1671 = vmul.f32 %v1670, %v833
        %v1672 = vmul.f32 %v1666, %v1666
        %v1673 = vsub.f32 %v1671, %v1672
        %v1674 = vsub.f32 %v1660, %v1666
        %v1675 = vadd.f32 %v1673, 1e-05
        %v1676 = vrsqrt.pop %v1675
        %v1677 = vmul.f32 %v1674, %v1676
        %v1679 = vlaneseq
        %v1680 = vshrl.u32 %v1679, 7
        %v1681 = vsub.s32 0, %v1680
        %v1682 = vrot.slane %v1661, %v1681
        %v1684 = vmul.f32 %v1677, %v1682
        %v1686 = vlaneseq
        %v1687 = vshrl.u32 %v1686, 7
        %v1688 = vsub.s32 0, %v1687
        %v1689 = vrot.slane %v1662, %v1688
        %v1691 = vadd.f32 %v1684, %v1689
        %v1692 = vpack.c.bf16 %v1691, %v1691
        %v1693 = vld [vmem:[%s12] sm:$0xf]
        %v1694 = vld [vmem:[%s12 + $0x4] sm:$0xf]
        %v1695 = vld [vmem:[%s12 + $0x8] sm:$0xf]
        %v1696 = vld [vmem:[%s12 + $0xc] sm:$0xf]
        %v1697 = vld [vmem:[%s13] sm:$0x1]
        %v1699 = vlaneseq
        %v1700 = vshrl.u32 %v1699, 7
        %v1701 = vsub.s32 0, %v1700
        %v1702 = vrot.slane %v1697, %v1701
        %v1708 = vunpack.c.l.b16 %v1693
        %v1709 = vunpack.c.l.b16 %v1694
        %v1710 = vunpack.c.l.b16 %v1695
        %v1711 = vunpack.c.l.b16 %v1696
        %v1712 = vpack.c.b16 %v1709, %v1708
        %v1713 = vpack.c.b16 %v1711, %v1710
        %v1717 = vsel %vm829, %v1692, 0
        %1719 = vmatprep.subr.bf16.mxu0 0
        %1720 = vmatpush1.bf16.msra.mxu0 0
        %1721 = vmatprep.subr.bf16.mxu0 0
        %1722 = vmatpush1.bf16.msra.mxu0 0
        %1723 = vmatprep.subr.bf16.mxu0 0
        %1724 = vmatpush1.bf16.msra.mxu0 0
        %1725 = vmatprep.subr.bf16.mxu0 0
        %1726 = vmatpush1.bf16.msra.mxu0 0
        %1727 = vmatprep.subr.bf16.mxu0 0
        %1728 = vmatpush1.bf16.msra.mxu0 0
        %1729 = vmatprep.subr.bf16.mxu0 0
        %1730 = vmatpush1.bf16.msra.mxu0 0
        %1731 = vmatprep.subr.bf16.mxu0 0
        %1732 = vmatpush1.bf16.msra.mxu0 %v1713
        %1733 = vmatprep.subr.bf16.mxu0 0
        %1734 = vmatpush1.bf16.msra.mxu0 %v1712
        %1735 = vmatprep.subr.bf16.mxu0 0
        %1736 = vmatpush2.bf16.msra.mxu0 0
        %1737 = vmatprep.subr.bf16.mxu0 0
        %1738 = vmatpush2.bf16.msra.mxu0 0
        %1739 = vmatprep.subr.bf16.mxu0 0
        %1740 = vmatpush2.bf16.msra.mxu0 0
        %1741 = vmatprep.subr.bf16.mxu0 0
        %1742 = vmatpush2.bf16.msra.mxu0 0
        %1743 = vmatprep.subr.bf16.mxu0 0
        %1744 = vmatpush2.bf16.msra.mxu0 0
        %1745 = vmatprep.subr.bf16.mxu0 0
        %1746 = vmatpush2.bf16.msra.mxu0 0
        %1747 = vmatprep.subr.bf16.mxu0 0
        %1748 = vmatpush2.bf16.msra.mxu0 0
        %1749 = vmatprep.subr.bf16.mxu0 0
        %1750 = vmatpush2.bf16.msra.mxu0 0
        %1751 = vmatprep.mubr.bf16.mxu0 0
        %1752 = vmatmul.mubr.bf16.gmra.mxu0 %v1717
        %v1753 = vpop.f32.mrf.mxu0
        %v1754 = vadd.f32 %v1702, %v1753
        %v1755 = vpop.f32.mrf.mxu0
        %v1756 = vpop.f32.mrf.mxu0
        %v1757 = vpop.f32.mrf.mxu0
        %1758 = vdwg.mxu0
        %v1759 = vmul.f32 %v1754, %v1754
        %v1760 = vmul.f32 %v1754, %v1759
        %v1761 = vmul.f32 %v1760, 0.044715
        %v1762 = vadd.f32 %v1754, %v1761
        %v1763 = vmul.f32 %v1762, 0.7978846
        %v1764 = vtanh.pop %v1763
        %v1765 = vadd.f32 %v1764, 1.0
        %v1766 = vmul.f32 %v1765, 0.5
        %v1767 = vmul.f32 %v1754, %v1766
        %v1768 = vpack.c.bf16 %v1767, %v1767
        %v1769 = vld [vmem:[%s14] sm:$0xf]
        %v1770 = vld [vmem:[%s14 + $0x4] sm:$0xf]
        %v1771 = vld [vmem:[%s14 + $0x8] sm:$0xf]
        %v1772 = vld [vmem:[%s14 + $0xc] sm:$0xf]
        %v1773 = vld [vmem:[%s14 + $0x10] sm:$0xf]
        %v1774 = vld [vmem:[%s14 + $0x14] sm:$0xf]
        %v1775 = vld [vmem:[%s14 + $0x18] sm:$0xf]
        %v1776 = vld [vmem:[%s14 + $0x1c] sm:$0xf]
        %v1777 = vld [vmem:[%s14 + $0x20] sm:$0xf]
        %v1778 = vld [vmem:[%s14 + $0x24] sm:$0xf]
        %v1779 = vld [vmem:[%s14 + $0x28] sm:$0xf]
        %v1780 = vld [vmem:[%s14 + $0x2c] sm:$0xf]
        %v1781 = vld [vmem:[%s14 + $0x30] sm:$0xf]
        %v1782 = vld [vmem:[%s14 + $0x34] sm:$0xf]
        %v1783 = vld [vmem:[%s14 + $0x38] sm:$0xf]
        %v1784 = vld [vmem:[%s14 + $0x3c] sm:$0xf]
        %v1785 = vld [vmem:[%s15] sm:$0x1]
        %v1787 = vlaneseq
        %v1788 = vshrl.u32 %v1787, 7
        %v1789 = vsub.s32 0, %v1788
        %v1790 = vrot.slane %v1785, %v1789
        %v1808 = vunpack.c.l.b16 %v1769
        %v1809 = vunpack.c.l.b16 %v1770
        %v1810 = vunpack.c.l.b16 %v1771
        %v1811 = vunpack.c.l.b16 %v1772
        %v1812 = vunpack.c.l.b16 %v1773
        %v1813 = vunpack.c.l.b16 %v1774
        %v1814 = vunpack.c.l.b16 %v1775
        %v1815 = vunpack.c.l.b16 %v1776
        %v1816 = vunpack.c.l.b16 %v1777
        %v1817 = vunpack.c.l.b16 %v1778
        %v1818 = vunpack.c.l.b16 %v1779
        %v1819 = vunpack.c.l.b16 %v1780
        %v1820 = vunpack.c.l.b16 %v1781
        %v1821 = vunpack.c.l.b16 %v1782
        %v1822 = vunpack.c.l.b16 %v1783
        %v1823 = vunpack.c.l.b16 %v1784
        %v1824 = vpack.c.b16 %v1809, %v1808
        %v1825 = vpack.c.b16 %v1811, %v1810
        %v1826 = vpack.c.b16 %v1813, %v1812
        %v1827 = vpack.c.b16 %v1815, %v1814
        %v1828 = vpack.c.b16 %v1817, %v1816
        %v1829 = vpack.c.b16 %v1819, %v1818
        %v1830 = vpack.c.b16 %v1821, %v1820
        %v1831 = vpack.c.b16 %v1823, %v1822
        %1840 = vmatprep.subr.bf16.mxu0 0
        %1841 = vmatpush1.bf16.msra.mxu0 %v1831
        %1842 = vmatprep.subr.bf16.mxu0 0
        %1843 = vmatpush1.bf16.msra.mxu0 %v1830
        %1844 = vmatprep.subr.bf16.mxu0 0
        %1845 = vmatpush1.bf16.msra.mxu0 %v1829
        %1846 = vmatprep.subr.bf16.mxu0 0
        %1847 = vmatpush1.bf16.msra.mxu0 %v1828
        %1848 = vmatprep.subr.bf16.mxu0 0
        %1849 = vmatpush1.bf16.msra.mxu0 %v1827
        %1850 = vmatprep.subr.bf16.mxu0 0
        %1851 = vmatpush1.bf16.msra.mxu0 %v1826
        %1852 = vmatprep.subr.bf16.mxu0 0
        %1853 = vmatpush1.bf16.msra.mxu0 %v1825
        %1854 = vmatprep.subr.bf16.mxu0 0
        %1855 = vmatpush1.bf16.msra.mxu0 %v1824
        %1856 = vmatprep.subr.bf16.mxu0 0
        %1857 = vmatpush2.bf16.msra.mxu0 0
        %1858 = vmatprep.subr.bf16.mxu0 0
        %1859 = vmatpush2.bf16.msra.mxu0 0
        %1860 = vmatprep.subr.bf16.mxu0 0
        %1861 = vmatpush2.bf16.msra.mxu0 0
        %1862 = vmatprep.subr.bf16.mxu0 0
        %1863 = vmatpush2.bf16.msra.mxu0 0
        %1864 = vmatprep.subr.bf16.mxu0 0
        %1865 = vmatpush2.bf16.msra.mxu0 0
        %1866 = vmatprep.subr.bf16.mxu0 0
        %1867 = vmatpush2.bf16.msra.mxu0 0
        %1868 = vmatprep.subr.bf16.mxu0 0
        %1869 = vmatpush2.bf16.msra.mxu0 0
        %1870 = vmatprep.subr.bf16.mxu0 0
        %1871 = vmatpush2.bf16.msra.mxu0 0
        %1872 = vmatprep.mubr.bf16.mxu0 0
        %1873 = vmatmul.mubr.bf16.gmra.mxu0 %v1768
        %v1874 = vpop.f32.mrf.mxu0
        %v1875 = vadd.f32 %v1790, %v1874
        %v1876 = vpop.f32.mrf.mxu0
        %v1877 = vpop.f32.mrf.mxu0
        %v1878 = vpop.f32.mrf.mxu0
        %1879 = vdwg.mxu0
        %v1880 = vadd.f32 %v1875, %v1660
        %v1881 = vpack.c.bf16 %v1880, %v1880
        %vm1882 = vcmask 257024
        %1883 = vst.msk [vmem:[%s817] sm:$0xf] %vm1882, %v1881
        %s1884 = scalar_lea.vmem %s4, 1
        %v1885 = vld [vmem:[%s1884] sm:$0x1]
        %s1886 = scalar_lea.vmem %s5, 1
        %v1887 = vld [vmem:[%s1886] sm:$0x1]
        %v1888 = vsel %vm829, %v1880, 0.0
        %1889 = vadd.xlane.f32.xlu0 %v1888
        %v1890 = vpop.xlane.xlu0 %1889
        %v1891 = vmul.f32 %v1890, %v833
        %v1892 = vmul.f32 %v1880, %v1880
        %v1893 = vsel %vm829, %v1892, 0.0
        %1894 = vadd.xlane.f32.xlu0 %v1893
        %v1895 = vpop.xlane.xlu0 %1894
        %v1896 = vmul.f32 %v1895, %v833
        %v1897 = vmul.f32 %v1891, %v1891
        %v1898 = vsub.f32 %v1896, %v1897
        %v1899 = vsub.f32 %v1880, %v1891
        %v1900 = vadd.f32 %v1898, 1e-05
        %v1901 = vrsqrt.pop %v1900
        %v1902 = vmul.f32 %v1899, %v1901
        %v1904 = vlaneseq
        %v1905 = vshrl.u32 %v1904, 7
        %v1906 = vsub.s32 0, %v1905
        %v1907 = vrot.slane %v1885, %v1906
        %v1909 = vmul.f32 %v1902, %v1907
        %v1911 = vlaneseq
        %v1912 = vshrl.u32 %v1911, 7
        %v1913 = vsub.s32 0, %v1912
        %v1914 = vrot.slane %v1887, %v1913
        %v1916 = vadd.f32 %v1909, %v1914
        %v1917 = vpack.c.bf16 %v1916, %v1916
        %s1918 = scalar_lea.vmem %s6, 32
        %v1919 = vld [vmem:[%s1918] sm:$0xff]
        %v1920 = vld [vmem:[%s1918 + $0x8] sm:$0xff]
        %v1921 = vld [vmem:[%s1918 + $0x10] sm:$0xff]
        %v1922 = vld [vmem:[%s1918 + $0x18] sm:$0xff]
        %s1923 = scalar_lea.vmem %s7, 2
        %v1924 = vld [vmem:[%s1923] sm:$0x3]
        %v1926 = vlaneseq
        %v1927 = vshrl.u32 %v1926, 7
        %v1928 = vsub.s32 0, %v1927
        %v1929 = vrot.slane %v1924, %v1928
        %v1930 = vlaneseq
        %v1931 = vshrl.u32 %v1930, 7
        %v1932 = vsub.s32 1, %v1931
        %v1933 = vrot.slane %v1924, %v1932
        %v1940 = vunpack.c.l.b16 %v1919
        %v1941 = vunpack.c.h.b16 %v1919
        %v1942 = vunpack.c.l.b16 %v1920
        %v1943 = vunpack.c.h.b16 %v1920
        %v1944 = vunpack.c.l.b16 %v1921
        %v1945 = vunpack.c.h.b16 %v1921
        %v1946 = vunpack.c.l.b16 %v1922
        %v1947 = vunpack.c.h.b16 %v1922
        %v1948 = vpack.c.b16 %v1942, %v1940
        %v1949 = vpack.c.b16 %v1943, %v1941
        %v1950 = vpack.c.b16 %v1946, %v1944
        %v1951 = vpack.c.b16 %v1947, %v1945
        %v1957 = vsel %vm829, %v1917, 0
        %1959 = vmatprep.subr.bf16.mxu0 0
        %1960 = vmatpush1.bf16.msra.mxu0 0
        %1961 = vmatprep.subr.bf16.mxu0 0
        %1962 = vmatpush1.bf16.msra.mxu0 0
        %1963 = vmatprep.subr.bf16.mxu0 0
        %1964 = vmatpush1.bf16.msra.mxu0 0
        %1965 = vmatprep.subr.bf16.mxu0 0
        %1966 = vmatpush1.bf16.msra.mxu0 0
        %1967 = vmatprep.subr.bf16.mxu0 0
        %1968 = vmatpush1.bf16.msra.mxu0 0
        %1969 = vmatprep.subr.bf16.mxu0 0
        %1970 = vmatpush1.bf16.msra.mxu0 0
        %1971 = vmatprep.subr.bf16.mxu0 %v1951
        %1972 = vmatpush1.bf16.msra.mxu0 %v1950
        %1973 = vmatprep.subr.bf16.mxu0 %v1949
        %1974 = vmatpush1.bf16.msra.mxu0 %v1948
        %1975 = vmatprep.subr.bf16.mxu0 0
        %1976 = vmatpush2.bf16.msra.mxu0 0
        %1977 = vmatprep.subr.bf16.mxu0 0
        %1978 = vmatpush2.bf16.msra.mxu0 0
        %1979 = vmatprep.subr.bf16.mxu0 0
        %1980 = vmatpush2.bf16.msra.mxu0 0
        %1981 = vmatprep.subr.bf16.mxu0 0
        %1982 = vmatpush2.bf16.msra.mxu0 0
        %1983 = vmatprep.subr.bf16.mxu0 0
        %1984 = vmatpush2.bf16.msra.mxu0 0
        %1985 = vmatprep.subr.bf16.mxu0 0
        %1986 = vmatpush2.bf16.msra.mxu0 0
        %1987 = vmatprep.subr.bf16.mxu0 0
        %1988 = vmatpush2.bf16.msra.mxu0 0
        %1989 = vmatprep.subr.bf16.mxu0 0
        %1990 = vmatpush2.bf16.msra.mxu0 0
        %1991 = vmatprep.mubr.bf16.mxu0 0
        %1992 = vmatmul.mubr.bf16.gmra.mxu0 %v1957
        %v1993 = vpop.f32.mrf.mxu0
        %v1994 = vadd.f32 %v1929, %v1993
        %v1995 = vpop.f32.mrf.mxu0
        %v1996 = vadd.f32 %v1933, %v1995
        %v1997 = vpop.f32.mrf.mxu0
        %v1998 = vpop.f32.mrf.mxu0
        %1999 = vdwg.mxu0
        %v2000 = vmul.f32 %v1994, %v823
        %v2001 = vmul.f32 %v1994, %v944
        %2003 = vrot.lane.b32.xlu0 %v2001, 32
        %v2004 = vpop.permute.xlu0 %2003
        %v2006 = vadd.f32 %v2000, %v2004
        %v2007 = vmul.f32 %v1994, %v954
        %v2008 = vmul.f32 %v1996, %v824
        %2010 = vrot.lane.b32.xlu0 %v2008, 32
        %v2011 = vpop.permute.xlu0 %2010
        %v2013 = vadd.f32 %v2007, %v2011
        %2015 = vrot.lane.b32.xlu0 %v2006, 120
        %v2016 = vpop.permute.xlu0 %2015
        %2018 = vrot.lane.b32.xlu0 %v2006, 112
        %v2019 = vpop.permute.xlu0 %2018
        %2021 = vrot.lane.b32.xlu0 %v2006, 104
        %v2022 = vpop.permute.xlu0 %2021
        %v2024 = vpack.c.bf16 %v2006, %v2006
        %v2025 = vpack.c.bf16 %v2016, %v2016
        %v2026 = vpack.c.bf16 %v2019, %v2019
        %v2027 = vpack.c.bf16 %v2022, %v2022
        %2029 = vrot.lane.b32.xlu0 %v2013, 120
        %v2030 = vpop.permute.xlu0 %2029
        %2032 = vrot.lane.b32.xlu0 %v2013, 112
        %v2033 = vpop.permute.xlu0 %2032
        %2035 = vrot.lane.b32.xlu0 %v2013, 104
        %v2036 = vpop.permute.xlu0 %2035
        %v2038 = vpack.c.bf16 %v2013, %v2013
        %v2039 = vpack.c.bf16 %v2030, %v2030
        %v2040 = vpack.c.bf16 %v2033, %v2033
        %v2041 = vpack.c.bf16 %v2036, %v2036
        %2043 = vrot.lane.b32.xlu0 %v1994, 120
        %v2044 = vpop.permute.xlu0 %2043
        %2046 = vrot.lane.b32.xlu0 %v1994, 112
        %v2047 = vpop.permute.xlu0 %2046
        %2049 = vrot.lane.b32.xlu0 %v1994, 104
        %v2050 = vpop.permute.xlu0 %2049
        %v2052 = vpack.c.bf16 %v1994, %v1994
        %v2053 = vpack.c.bf16 %v2044, %v2044
        %v2054 = vpack.c.bf16 %v2047, %v2047
        %v2055 = vpack.c.bf16 %v2050, %v2050
        %2057 = vrot.lane.b32.xlu0 %v2038, 96
        %v2058 = vpop.permute.xlu0 %2057
        %v2060 = vsel %vm1014, %v2024, 0
        %v2063 = vsel %vm1014, %v2058, 0
        %2065 = vmatprep.subr.bf16.mxu0 0
        %2066 = vmatpush1.bf16.xpose.msra.mxu0 0
        %2067 = vmatprep.subr.bf16.mxu0 0
        %2068 = vmatpush1.bf16.xpose.msra.mxu0 0
        %2069 = vmatprep.subr.bf16.mxu0 0
        %2070 = vmatpush1.bf16.xpose.msra.mxu0 0
        %2071 = vmatprep.subr.bf16.mxu0 0
        %2072 = vmatpush1.bf16.xpose.msra.mxu0 0
        %2073 = vmatprep.subr.bf16.mxu0 0
        %2074 = vmatpush1.bf16.xpose.msra.mxu0 0
        %2075 = vmatprep.subr.bf16.mxu0 0
        %2076 = vmatpush1.bf16.xpose.msra.mxu0 0
        %2077 = vmatprep.subr.bf16.mxu0 0
        %2078 = vmatpush1.bf16.xpose.msra.mxu0 0
        %2079 = vmatprep.subr.bf16.mxu0 0
        %2080 = vmatpush1.bf16.xpose.msra.mxu0 %v2063
        %2081 = vmatprep.subr.bf16.mxu0 0
        %2082 = vmatpush2.bf16.xpose.msra.mxu0 0
        %2083 = vmatprep.subr.bf16.mxu0 0
        %2084 = vmatpush2.bf16.xpose.msra.mxu0 0
        %2085 = vmatprep.subr.bf16.mxu0 0
        %2086 = vmatpush2.bf16.xpose.msra.mxu0 0
        %2087 = vmatprep.subr.bf16.mxu0 0
        %2088 = vmatpush2.bf16.xpose.msra.mxu0 0
        %2089 = vmatprep.subr.bf16.mxu0 0
        %2090 = vmatpush2.bf16.xpose.msra.mxu0 0
        %2091 = vmatprep.subr.bf16.mxu0 0
        %2092 = vmatpush2.bf16.xpose.msra.mxu0 0
        %2093 = vmatprep.subr.bf16.mxu0 0
        %2094 = vmatpush2.bf16.xpose.msra.mxu0 0
        %2095 = vmatprep.subr.bf16.mxu0 0
        %2096 = vmatpush2.bf16.xpose.msra.mxu0 0
        %2097 = vmatprep.mubr.bf16.mxu0 0
        %2098 = vmatmul.mubr.bf16.gmra.mxu0 %v2060
        %v2099 = vpop.f32.mrf.mxu0
        %v2100 = vadd.f32 %v1009, %v2099
        %v2101 = vpop.f32.mrf.mxu0
        %v2102 = vpop.f32.mrf.mxu0
        %v2103 = vpop.f32.mrf.mxu0
        %2104 = vdwg.mxu0
        %2106 = vrot.lane.b32.xlu0 %v2039, 96
        %v2107 = vpop.permute.xlu0 %2106
        %v2109 = vsel %vm1014, %v2025, 0
        %v2112 = vsel %vm1014, %v2107, 0
        %2114 = vmatprep.subr.bf16.mxu0 0
        %2115 = vmatpush1.bf16.xpose.msra.mxu0 0
        %2116 = vmatprep.subr.bf16.mxu0 0
        %2117 = vmatpush1.bf16.xpose.msra.mxu0 0
        %2118 = vmatprep.subr.bf16.mxu0 0
        %2119 = vmatpush1.bf16.xpose.msra.mxu0 0
        %2120 = vmatprep.subr.bf16.mxu0 0
        %2121 = vmatpush1.bf16.xpose.msra.mxu0 0
        %2122 = vmatprep.subr.bf16.mxu0 0
        %2123 = vmatpush1.bf16.xpose.msra.mxu0 0
        %2124 = vmatprep.subr.bf16.mxu0 0
        %2125 = vmatpush1.bf16.xpose.msra.mxu0 0
        %2126 = vmatprep.subr.bf16.mxu0 0
        %2127 = vmatpush1.bf16.xpose.msra.mxu0 0
        %2128 = vmatprep.subr.bf16.mxu0 0
        %2129 = vmatpush1.bf16.xpose.msra.mxu0 %v2112
        %2130 = vmatprep.subr.bf16.mxu0 0
        %2131 = vmatpush2.bf16.xpose.msra.mxu0 0
        %2132 = vmatprep.subr.bf16.mxu0 0
        %2133 = vmatpush2.bf16.xpose.msra.mxu0 0
        %2134 = vmatprep.subr.bf16.mxu0 0
        %2135 = vmatpush2.bf16.xpose.msra.mxu0 0
        %2136 = vmatprep.subr.bf16.mxu0 0
        %2137 = vmatpush2.bf16.xpose.msra.mxu0 0
        %2138 = vmatprep.subr.bf16.mxu0 0
        %2139 = vmatpush2.bf16.xpose.msra.mxu0 0
        %2140 = vmatprep.subr.bf16.mxu0 0
        %2141 = vmatpush2.bf16.xpose.msra.mxu0 0
        %2142 = vmatprep.subr.bf16.mxu0 0
        %2143 = vmatpush2.bf16.xpose.msra.mxu0 0
        %2144 = vmatprep.subr.bf16.mxu0 0
        %2145 = vmatpush2.bf16.xpose.msra.mxu0 0
        %2146 = vmatprep.mubr.bf16.mxu0 0
        %2147 = vmatmul.mubr.bf16.gmra.mxu0 %v2109
        %v2148 = vpop.f32.mrf.mxu0
        %v2149 = vadd.f32 %v1009, %v2148
        %v2150 = vpop.f32.mrf.mxu0
        %v2151 = vpop.f32.mrf.mxu0
        %v2152 = vpop.f32.mrf.mxu0
        %2153 = vdwg.mxu0
        %2155 = vrot.lane.b32.xlu0 %v2040, 96
        %v2156 = vpop.permute.xlu0 %2155
        %v2158 = vsel %vm1014, %v2026, 0
        %v2161 = vsel %vm1014, %v2156, 0
        %2163 = vmatprep.subr.bf16.mxu0 0
        %2164 = vmatpush1.bf16.xpose.msra.mxu0 0
        %2165 = vmatprep.subr.bf16.mxu0 0
        %2166 = vmatpush1.bf16.xpose.msra.mxu0 0
        %2167 = vmatprep.subr.bf16.mxu0 0
        %2168 = vmatpush1.bf16.xpose.msra.mxu0 0
        %2169 = vmatprep.subr.bf16.mxu0 0
        %2170 = vmatpush1.bf16.xpose.msra.mxu0 0
        %2171 = vmatprep.subr.bf16.mxu0 0
        %2172 = vmatpush1.bf16.xpose.msra.mxu0 0
        %2173 = vmatprep.subr.bf16.mxu0 0
        %2174 = vmatpush1.bf16.xpose.msra.mxu0 0
        %2175 = vmatprep.subr.bf16.mxu0 0
        %2176 = vmatpush1.bf16.xpose.msra.mxu0 0
        %2177 = vmatprep.subr.bf16.mxu0 0
        %2178 = vmatpush1.bf16.xpose.msra.mxu0 %v2161
        %2179 = vmatprep.subr.bf16.mxu0 0
        %2180 = vmatpush2.bf16.xpose.msra.mxu0 0
        %2181 = vmatprep.subr.bf16.mxu0 0
        %2182 = vmatpush2.bf16.xpose.msra.mxu0 0
        %2183 = vmatprep.subr.bf16.mxu0 0
        %2184 = vmatpush2.bf16.xpose.msra.mxu0 0
        %2185 = vmatprep.subr.bf16.mxu0 0
        %2186 = vmatpush2.bf16.xpose.msra.mxu0 0
        %2187 = vmatprep.subr.bf16.mxu0 0
        %2188 = vmatpush2.bf16.xpose.msra.mxu0 0
        %2189 = vmatprep.subr.bf16.mxu0 0
        %2190 = vmatpush2.bf16.xpose.msra.mxu0 0
        %2191 = vmatprep.subr.bf16.mxu0 0
        %2192 = vmatpush2.bf16.xpose.msra.mxu0 0
        %2193 = vmatprep.subr.bf16.mxu0 0
        %2194 = vmatpush2.bf16.xpose.msra.mxu0 0
        %2195 = vmatprep.mubr.bf16.mxu0 0
        %2196 = vmatmul.mubr.bf16.gmra.mxu0 %v2158
        %v2197 = vpop.f32.mrf.mxu0
        %v2198 = vadd.f32 %v1009, %v2197
        %v2199 = vpop.f32.mrf.mxu0
        %v2200 = vpop.f32.mrf.mxu0
        %v2201 = vpop.f32.mrf.mxu0
        %2202 = vdwg.mxu0
        %2204 = vrot.lane.b32.xlu0 %v2041, 96
        %v2205 = vpop.permute.xlu0 %2204
        %v2207 = vsel %vm1014, %v2027, 0
        %v2210 = vsel %vm1014, %v2205, 0
        %2212 = vmatprep.subr.bf16.mxu0 0
        %2213 = vmatpush1.bf16.xpose.msra.mxu0 0
        %2214 = vmatprep.subr.bf16.mxu0 0
        %2215 = vmatpush1.bf16.xpose.msra.mxu0 0
        %2216 = vmatprep.subr.bf16.mxu0 0
        %2217 = vmatpush1.bf16.xpose.msra.mxu0 0
        %2218 = vmatprep.subr.bf16.mxu0 0
        %2219 = vmatpush1.bf16.xpose.msra.mxu0 0
        %2220 = vmatprep.subr.bf16.mxu0 0
        %2221 = vmatpush1.bf16.xpose.msra.mxu0 0
        %2222 = vmatprep.subr.bf16.mxu0 0
        %2223 = vmatpush1.bf16.xpose.msra.mxu0 0
        %2224 = vmatprep.subr.bf16.mxu0 0
        %2225 = vmatpush1.bf16.xpose.msra.mxu0 0
        %2226 = vmatprep.subr.bf16.mxu0 0
        %2227 = vmatpush1.bf16.xpose.msra.mxu0 %v2210
        %2228 = vmatprep.subr.bf16.mxu0 0
        %2229 = vmatpush2.bf16.xpose.msra.mxu0 0
        %2230 = vmatprep.subr.bf16.mxu0 0
        %2231 = vmatpush2.bf16.xpose.msra.mxu0 0
        %2232 = vmatprep.subr.bf16.mxu0 0
        %2233 = vmatpush2.bf16.xpose.msra.mxu0 0
        %2234 = vmatprep.subr.bf16.mxu0 0
        %2235 = vmatpush2.bf16.xpose.msra.mxu0 0
        %2236 = vmatprep.subr.bf16.mxu0 0
        %2237 = vmatpush2.bf16.xpose.msra.mxu0 0
        %2238 = vmatprep.subr.bf16.mxu0 0
        %2239 = vmatpush2.bf16.xpose.msra.mxu0 0
        %2240 = vmatprep.subr.bf16.mxu0 0
        %2241 = vmatpush2.bf16.xpose.msra.mxu0 0
        %2242 = vmatprep.subr.bf16.mxu0 0
        %2243 = vmatpush2.bf16.xpose.msra.mxu0 0
        %2244 = vmatprep.mubr.bf16.mxu0 0
        %2245 = vmatmul.mubr.bf16.gmra.mxu0 %v2207
        %v2246 = vpop.f32.mrf.mxu0
        %v2247 = vadd.f32 %v1009, %v2246
        %v2248 = vpop.f32.mrf.mxu0
        %v2249 = vpop.f32.mrf.mxu0
        %v2250 = vpop.f32.mrf.mxu0
        %2251 = vdwg.mxu0
        %v2252 = vsel %vm1014, %v2100, -inf
        %2253 = vmax.xlane.f32.xlu0 %v2252
        %v2254 = vpop.xlane.xlu0 %2253
        %v2255 = vsel %vm1014, %v2149, -inf
        %2256 = vmax.xlane.f32.xlu0 %v2255
        %v2257 = vpop.xlane.xlu0 %2256
        %v2258 = vsel %vm1014, %v2198, -inf
        %2259 = vmax.xlane.f32.xlu0 %v2258
        %v2260 = vpop.xlane.xlu0 %2259
        %v2261 = vsel %vm1014, %v2247, -inf
        %2262 = vmax.xlane.f32.xlu0 %v2261
        %v2263 = vpop.xlane.xlu0 %2262
        %v2264 = vsub.f32 %v2100, %v2254
        %v2265 = vsub.f32 %v2149, %v2257
        %v2266 = vsub.f32 %v2198, %v2260
        %v2267 = vsub.f32 %v2247, %v2263
        %v2268 = vmul.f32 %v2264, 1.442695
        %v2269 = vpow.pop %v2268
        %v2270 = vmul.f32 %v2265, 1.442695
        %v2271 = vpow.pop %v2270
        %v2272 = vmul.f32 %v2266, 1.442695
        %v2273 = vpow.pop %v2272
        %v2274 = vmul.f32 %v2267, 1.442695
        %v2275 = vpow.pop %v2274
        %v2276 = vsel %vm1014, %v2269, 0.0
        %2277 = vadd.xlane.f32.xlu0 %v2276
        %v2278 = vpop.xlane.xlu0 %2277
        %v2279 = vsel %vm1014, %v2271, 0.0
        %2280 = vadd.xlane.f32.xlu0 %v2279
        %v2281 = vpop.xlane.xlu0 %2280
        %v2282 = vsel %vm1014, %v2273, 0.0
        %2283 = vadd.xlane.f32.xlu0 %v2282
        %v2284 = vpop.xlane.xlu0 %2283
        %v2285 = vsel %vm1014, %v2275, 0.0
        %2286 = vadd.xlane.f32.xlu0 %v2285
        %v2287 = vpop.xlane.xlu0 %2286
        %v2288 = vrcp.pop %v2278
        %v2289 = vrcp.pop %v2281
        %v2290 = vrcp.pop %v2284
        %v2291 = vrcp.pop %v2287
        %v2292 = vmul.f32 %v2269, %v2288
        %v2293 = vmul.f32 %v2271, %v2289
        %v2294 = vmul.f32 %v2273, %v2290
        %v2295 = vmul.f32 %v2275, %v2291
        %v2296 = vpack.c.bf16 %v2292, %v2292
        %v2297 = vpack.c.bf16 %v2293, %v2293
        %v2298 = vpack.c.bf16 %v2294, %v2294
        %v2299 = vpack.c.bf16 %v2295, %v2295
        %2301 = vrot.lane.b32.xlu0 %v2052, 64
        %v2302 = vpop.permute.xlu0 %2301
        %v2304 = vsel %vm1014, %v2296, 0
        %v2307 = vsel %vm1262, %v2302, 0
        %2309 = vmatprep.subr.bf16.mxu0 0
        %2310 = vmatpush1.bf16.msra.mxu0 0
        %2311 = vmatprep.subr.bf16.mxu0 0
        %2312 = vmatpush1.bf16.msra.mxu0 0
        %2313 = vmatprep.subr.bf16.mxu0 0
        %2314 = vmatpush1.bf16.msra.mxu0 0
        %2315 = vmatprep.subr.bf16.mxu0 0
        %2316 = vmatpush1.bf16.msra.mxu0 0
        %2317 = vmatprep.subr.bf16.mxu0 0
        %2318 = vmatpush1.bf16.msra.mxu0 0
        %2319 = vmatprep.subr.bf16.mxu0 0
        %2320 = vmatpush1.bf16.msra.mxu0 0
        %2321 = vmatprep.subr.bf16.mxu0 0
        %2322 = vmatpush1.bf16.msra.mxu0 0
        %2323 = vmatprep.subr.bf16.mxu0 0
        %2324 = vmatpush1.bf16.msra.mxu0 %v2307
        %2325 = vmatprep.subr.bf16.mxu0 0
        %2326 = vmatpush2.bf16.msra.mxu0 0
        %2327 = vmatprep.subr.bf16.mxu0 0
        %2328 = vmatpush2.bf16.msra.mxu0 0
        %2329 = vmatprep.subr.bf16.mxu0 0
        %2330 = vmatpush2.bf16.msra.mxu0 0
        %2331 = vmatprep.subr.bf16.mxu0 0
        %2332 = vmatpush2.bf16.msra.mxu0 0
        %2333 = vmatprep.subr.bf16.mxu0 0
        %2334 = vmatpush2.bf16.msra.mxu0 0
        %2335 = vmatprep.subr.bf16.mxu0 0
        %2336 = vmatpush2.bf16.msra.mxu0 0
        %2337 = vmatprep.subr.bf16.mxu0 0
        %2338 = vmatpush2.bf16.msra.mxu0 0
        %2339 = vmatprep.subr.bf16.mxu0 0
        %2340 = vmatpush2.bf16.msra.mxu0 0
        %2341 = vmatprep.mubr.bf16.mxu0 0
        %2342 = vmatmul.mubr.bf16.gmra.mxu0 %v2304
        %v2343 = vpop.f32.mrf.mxu0
        %v2344 = vadd.f32 0.0, %v2343
        %v2345 = vpop.f32.mrf.mxu0
        %v2346 = vpop.f32.mrf.mxu0
        %v2347 = vpop.f32.mrf.mxu0
        %2348 = vdwg.mxu0
        %2350 = vrot.lane.b32.xlu0 %v2053, 64
        %v2351 = vpop.permute.xlu0 %2350
        %v2353 = vsel %vm1014, %v2297, 0
        %v2356 = vsel %vm1262, %v2351, 0
        %2358 = vmatprep.subr.bf16.mxu0 0
        %2359 = vmatpush1.bf16.msra.mxu0 0
        %2360 = vmatprep.subr.bf16.mxu0 0
        %2361 = vmatpush1.bf16.msra.mxu0 0
        %2362 = vmatprep.subr.bf16.mxu0 0
        %2363 = vmatpush1.bf16.msra.mxu0 0
        %2364 = vmatprep.subr.bf16.mxu0 0
        %2365 = vmatpush1.bf16.msra.mxu0 0
        %2366 = vmatprep.subr.bf16.mxu0 0
        %2367 = vmatpush1.bf16.msra.mxu0 0
        %2368 = vmatprep.subr.bf16.mxu0 0
        %2369 = vmatpush1.bf16.msra.mxu0 0
        %2370 = vmatprep.subr.bf16.mxu0 0
        %2371 = vmatpush1.bf16.msra.mxu0 0
        %2372 = vmatprep.subr.bf16.mxu0 0
        %2373 = vmatpush1.bf16.msra.mxu0 %v2356
        %2374 = vmatprep.subr.bf16.mxu0 0
        %2375 = vmatpush2.bf16.msra.mxu0 0
        %2376 = vmatprep.subr.bf16.mxu0 0
        %2377 = vmatpush2.bf16.msra.mxu0 0
        %2378 = vmatprep.subr.bf16.mxu0 0
        %2379 = vmatpush2.bf16.msra.mxu0 0
        %2380 = vmatprep.subr.bf16.mxu0 0
        %2381 = vmatpush2.bf16.msra.mxu0 0
        %2382 = vmatprep.subr.bf16.mxu0 0
        %2383 = vmatpush2.bf16.msra.mxu0 0
        %2384 = vmatprep.subr.bf16.mxu0 0
        %2385 = vmatpush2.bf16.msra.mxu0 0
        %2386 = vmatprep.subr.bf16.mxu0 0
        %2387 = vmatpush2.bf16.msra.mxu0 0
        %2388 = vmatprep.subr.bf16.mxu0 0
        %2389 = vmatpush2.bf16.msra.mxu0 0
        %2390 = vmatprep.mubr.bf16.mxu0 0
        %2391 = vmatmul.mubr.bf16.gmra.mxu0 %v2353
        %v2392 = vpop.f32.mrf.mxu0
        %v2393 = vadd.f32 0.0, %v2392
        %v2394 = vpop.f32.mrf.mxu0
        %v2395 = vpop.f32.mrf.mxu0
        %v2396 = vpop.f32.mrf.mxu0
        %2397 = vdwg.mxu0
        %2399 = vrot.lane.b32.xlu0 %v2054, 64
        %v2400 = vpop.permute.xlu0 %2399
        %v2402 = vsel %vm1014, %v2298, 0
        %v2405 = vsel %vm1262, %v2400, 0
        %2407 = vmatprep.subr.bf16.mxu0 0
        %2408 = vmatpush1.bf16.msra.mxu0 0
        %2409 = vmatprep.subr.bf16.mxu0 0
        %2410 = vmatpush1.bf16.msra.mxu0 0
        %2411 = vmatprep.subr.bf16.mxu0 0
        %2412 = vmatpush1.bf16.msra.mxu0 0
        %2413 = vmatprep.subr.bf16.mxu0 0
        %2414 = vmatpush1.bf16.msra.mxu0 0
        %2415 = vmatprep.subr.bf16.mxu0 0
        %2416 = vmatpush1.bf16.msra.mxu0 0
        %2417 = vmatprep.subr.bf16.mxu0 0
        %2418 = vmatpush1.bf16.msra.mxu0 0
        %2419 = vmatprep.subr.bf16.mxu0 0
        %2420 = vmatpush1.bf16.msra.mxu0 0
        %2421 = vmatprep.subr.bf16.mxu0 0
        %2422 = vmatpush1.bf16.msra.mxu0 %v2405
        %2423 = vmatprep.subr.bf16.mxu0 0
        %2424 = vmatpush2.bf16.msra.mxu0 0
        %2425 = vmatprep.subr.bf16.mxu0 0
        %2426 = vmatpush2.bf16.msra.mxu0 0
        %2427 = vmatprep.subr.bf16.mxu0 0
        %2428 = vmatpush2.bf16.msra.mxu0 0
        %2429 = vmatprep.subr.bf16.mxu0 0
        %2430 = vmatpush2.bf16.msra.mxu0 0
        %2431 = vmatprep.subr.bf16.mxu0 0
        %2432 = vmatpush2.bf16.msra.mxu0 0
        %2433 = vmatprep.subr.bf16.mxu0 0
        %2434 = vmatpush2.bf16.msra.mxu0 0
        %2435 = vmatprep.subr.bf16.mxu0 0
        %2436 = vmatpush2.bf16.msra.mxu0 0
        %2437 = vmatprep.subr.bf16.mxu0 0
        %2438 = vmatpush2.bf16.msra.mxu0 0
        %2439 = vmatprep.mubr.bf16.mxu0 0
        %2440 = vmatmul.mubr.bf16.gmra.mxu0 %v2402
        %v2441 = vpop.f32.mrf.mxu0
        %v2442 = vadd.f32 0.0, %v2441
        %v2443 = vpop.f32.mrf.mxu0
        %v2444 = vpop.f32.mrf.mxu0
        %v2445 = vpop.f32.mrf.mxu0
        %2446 = vdwg.mxu0
        %2448 = vrot.lane.b32.xlu0 %v2055, 64
        %v2449 = vpop.permute.xlu0 %2448
        %v2451 = vsel %vm1014, %v2299, 0
        %v2454 = vsel %vm1262, %v2449, 0
        %2456 = vmatprep.subr.bf16.mxu0 0
        %2457 = vmatpush1.bf16.msra.mxu0 0
        %2458 = vmatprep.subr.bf16.mxu0 0
        %2459 = vmatpush1.bf16.msra.mxu0 0
        %2460 = vmatprep.subr.bf16.mxu0 0
        %2461 = vmatpush1.bf16.msra.mxu0 0
        %2462 = vmatprep.subr.bf16.mxu0 0
        %2463 = vmatpush1.bf16.msra.mxu0 0
        %2464 = vmatprep.subr.bf16.mxu0 0
        %2465 = vmatpush1.bf16.msra.mxu0 0
        %2466 = vmatprep.subr.bf16.mxu0 0
        %2467 = vmatpush1.bf16.msra.mxu0 0
        %2468 = vmatprep.subr.bf16.mxu0 0
        %2469 = vmatpush1.bf16.msra.mxu0 0
        %2470 = vmatprep.subr.bf16.mxu0 0
        %2471 = vmatpush1.bf16.msra.mxu0 %v2454
        %2472 = vmatprep.subr.bf16.mxu0 0
        %2473 = vmatpush2.bf16.msra.mxu0 0
        %2474 = vmatprep.subr.bf16.mxu0 0
        %2475 = vmatpush2.bf16.msra.mxu0 0
        %2476 = vmatprep.subr.bf16.mxu0 0
        %2477 = vmatpush2.bf16.msra.mxu0 0
        %2478 = vmatprep.subr.bf16.mxu0 0
        %2479 = vmatpush2.bf16.msra.mxu0 0
        %2480 = vmatprep.subr.bf16.mxu0 0
        %2481 = vmatpush2.bf16.msra.mxu0 0
        %2482 = vmatprep.subr.bf16.mxu0 0
        %2483 = vmatpush2.bf16.msra.mxu0 0
        %2484 = vmatprep.subr.bf16.mxu0 0
        %2485 = vmatpush2.bf16.msra.mxu0 0
        %2486 = vmatprep.subr.bf16.mxu0 0
        %2487 = vmatpush2.bf16.msra.mxu0 0
        %2488 = vmatprep.mubr.bf16.mxu0 0
        %2489 = vmatmul.mubr.bf16.gmra.mxu0 %v2451
        %v2490 = vpop.f32.mrf.mxu0
        %v2491 = vadd.f32 0.0, %v2490
        %v2492 = vpop.f32.mrf.mxu0
        %v2493 = vpop.f32.mrf.mxu0
        %v2494 = vpop.f32.mrf.mxu0
        %2495 = vdwg.mxu0
        %v2496 = vpack.c.bf16 %v2344, %v2344
        %v2497 = vpack.c.bf16 %v2393, %v2393
        %v2498 = vpack.c.bf16 %v2442, %v2442
        %v2499 = vpack.c.bf16 %v2491, %v2491
        %s2500 = scalar_lea.vmem %s8, 16
        %v2501 = vld [vmem:[%s2500] sm:$0xf]
        %v2502 = vld [vmem:[%s2500 + $0x4] sm:$0xf]
        %v2503 = vld [vmem:[%s2500 + $0x8] sm:$0xf]
        %v2504 = vld [vmem:[%s2500 + $0xc] sm:$0xf]
        %v2506 = vsel %vm1014, %v2496, 0
        %v2509 = vsel %vm1262, %v2501, 0
        %2511 = vmatprep.subr.bf16.mxu0 0
        %2512 = vmatpush1.bf16.msra.mxu0 0
        %2513 = vmatprep.subr.bf16.mxu0 0
        %2514 = vmatpush1.bf16.msra.mxu0 0
        %2515 = vmatprep.subr.bf16.mxu0 0
        %2516 = vmatpush1.bf16.msra.mxu0 0
        %2517 = vmatprep.subr.bf16.mxu0 0
        %2518 = vmatpush1.bf16.msra.mxu0 0
        %2519 = vmatprep.subr.bf16.mxu0 0
        %2520 = vmatpush1.bf16.msra.mxu0 0
        %2521 = vmatprep.subr.bf16.mxu0 0
        %2522 = vmatpush1.bf16.msra.mxu0 0
        %2523 = vmatprep.subr.bf16.mxu0 0
        %2524 = vmatpush1.bf16.msra.mxu0 0
        %2525 = vmatprep.subr.bf16.mxu0 0
        %2526 = vmatpush1.bf16.msra.mxu0 %v2509
        %2527 = vmatprep.subr.bf16.mxu0 0
        %2528 = vmatpush2.bf16.msra.mxu0 0
        %2529 = vmatprep.subr.bf16.mxu0 0
        %2530 = vmatpush2.bf16.msra.mxu0 0
        %2531 = vmatprep.subr.bf16.mxu0 0
        %2532 = vmatpush2.bf16.msra.mxu0 0
        %2533 = vmatprep.subr.bf16.mxu0 0
        %2534 = vmatpush2.bf16.msra.mxu0 0
        %2535 = vmatprep.subr.bf16.mxu0 0
        %2536 = vmatpush2.bf16.msra.mxu0 0
        %2537 = vmatprep.subr.bf16.mxu0 0
        %2538 = vmatpush2.bf16.msra.mxu0 0
        %2539 = vmatprep.subr.bf16.mxu0 0
        %2540 = vmatpush2.bf16.msra.mxu0 0
        %2541 = vmatprep.subr.bf16.mxu0 0
        %2542 = vmatpush2.bf16.msra.mxu0 0
        %2543 = vmatprep.mubr.bf16.mxu0 0
        %2544 = vmatmul.mubr.bf16.gmra.mxu0 %v2506
        %v2545 = vpop.f32.mrf.mxu0
        %v2546 = vadd.f32 0.0, %v2545
        %v2547 = vpop.f32.mrf.mxu0
        %v2548 = vpop.f32.mrf.mxu0
        %v2549 = vpop.f32.mrf.mxu0
        %2550 = vdwg.mxu0
        %v2552 = vsel %vm1014, %v2497, 0
        %v2555 = vsel %vm1262, %v2502, 0
        %2557 = vmatprep.subr.bf16.mxu0 0
        %2558 = vmatpush1.bf16.msra.mxu0 0
        %2559 = vmatprep.subr.bf16.mxu0 0
        %2560 = vmatpush1.bf16.msra.mxu0 0
        %2561 = vmatprep.subr.bf16.mxu0 0
        %2562 = vmatpush1.bf16.msra.mxu0 0
        %2563 = vmatprep.subr.bf16.mxu0 0
        %2564 = vmatpush1.bf16.msra.mxu0 0
        %2565 = vmatprep.subr.bf16.mxu0 0
        %2566 = vmatpush1.bf16.msra.mxu0 0
        %2567 = vmatprep.subr.bf16.mxu0 0
        %2568 = vmatpush1.bf16.msra.mxu0 0
        %2569 = vmatprep.subr.bf16.mxu0 0
        %2570 = vmatpush1.bf16.msra.mxu0 0
        %2571 = vmatprep.subr.bf16.mxu0 0
        %2572 = vmatpush1.bf16.msra.mxu0 %v2555
        %2573 = vmatprep.subr.bf16.mxu0 0
        %2574 = vmatpush2.bf16.msra.mxu0 0
        %2575 = vmatprep.subr.bf16.mxu0 0
        %2576 = vmatpush2.bf16.msra.mxu0 0
        %2577 = vmatprep.subr.bf16.mxu0 0
        %2578 = vmatpush2.bf16.msra.mxu0 0
        %2579 = vmatprep.subr.bf16.mxu0 0
        %2580 = vmatpush2.bf16.msra.mxu0 0
        %2581 = vmatprep.subr.bf16.mxu0 0
        %2582 = vmatpush2.bf16.msra.mxu0 0
        %2583 = vmatprep.subr.bf16.mxu0 0
        %2584 = vmatpush2.bf16.msra.mxu0 0
        %2585 = vmatprep.subr.bf16.mxu0 0
        %2586 = vmatpush2.bf16.msra.mxu0 0
        %2587 = vmatprep.subr.bf16.mxu0 0
        %2588 = vmatpush2.bf16.msra.mxu0 0
        %2589 = vmatprep.mubr.bf16.mxu0 0
        %2590 = vmatmul.mubr.bf16.gmra.mxu0 %v2552
        %v2591 = vpop.f32.mrf.mxu0
        %v2592 = vadd.f32 0.0, %v2591
        %v2593 = vpop.f32.mrf.mxu0
        %v2594 = vpop.f32.mrf.mxu0
        %v2595 = vpop.f32.mrf.mxu0
        %2596 = vdwg.mxu0
        %v2598 = vsel %vm1014, %v2498, 0
        %v2601 = vsel %vm1262, %v2503, 0
        %2603 = vmatprep.subr.bf16.mxu0 0
        %2604 = vmatpush1.bf16.msra.mxu0 0
        %2605 = vmatprep.subr.bf16.mxu0 0
        %2606 = vmatpush1.bf16.msra.mxu0 0
        %2607 = vmatprep.subr.bf16.mxu0 0
        %2608 = vmatpush1.bf16.msra.mxu0 0
        %2609 = vmatprep.subr.bf16.mxu0 0
        %2610 = vmatpush1.bf16.msra.mxu0 0
        %2611 = vmatprep.subr.bf16.mxu0 0
        %2612 = vmatpush1.bf16.msra.mxu0 0
        %2613 = vmatprep.subr.bf16.mxu0 0
        %2614 = vmatpush1.bf16.msra.mxu0 0
        %2615 = vmatprep.subr.bf16.mxu0 0
        %2616 = vmatpush1.bf16.msra.mxu0 0
        %2617 = vmatprep.subr.bf16.mxu0 0
        %2618 = vmatpush1.bf16.msra.mxu0 %v2601
        %2619 = vmatprep.subr.bf16.mxu0 0
        %2620 = vmatpush2.bf16.msra.mxu0 0
        %2621 = vmatprep.subr.bf16.mxu0 0
        %2622 = vmatpush2.bf16.msra.mxu0 0
        %2623 = vmatprep.subr.bf16.mxu0 0
        %2624 = vmatpush2.bf16.msra.mxu0 0
        %2625 = vmatprep.subr.bf16.mxu0 0
        %2626 = vmatpush2.bf16.msra.mxu0 0
        %2627 = vmatprep.subr.bf16.mxu0 0
        %2628 = vmatpush2.bf16.msra.mxu0 0
        %2629 = vmatprep.subr.bf16.mxu0 0
        %2630 = vmatpush2.bf16.msra.mxu0 0
        %2631 = vmatprep.subr.bf16.mxu0 0
        %2632 = vmatpush2.bf16.msra.mxu0 0
        %2633 = vmatprep.subr.bf16.mxu0 0
        %2634 = vmatpush2.bf16.msra.mxu0 0
        %2635 = vmatprep.mubr.bf16.mxu0 0
        %2636 = vmatmul.mubr.bf16.gmra.mxu0 %v2598
        %v2637 = vpop.f32.mrf.mxu0
        %v2638 = vadd.f32 0.0, %v2637
        %v2639 = vpop.f32.mrf.mxu0
        %v2640 = vpop.f32.mrf.mxu0
        %v2641 = vpop.f32.mrf.mxu0
        %2642 = vdwg.mxu0
        %v2644 = vsel %vm1014, %v2499, 0
        %v2647 = vsel %vm1262, %v2504, 0
        %2649 = vmatprep.subr.bf16.mxu0 0
        %2650 = vmatpush1.bf16.msra.mxu0 0
        %2651 = vmatprep.subr.bf16.mxu0 0
        %2652 = vmatpush1.bf16.msra.mxu0 0
        %2653 = vmatprep.subr.bf16.mxu0 0
        %2654 = vmatpush1.bf16.msra.mxu0 0
        %2655 = vmatprep.subr.bf16.mxu0 0
        %2656 = vmatpush1.bf16.msra.mxu0 0
        %2657 = vmatprep.subr.bf16.mxu0 0
        %2658 = vmatpush1.bf16.msra.mxu0 0
        %2659 = vmatprep.subr.bf16.mxu0 0
        %2660 = vmatpush1.bf16.msra.mxu0 0
        %2661 = vmatprep.subr.bf16.mxu0 0
        %2662 = vmatpush1.bf16.msra.mxu0 0
        %2663 = vmatprep.subr.bf16.mxu0 0
        %2664 = vmatpush1.bf16.msra.mxu0 %v2647
        %2665 = vmatprep.subr.bf16.mxu0 0
        %2666 = vmatpush2.bf16.msra.mxu0 0
        %2667 = vmatprep.subr.bf16.mxu0 0
        %2668 = vmatpush2.bf16.msra.mxu0 0
        %2669 = vmatprep.subr.bf16.mxu0 0
        %2670 = vmatpush2.bf16.msra.mxu0 0
        %2671 = vmatprep.subr.bf16.mxu0 0
        %2672 = vmatpush2.bf16.msra.mxu0 0
        %2673 = vmatprep.subr.bf16.mxu0 0
        %2674 = vmatpush2.bf16.msra.mxu0 0
        %2675 = vmatprep.subr.bf16.mxu0 0
        %2676 = vmatpush2.bf16.msra.mxu0 0
        %2677 = vmatprep.subr.bf16.mxu0 0
        %2678 = vmatpush2.bf16.msra.mxu0 0
        %2679 = vmatprep.subr.bf16.mxu0 0
        %2680 = vmatpush2.bf16.msra.mxu0 0
        %2681 = vmatprep.mubr.bf16.mxu0 0
        %2682 = vmatmul.mubr.bf16.gmra.mxu0 %v2644
        %v2683 = vpop.f32.mrf.mxu0
        %v2684 = vadd.f32 0.0, %v2683
        %v2685 = vpop.f32.mrf.mxu0
        %v2686 = vpop.f32.mrf.mxu0
        %v2687 = vpop.f32.mrf.mxu0
        %2688 = vdwg.mxu0
        %v2689 = vsel %vm829, %v2546, 0.0
        %v2690 = vsel %vm829, %v2592, 0.0
        %v2691 = vadd.f32 %v2689, %v2690
        %v2692 = vsel %vm829, %v2638, 0.0
        %v2693 = vadd.f32 %v2691, %v2692
        %v2694 = vsel %vm829, %v2684, 0.0
        %v2695 = vadd.f32 %v2693, %v2694
        %s2696 = scalar_lea.vmem %s9, 1
        %v2697 = vld [vmem:[%s2696] sm:$0x1]
        %v2699 = vlaneseq
        %v2700 = vshrl.u32 %v2699, 7
        %v2701 = vsub.s32 0, %v2700
        %v2702 = vrot.slane %v2697, %v2701
        %v2704 = vadd.f32 %v2695, %v2702
        %v2705 = vadd.f32 %v2704, %v1880
        %s2706 = scalar_lea.vmem %s10, 1
        %v2707 = vld [vmem:[%s2706] sm:$0x1]
        %s2708 = scalar_lea.vmem %s11, 1
        %v2709 = vld [vmem:[%s2708] sm:$0x1]
        %v2710 = vsel %vm829, %v2705, 0.0
        %2711 = vadd.xlane.f32.xlu0 %v2710
        %v2712 = vpop.xlane.xlu0 %2711
        %v2713 = vmul.f32 %v2712, %v833
        %v2714 = vmul.f32 %v2705, %v2705
        %v2715 = vsel %vm829, %v2714, 0.0
        %2716 = vadd.xlane.f32.xlu0 %v2715
        %v2717 = vpop.xlane.xlu0 %2716
        %v2718 = vmul.f32 %v2717, %v833
        %v2719 = vmul.f32 %v2713, %v2713
        %v2720 = vsub.f32 %v2718, %v2719
        %v2721 = vsub.f32 %v2705, %v2713
        %v2722 = vadd.f32 %v2720, 1e-05
        %v2723 = vrsqrt.pop %v2722
        %v2724 = vmul.f32 %v2721, %v2723
        %v2726 = vlaneseq
        %v2727 = vshrl.u32 %v2726, 7
        %v2728 = vsub.s32 0, %v2727
        %v2729 = vrot.slane %v2707, %v2728
        %v2731 = vmul.f32 %v2724, %v2729
        %v2733 = vlaneseq
        %v2734 = vshrl.u32 %v2733, 7
        %v2735 = vsub.s32 0, %v2734
        %v2736 = vrot.slane %v2709, %v2735
        %v2738 = vadd.f32 %v2731, %v2736
        %v2739 = vpack.c.bf16 %v2738, %v2738
        %s2740 = scalar_lea.vmem %s12, 16
        %v2741 = vld [vmem:[%s2740] sm:$0xf]
        %v2742 = vld [vmem:[%s2740 + $0x4] sm:$0xf]
        %v2743 = vld [vmem:[%s2740 + $0x8] sm:$0xf]
        %v2744 = vld [vmem:[%s2740 + $0xc] sm:$0xf]
        %s2745 = scalar_lea.vmem %s13, 1
        %v2746 = vld [vmem:[%s2745] sm:$0x1]
        %v2748 = vlaneseq
        %v2749 = vshrl.u32 %v2748, 7
        %v2750 = vsub.s32 0, %v2749
        %v2751 = vrot.slane %v2746, %v2750
        %v2757 = vunpack.c.l.b16 %v2741
        %v2758 = vunpack.c.l.b16 %v2742
        %v2759 = vunpack.c.l.b16 %v2743
        %v2760 = vunpack.c.l.b16 %v2744
        %v2761 = vpack.c.b16 %v2758, %v2757
        %v2762 = vpack.c.b16 %v2760, %v2759
        %v2766 = vsel %vm829, %v2739, 0
        %2768 = vmatprep.subr.bf16.mxu0 0
        %2769 = vmatpush1.bf16.msra.mxu0 0
        %2770 = vmatprep.subr.bf16.mxu0 0
        %2771 = vmatpush1.bf16.msra.mxu0 0
        %2772 = vmatprep.subr.bf16.mxu0 0
        %2773 = vmatpush1.bf16.msra.mxu0 0
        %2774 = vmatprep.subr.bf16.mxu0 0
        %2775 = vmatpush1.bf16.msra.mxu0 0
        %2776 = vmatprep.subr.bf16.mxu0 0
        %2777 = vmatpush1.bf16.msra.mxu0 0
        %2778 = vmatprep.subr.bf16.mxu0 0
        %2779 = vmatpush1.bf16.msra.mxu0 0
        %2780 = vmatprep.subr.bf16.mxu0 0
        %2781 = vmatpush1.bf16.msra.mxu0 %v2762
        %2782 = vmatprep.subr.bf16.mxu0 0
        %2783 = vmatpush1.bf16.msra.mxu0 %v2761
        %2784 = vmatprep.subr.bf16.mxu0 0
        %2785 = vmatpush2.bf16.msra.mxu0 0
        %2786 = vmatprep.subr.bf16.mxu0 0
        %2787 = vmatpush2.bf16.msra.mxu0 0
        %2788 = vmatprep.subr.bf16.mxu0 0
        %2789 = vmatpush2.bf16.msra.mxu0 0
        %2790 = vmatprep.subr.bf16.mxu0 0
        %2791 = vmatpush2.bf16.msra.mxu0 0
        %2792 = vmatprep.subr.bf16.mxu0 0
        %2793 = vmatpush2.bf16.msra.mxu0 0
        %2794 = vmatprep.subr.bf16.mxu0 0
        %2795 = vmatpush2.bf16.msra.mxu0 0
        %2796 = vmatprep.subr.bf16.mxu0 0
        %2797 = vmatpush2.bf16.msra.mxu0 0
        %2798 = vmatprep.subr.bf16.mxu0 0
        %2799 = vmatpush2.bf16.msra.mxu0 0
        %2800 = vmatprep.mubr.bf16.mxu0 0
        %2801 = vmatmul.mubr.bf16.gmra.mxu0 %v2766
        %v2802 = vpop.f32.mrf.mxu0
        %v2803 = vadd.f32 %v2751, %v2802
        %v2804 = vpop.f32.mrf.mxu0
        %v2805 = vpop.f32.mrf.mxu0
        %v2806 = vpop.f32.mrf.mxu0
        %2807 = vdwg.mxu0
        %v2808 = vmul.f32 %v2803, %v2803
        %v2809 = vmul.f32 %v2803, %v2808
        %v2810 = vmul.f32 %v2809, 0.044715
        %v2811 = vadd.f32 %v2803, %v2810
        %v2812 = vmul.f32 %v2811, 0.7978846
        %v2813 = vtanh.pop %v2812
        %v2814 = vadd.f32 %v2813, 1.0
        %v2815 = vmul.f32 %v2814, 0.5
        %v2816 = vmul.f32 %v2803, %v2815
        %v2817 = vpack.c.bf16 %v2816, %v2816
        %s2818 = scalar_lea.vmem %s14, 64
        %v2819 = vld [vmem:[%s2818] sm:$0xf]
        %v2820 = vld [vmem:[%s2818 + $0x4] sm:$0xf]
        %v2821 = vld [vmem:[%s2818 + $0x8] sm:$0xf]
        %v2822 = vld [vmem:[%s2818 + $0xc] sm:$0xf]
        %v2823 = vld [vmem:[%s2818 + $0x10] sm:$0xf]
        %v2824 = vld [vmem:[%s2818 + $0x14] sm:$0xf]
        %v2825 = vld [vmem:[%s2818 + $0x18] sm:$0xf]
        %v2826 = vld [vmem:[%s2818 + $0x1c] sm:$0xf]
        %v2827 = vld [vmem:[%s2818 + $0x20] sm:$0xf]
        %v2828 = vld [vmem:[%s2818 + $0x24] sm:$0xf]
        %v2829 = vld [vmem:[%s2818 + $0x28] sm:$0xf]
        %v2830 = vld [vmem:[%s2818 + $0x2c] sm:$0xf]
        %v2831 = vld [vmem:[%s2818 + $0x30] sm:$0xf]
        %v2832 = vld [vmem:[%s2818 + $0x34] sm:$0xf]
        %v2833 = vld [vmem:[%s2818 + $0x38] sm:$0xf]
        %v2834 = vld [vmem:[%s2818 + $0x3c] sm:$0xf]
        %s2835 = scalar_lea.vmem %s15, 1
        %v2836 = vld [vmem:[%s2835] sm:$0x1]
        %v2838 = vlaneseq
        %v2839 = vshrl.u32 %v2838, 7
        %v2840 = vsub.s32 0, %v2839
        %v2841 = vrot.slane %v2836, %v2840
        %v2859 = vunpack.c.l.b16 %v2819
        %v2860 = vunpack.c.l.b16 %v2820
        %v2861 = vunpack.c.l.b16 %v2821
        %v2862 = vunpack.c.l.b16 %v2822
        %v2863 = vunpack.c.l.b16 %v2823
        %v2864 = vunpack.c.l.b16 %v2824
        %v2865 = vunpack.c.l.b16 %v2825
        %v2866 = vunpack.c.l.b16 %v2826
        %v2867 = vunpack.c.l.b16 %v2827
        %v2868 = vunpack.c.l.b16 %v2828
        %v2869 = vunpack.c.l.b16 %v2829
        %v2870 = vunpack.c.l.b16 %v2830
        %v2871 = vunpack.c.l.b16 %v2831
        %v2872 = vunpack.c.l.b16 %v2832
        %v2873 = vunpack.c.l.b16 %v2833
        %v2874 = vunpack.c.l.b16 %v2834
        %v2875 = vpack.c.b16 %v2860, %v2859
        %v2876 = vpack.c.b16 %v2862, %v2861
        %v2877 = vpack.c.b16 %v2864, %v2863
        %v2878 = vpack.c.b16 %v2866, %v2865
        %v2879 = vpack.c.b16 %v2868, %v2867
        %v2880 = vpack.c.b16 %v2870, %v2869
        %v2881 = vpack.c.b16 %v2872, %v2871
        %v2882 = vpack.c.b16 %v2874, %v2873
        %2891 = vmatprep.subr.bf16.mxu0 0
        %2892 = vmatpush1.bf16.msra.mxu0 %v2882
        %2893 = vmatprep.subr.bf16.mxu0 0
        %2894 = vmatpush1.bf16.msra.mxu0 %v2881
        %2895 = vmatprep.subr.bf16.mxu0 0
        %2896 = vmatpush1.bf16.msra.mxu0 %v2880
        %2897 = vmatprep.subr.bf16.mxu0 0
        %2898 = vmatpush1.bf16.msra.mxu0 %v2879
        %2899 = vmatprep.subr.bf16.mxu0 0
        %2900 = vmatpush1.bf16.msra.mxu0 %v2878
        %2901 = vmatprep.subr.bf16.mxu0 0
        %2902 = vmatpush1.bf16.msra.mxu0 %v2877
        %2903 = vmatprep.subr.bf16.mxu0 0
        %2904 = vmatpush1.bf16.msra.mxu0 %v2876
        %2905 = vmatprep.subr.bf16.mxu0 0
        %2906 = vmatpush1.bf16.msra.mxu0 %v2875
        %2907 = vmatprep.subr.bf16.mxu0 0
        %2908 = vmatpush2.bf16.msra.mxu0 0
        %2909 = vmatprep.subr.bf16.mxu0 0
        %2910 = vmatpush2.bf16.msra.mxu0 0
        %2911 = vmatprep.subr.bf16.mxu0 0
        %2912 = vmatpush2.bf16.msra.mxu0 0
        %2913 = vmatprep.subr.bf16.mxu0 0
        %2914 = vmatpush2.bf16.msra.mxu0 0
        %2915 = vmatprep.subr.bf16.mxu0 0
        %2916 = vmatpush2.bf16.msra.mxu0 0
        %2917 = vmatprep.subr.bf16.mxu0 0
        %2918 = vmatpush2.bf16.msra.mxu0 0
        %2919 = vmatprep.subr.bf16.mxu0 0
        %2920 = vmatpush2.bf16.msra.mxu0 0
        %2921 = vmatprep.subr.bf16.mxu0 0
        %2922 = vmatpush2.bf16.msra.mxu0 0
        %2923 = vmatprep.mubr.bf16.mxu0 0
        %2924 = vmatmul.mubr.bf16.gmra.mxu0 %v2817
        %v2925 = vpop.f32.mrf.mxu0
        %v2926 = vadd.f32 %v2841, %v2925
        %v2927 = vpop.f32.mrf.mxu0
        %v2928 = vpop.f32.mrf.mxu0
        %v2929 = vpop.f32.mrf.mxu0
        %2930 = vdwg.mxu0
        %v2931 = vadd.f32 %v2926, %v2705
        %v2932 = vld [vmem:[%s16] sm:$0x1]
        %v2933 = vld [vmem:[%s17] sm:$0x1]
        %v2934 = vsel %vm829, %v2931, 0.0
        %2935 = vadd.xlane.f32.xlu0 %v2934
        %v2936 = vpop.xlane.xlu0 %2935
        %v2937 = vmul.f32 %v2936, %v833
        %v2938 = vmul.f32 %v2931, %v2931
        %v2939 = vsel %vm829, %v2938, 0.0
        %2940 = vadd.xlane.f32.xlu0 %v2939
        %v2941 = vpop.xlane.xlu0 %2940
        %v2942 = vmul.f32 %v2941, %v833
        %v2943 = vmul.f32 %v2937, %v2937
        %v2944 = vsub.f32 %v2942, %v2943
        %v2945 = vsub.f32 %v2931, %v2937
        %v2946 = vadd.f32 %v2944, 1e-05
        %v2947 = vrsqrt.pop %v2946
        %v2948 = vmul.f32 %v2945, %v2947
        %v2950 = vlaneseq
        %v2951 = vshrl.u32 %v2950, 7
        %v2952 = vsub.s32 0, %v2951
        %v2953 = vrot.slane %v2932, %v2952
        %v2955 = vmul.f32 %v2948, %v2953
        %v2957 = vlaneseq
        %v2958 = vshrl.u32 %v2957, 7
        %v2959 = vsub.s32 0, %v2958
        %v2960 = vrot.slane %v2933, %v2959
        %v2962 = vadd.f32 %v2955, %v2960
        %v2963 = vpack.c.bf16 %v2962, %v2962
        %2964 = vst.msk [vmem:[%s821] sm:$0xf] %vm1882, %v2963
        %v2965 = vld [vmem:[%s18] sm:$0xf]
        %v2966 = vld [vmem:[%s18 + $0x4] sm:$0xf]
        %v2967 = vld [vmem:[%s18 + $0x8] sm:$0xf]
        %v2968 = vld [vmem:[%s18 + $0xc] sm:$0xf]
        %v2969 = vld [vmem:[%s19] sm:$0x1]
        %v2971 = vlaneseq
        %v2972 = vshrl.u32 %v2971, 7
        %v2973 = vsub.s32 0, %v2972
        %v2974 = vrot.slane %v2969, %v2973
        %v2980 = vunpack.c.l.b16 %v2965
        %v2981 = vunpack.c.l.b16 %v2966
        %v2982 = vunpack.c.l.b16 %v2967
        %v2983 = vunpack.c.l.b16 %v2968
        %v2984 = vpack.c.b16 %v2981, %v2980
        %v2985 = vpack.c.b16 %v2983, %v2982
        %v2989 = vsel %vm829, %v2963, 0
        %2991 = vmatprep.subr.bf16.mxu0 0
        %2992 = vmatpush1.bf16.msra.mxu0 0
        %2993 = vmatprep.subr.bf16.mxu0 0
        %2994 = vmatpush1.bf16.msra.mxu0 0
        %2995 = vmatprep.subr.bf16.mxu0 0
        %2996 = vmatpush1.bf16.msra.mxu0 0
        %2997 = vmatprep.subr.bf16.mxu0 0
        %2998 = vmatpush1.bf16.msra.mxu0 0
        %2999 = vmatprep.subr.bf16.mxu0 0
        %3000 = vmatpush1.bf16.msra.mxu0 0
        %3001 = vmatprep.subr.bf16.mxu0 0
        %3002 = vmatpush1.bf16.msra.mxu0 0
        %3003 = vmatprep.subr.bf16.mxu0 0
        %3004 = vmatpush1.bf16.msra.mxu0 %v2985
        %3005 = vmatprep.subr.bf16.mxu0 0
        %3006 = vmatpush1.bf16.msra.mxu0 %v2984
        %3007 = vmatprep.subr.bf16.mxu0 0
        %3008 = vmatpush2.bf16.msra.mxu0 0
        %3009 = vmatprep.subr.bf16.mxu0 0
        %3010 = vmatpush2.bf16.msra.mxu0 0
        %3011 = vmatprep.subr.bf16.mxu0 0
        %3012 = vmatpush2.bf16.msra.mxu0 0
        %3013 = vmatprep.subr.bf16.mxu0 0
        %3014 = vmatpush2.bf16.msra.mxu0 0
        %3015 = vmatprep.subr.bf16.mxu0 0
        %3016 = vmatpush2.bf16.msra.mxu0 0
        %3017 = vmatprep.subr.bf16.mxu0 0
        %3018 = vmatpush2.bf16.msra.mxu0 0
        %3019 = vmatprep.subr.bf16.mxu0 0
        %3020 = vmatpush2.bf16.msra.mxu0 0
        %3021 = vmatprep.subr.bf16.mxu0 0
        %3022 = vmatpush2.bf16.msra.mxu0 0
        %3023 = vmatprep.mubr.bf16.mxu0 0
        %3024 = vmatmul.mubr.bf16.gmra.mxu0 %v2989
        %v3025 = vpop.f32.mrf.mxu0
        %v3026 = vadd.f32 %v2974, %v3025
        %v3027 = vpop.f32.mrf.mxu0
        %v3028 = vpop.f32.mrf.mxu0
        %v3029 = vpop.f32.mrf.mxu0
        %3030 = vdwg.mxu0
        %v3031 = vmul.f32 %v3026, %v3026
        %v3032 = vmul.f32 %v3026, %v3031
        %v3033 = vmul.f32 %v3032, 0.044715
        %v3034 = vadd.f32 %v3026, %v3033
        %v3035 = vmul.f32 %v3034, 0.7978846
        %v3036 = vtanh.pop %v3035
        %v3037 = vadd.f32 %v3036, 1.0
        %v3038 = vmul.f32 %v3037, 0.5
        %v3039 = vmul.f32 %v3026, %v3038
        %v3040 = vld [vmem:[%s20] sm:$0x1]
        %v3041 = vld [vmem:[%s21] sm:$0x1]
        %v3042 = vsel %vm829, %v3039, 0.0
        %3043 = vadd.xlane.f32.xlu0 %v3042
        %v3044 = vpop.xlane.xlu0 %3043
        %v3045 = vmul.f32 %v3044, %v833
        %v3046 = vmul.f32 %v3039, %v3039
        %v3047 = vsel %vm829, %v3046, 0.0
        %3048 = vadd.xlane.f32.xlu0 %v3047
        %v3049 = vpop.xlane.xlu0 %3048
        %v3050 = vmul.f32 %v3049, %v833
        %v3051 = vmul.f32 %v3045, %v3045
        %v3052 = vsub.f32 %v3050, %v3051
        %v3053 = vsub.f32 %v3039, %v3045
        %v3054 = vadd.f32 %v3052, 1e-05
        %v3055 = vrsqrt.pop %v3054
        %v3056 = vmul.f32 %v3053, %v3055
        %v3058 = vlaneseq
        %v3059 = vshrl.u32 %v3058, 7
        %v3060 = vsub.s32 0, %v3059
        %v3061 = vrot.slane %v3040, %v3060
        %v3063 = vmul.f32 %v3056, %v3061
        %v3065 = vlaneseq
        %v3066 = vshrl.u32 %v3065, 7
        %v3067 = vsub.s32 0, %v3066
        %v3068 = vrot.slane %v3041, %v3067
        %v3070 = vadd.f32 %v3063, %v3068
        %v3071 = vpack.c.bf16 %v3070, %v3070
        %v3072 = vld [vmem:[%s22] sm:$0xf]
        %v3073 = vld [vmem:[%s22 + $0x4] sm:$0xf]
        %v3074 = vld [vmem:[%s22 + $0x8] sm:$0xf]
        %v3075 = vld [vmem:[%s22 + $0xc] sm:$0xf]
        %v3076 = vld [vmem:[%s23] sm:$0x1]
        %v3078 = vlaneseq
        %v3079 = vshrl.u32 %v3078, 7
        %v3080 = vsub.s32 0, %v3079
        %v3081 = vrot.slane %v3076, %v3080
        %v3087 = vunpack.c.l.b16 %v3072
        %v3088 = vunpack.c.l.b16 %v3073
        %v3089 = vunpack.c.l.b16 %v3074
        %v3090 = vunpack.c.l.b16 %v3075
        %v3091 = vpack.c.b16 %v3088, %v3087
        %v3092 = vpack.c.b16 %v3090, %v3089
        %v3096 = vsel %vm829, %v3071, 0
        %3098 = vmatprep.subr.bf16.mxu0 0
        %3099 = vmatpush1.bf16.msra.mxu0 0
        %3100 = vmatprep.subr.bf16.mxu0 0
        %3101 = vmatpush1.bf16.msra.mxu0 0
        %3102 = vmatprep.subr.bf16.mxu0 0
        %3103 = vmatpush1.bf16.msra.mxu0 0
        %3104 = vmatprep.subr.bf16.mxu0 0
        %3105 = vmatpush1.bf16.msra.mxu0 0
        %3106 = vmatprep.subr.bf16.mxu0 0
        %3107 = vmatpush1.bf16.msra.mxu0 0
        %3108 = vmatprep.subr.bf16.mxu0 0
        %3109 = vmatpush1.bf16.msra.mxu0 0
        %3110 = vmatprep.subr.bf16.mxu0 0
        %3111 = vmatpush1.bf16.msra.mxu0 %v3092
        %3112 = vmatprep.subr.bf16.mxu0 0
        %3113 = vmatpush1.bf16.msra.mxu0 %v3091
        %3114 = vmatprep.subr.bf16.mxu0 0
        %3115 = vmatpush2.bf16.msra.mxu0 0
        %3116 = vmatprep.subr.bf16.mxu0 0
        %3117 = vmatpush2.bf16.msra.mxu0 0
        %3118 = vmatprep.subr.bf16.mxu0 0
        %3119 = vmatpush2.bf16.msra.mxu0 0
        %3120 = vmatprep.subr.bf16.mxu0 0
        %3121 = vmatpush2.bf16.msra.mxu0 0
        %3122 = vmatprep.subr.bf16.mxu0 0
        %3123 = vmatpush2.bf16.msra.mxu0 0
        %3124 = vmatprep.subr.bf16.mxu0 0
        %3125 = vmatpush2.bf16.msra.mxu0 0
        %3126 = vmatprep.subr.bf16.mxu0 0
        %3127 = vmatpush2.bf16.msra.mxu0 0
        %3128 = vmatprep.subr.bf16.mxu0 0
        %3129 = vmatpush2.bf16.msra.mxu0 0
        %3130 = vmatprep.mubr.bf16.mxu0 0
        %3131 = vmatmul.mubr.bf16.gmra.mxu0 %v3096
        %v3132 = vpop.f32.mrf.mxu0
        %v3133 = vadd.f32 %v3081, %v3132
        %v3134 = vpop.f32.mrf.mxu0
        %v3135 = vpop.f32.mrf.mxu0
        %v3136 = vpop.f32.mrf.mxu0
        %3137 = vdwg.mxu0
        %3138 = vst [vmem:[%s806] sm:$0xff] %v3133
        %p3139 = scmp.lt.s32.totalorder %s41, 1
        %s3140 = scalar_select %p3139, %s41, 1
        %s3141 = smul.addr %s3140, 4
        %s3142 = scalar_lea.vmem %s24, %s3141
        %p3143 = scmp.lt.s32.totalorder %s41, 1
        %s3144 = scalar_select %p3143, %s41, 1
        %s3145 = smul.addr %s3144, 4
        %s3146 = scalar_lea.vmem %s25, %s3145
        %s3147 = sand.u32 %s615, 1
        %s3148 = scalar_lea.sflag [#allocation3], %s3147
        %s3149 = sand.u32 %s615, 1
        %s3150 = smul.addr %s3149, 8
        %s3151 = scalar_lea.vmem [#allocation2], %s3150
        // Predicated region
        $region117: #{esm2_forward.1} parent=115 // pred_check
          %p3152 = pneg %p573
        $region118: #{esm2_forward.1} parent=115 // pred_check_branch
          %3154 = sbr.rel (%p3152) target = $region120
        $region119: #{esm2_forward.1} parent=115 // pred_region
          _
        $region120: #{esm2_forward.1} parent=115 // pred_fallthru
          _
        // Predicated region
        $region121: #{esm2_forward.1} parent=115 // pred_check
          %p3155 = pneg %p599
        $region122: #{esm2_forward.1} parent=115 // pred_check_branch
          %3157 = sbr.rel (%p3155) target = $region124
        $region123: #{esm2_forward.1} parent=115 // pred_region
          _
        $region124: #{esm2_forward.1} parent=115 // pred_fallthru
          _
        // Predicated region
        $region125: #{esm2_forward.1} parent=115 // pred_check
          %p3158 = pneg %p625
        $region126: #{esm2_forward.1} parent=115 // pred_check_branch
          %3160 = sbr.rel (%p3158) target = $region128
        $region127: #{esm2_forward.1} parent=115 // pred_region
          %s3162 = ssub.s32 128, 128
          %3163 = vsyncadd %s3148, %s3162
          %s3164 = smul.addr %s41, 128
          %s3165 = scalar_lea.hbm %s26, %s3164
          %s3167 = sshll.u32 %s3151, 4
          %s3168 = int_to_ptr.vmem [resolvable:$true] %s3167
          %3170 = dma.vmem_to_hbm [thread:$0]  %s3168, 128, %s3165, %s3148
        $region128: #{esm2_forward.1} parent=115 // pred_fallthru
          _
      $region116: #{esm2_forward.1} parent=5 // pred_fallthru
        _
      %p3171 = scmp.le.s32.totalorder 2, %s36
      // Predicated region
      $region129: #{esm2_forward.1} parent=5 // pred_check
        %p3172 = pneg %p3171
      $region130: #{esm2_forward.1} parent=5 // pred_check_branch
        %3174 = sbr.rel (%p3172) target = $region132
      $region131: #{esm2_forward.1} parent=5 // pred_region
        %s3175 = ssub.s32 %s36, 2
        // Predicated region
        $region133: #{esm2_forward.1} parent=131 // pred_check
          %p3176 = pneg %p579
        $region134: #{esm2_forward.1} parent=131 // pred_check_branch
          %3178 = sbr.rel (%p3176) target = $region136
        $region135: #{esm2_forward.1} parent=131 // pred_region
          %p3179 = scmp.lt.s32.totalorder %s42, 1
          %s3180 = scalar_select %p3179, %s42, 1
          %s3181 = smul.addr %s3180, 4
          %s3182 = scalar_lea.vmem %s24, %s3181
        $region136: #{esm2_forward.1} parent=131 // pred_fallthru
          _
        // Predicated region
        $region137: #{esm2_forward.1} parent=131 // pred_check
          %p3183 = pneg %p605
        $region138: #{esm2_forward.1} parent=131 // pred_check_branch
          %3185 = sbr.rel (%p3183) target = $region140
        $region139: #{esm2_forward.1} parent=131 // pred_region
          %p3186 = scmp.lt.s32.totalorder %s42, 1
          %s3187 = scalar_select %p3186, %s42, 1
          %s3188 = smul.addr %s3187, 4
          %s3189 = scalar_lea.vmem %s25, %s3188
        $region140: #{esm2_forward.1} parent=131 // pred_fallthru
          _
        // Predicated region
        $region141: #{esm2_forward.1} parent=131 // pred_check
          %p3190 = pneg %p631
        $region142: #{esm2_forward.1} parent=131 // pred_check_branch
          %3192 = sbr.rel (%p3190) target = $region144
        $region143: #{esm2_forward.1} parent=131 // pred_region
          %s3193 = sand.u32 %s616, 1
          %s3194 = scalar_lea.sflag [#allocation3], %s3193
          %s3195 = sand.u32 %s616, 1
          %s3196 = smul.addr %s3195, 8
          %s3197 = scalar_lea.vmem [#allocation2], %s3196
          %3198 = dma.done %s3194, 128
        $region144: #{esm2_forward.1} parent=131 // pred_fallthru
          _
      $region132: #{esm2_forward.1} parent=5 // pred_fallthru
        _
    $region6: #{esm2_forward.1} parent=1 // loop_footer
      %s40 = sadd.s32 1, %s36
    $region7: #{esm2_forward.1} parent=1 // loop_footer_branch
      %35 = sbr.rel target = $region3
    $region8: #{esm2_forward.1} parent=1 // loop_exit
      _
    %3199 = vsyncpa [#allocation3], 1
    %s3200 = scalar_lea.sflag [#allocation3], 1
    %3201 = vsyncpa %s3200, 1

</llo_original>
